<compile_context>
chip_gen: v6e
topology: v6e:2x2x1
jax: 0.10.0
libtpu: 0.0.40
codegen_flags: <defaults>
</compile_context>

<pallas_src>
import math

import jax
import jax.numpy as jnp
from jax.experimental import pallas as pl
from jax.experimental.pallas import tpu as pltpu

# ---------------- model hyperparameters (small, deterministic) ----------------
S = 8          # sequence length
B = 2          # batch size
D = 32         # d_model
H = 4          # nhead
DH = D // H    # head dim
DFF = 64       # dim_feedforward
NUM_LAYERS = 2
LN_EPS = 1e-5

_BS = B * S

# Advisory cost estimate for XLA's scheduler around the custom call.
_FLOPS_PER_LAYER = (2 * _BS * D * 3 * D            # QKV projection
                    + 2 * 2 * B * H * S * S * DH   # scores + attn @ V
                    + 2 * _BS * D * D              # output projection
                    + 2 * 2 * _BS * D * DFF)       # two FFN matmuls
_PARAM_FLOATS_PER_LAYER = (3 * D * D + 3 * D + D * D + D
                           + D * DFF + DFF + DFF * D + D + 4 * D)
_COST = pl.CostEstimate(
    flops=NUM_LAYERS * _FLOPS_PER_LAYER,
    transcendentals=NUM_LAYERS * B * H * S * S,            # softmax exp
    bytes_accessed=4 * (2 * _BS * D + NUM_LAYERS * _PARAM_FLOATS_PER_LAYER),
)


def _layernorm(x, w, b):
    mu = jnp.mean(x, axis=-1, keepdims=True)
    var = jnp.mean((x - mu) ** 2, axis=-1, keepdims=True)
    return (x - mu) * jax.lax.rsqrt(var + LN_EPS) * w + b


# ------------------------------ fused encoder kernel ---------------------------
def _encoder_kernel(x_ref, wqkv_ref, bqkv_ref, wo_ref, bo_ref,
                    ln1w_ref, ln1b_ref, w1_ref, b1_ref, w2_ref, b2_ref,
                    ln2w_ref, ln2b_ref, y_ref):
    """All NUM_LAYERS encoder layers, post-norm, ReLU FFN, dropout disabled."""
    scale = 1.0 / math.sqrt(DH)

    # (B, S, D) -> (B*S, D) slab; collapse of leading dims is layout-free.
    x = x_ref[...].reshape(_BS, D)

    def _split_heads(m):
        # (B*S, D) -> (H*B, S, DH); n = h*B + b.  Lane slices + sublane-aligned
        # reshapes + a major-axis concat (no lane shuffles inside the matmuls).
        return jnp.concatenate(
            [m[:, h * DH:(h + 1) * DH].reshape(B, S, DH) for h in range(H)],
            axis=0)

    for l in range(NUM_LAYERS):          # unrolled (NUM_LAYERS = 2)
        # ---- self attention: QKV projection on the full slab -----------------
        qkv = jnp.dot(x, wqkv_ref[l],
                      preferred_element_type=jnp.float32) + bqkv_ref[l]
        q = _split_heads(qkv[:, 0 * D:1 * D])        # (H*B, S, DH)
        k = _split_heads(qkv[:, 1 * D:2 * D])
        v = _split_heads(qkv[:, 2 * D:3 * D])

        # batched attention over n = H*B "heads"
        s = jnp.einsum("nqd,nkd->nqk", q, k,
                       preferred_element_type=jnp.float32) * scale
        s = s - jnp.max(s, axis=-1, keepdims=True)
        p = jnp.exp(s)
        p = p * pl.reciprocal(jnp.sum(p, axis=-1, keepdims=True), approx=True)
        o = jnp.einsum("nqk,nkd->nqd", p, v,
                       preferred_element_type=jnp.float32)   # (H*B, S, DH)

        # merge heads back onto the lane axis: (B*S, D)
        attn = jnp.concatenate(
            [o[h * B:(h + 1) * B].reshape(_BS, DH) for h in range(H)], axis=-1)
        attn = jnp.dot(attn, wo_ref[l],
                       preferred_element_type=jnp.float32) + bo_ref[l]

        # residual + LayerNorm 1
        x = _layernorm(x + attn, ln1w_ref[l], ln1b_ref[l])

        # ---- feed-forward -----------------------------------------------------
        ff = jnp.dot(x, w1_ref[l], preferred_element_type=jnp.float32) + b1_ref[l]
        ff = jnp.maximum(ff, 0.0)                                   # ReLU
        ff = jnp.dot(ff, w2_ref[l], preferred_element_type=jnp.float32) + b2_ref[l]

        # residual + LayerNorm 2
        x = _layernorm(x + ff, ln2w_ref[l], ln2b_ref[l])

    # single full-block store
    y_ref[...] = x.reshape(B, S, D)


# ------------------------------- host-side wrapper ------------------------------
def pack_params(params):
    """Stack per-layer params along a leading NUM_LAYERS axis; pre-transpose
    all matmul weights so the kernel never transposes anything."""
    st = lambda name: jnp.stack([p[name] for p in params], axis=0)
    stT = lambda name: jnp.stack([p[name].T for p in params], axis=0)
    return {
        "wqkv_t": stT("wqkv"),   # (L, D, 3D)
        "bqkv":   st("bqkv"),    # (L, 1, 3D)
        "wo_t":   stT("wo"),     # (L, D, D)
        "bo":     st("bo"),      # (L, 1, D)
        "ln1w":   st("ln1w"),    # (L, 1, D)
        "ln1b":   st("ln1b"),
        "w1_t":   stT("w1"),     # (L, D, DFF)
        "b1":     st("b1"),      # (L, 1, DFF)
        "w2_t":   stT("w2"),     # (L, DFF, D)
        "b2":     st("b2"),      # (L, 1, D)
        "ln2w":   st("ln2w"),
        "ln2b":   st("ln2b"),
    }


@jax.jit
def transformer_encoder(src, packed):
    """TransformerEncoder.forward(src) with need_hidden=False, need_weights=False.

    src: (S, B, D) as in PyTorch.  Final `norm` is None (default construction).
    """
    x = jnp.transpose(src, (1, 0, 2))          # (S,B,D) -> (B,S,D)

    vmem = pl.BlockSpec(memory_space=pltpu.MemorySpace.VMEM)
    args = (x, packed["wqkv_t"], packed["bqkv"], packed["wo_t"], packed["bo"],
            packed["ln1w"], packed["ln1b"], packed["w1_t"], packed["b1"],
            packed["w2_t"], packed["b2"], packed["ln2w"], packed["ln2b"])

    out = pl.pallas_call(
        _encoder_kernel,
        out_shape=jax.ShapeDtypeStruct((B, S, D), jnp.float32),
        in_specs=[vmem] * len(args),
        out_specs=vmem,
        cost_estimate=_COST,
    )(*args)

    return jnp.transpose(out, (1, 0, 2))       # back to (S,B,D)


# ------------------------- deterministic parameter init -----------------------
def init_params(key):
    params = []
    for _ in range(NUM_LAYERS):
        keys = jax.random.split(key, 9)
        key = keys[0]
        p = {
            "wqkv": jax.random.normal(keys[1], (3 * D, D), jnp.float32) * 0.05,
            "bqkv": jax.random.normal(keys[2], (1, 3 * D), jnp.float32) * 0.01,
            "wo":   jax.random.normal(keys[3], (D, D), jnp.float32) * 0.05,
            "bo":   jax.random.normal(keys[4], (1, D), jnp.float32) * 0.01,
            "ln1w": jnp.ones((1, D), jnp.float32),
            "ln1b": jnp.zeros((1, D), jnp.float32),
            "w1":   jax.random.normal(keys[5], (DFF, D), jnp.float32) * 0.05,
            "b1":   jax.random.normal(keys[6], (1, DFF), jnp.float32) * 0.01,
            "w2":   jax.random.normal(keys[7], (D, DFF), jnp.float32) * 0.05,
            "b2":   jax.random.normal(keys[8], (1, D), jnp.float32) * 0.01,
            "ln2w": jnp.ones((1, D), jnp.float32),
            "ln2b": jnp.zeros((1, D), jnp.float32),
        }
        params.append(p)
    return params


# ------------------------------- pure-JAX reference ----------------------------
def _ref_layer(x, p):  # x: (B, S, D)
    qkv = x @ p["wqkv"].T + p["bqkv"][0]
    q, k, v = jnp.split(qkv, 3, axis=-1)
    q = q.reshape(B, S, H, DH)
    k = k.reshape(B, S, H, DH)
    v = v.reshape(B, S, H, DH)
    s = jnp.einsum("bqhd,bkhd->bhqk", q, k) / math.sqrt(DH)
    pattn = jax.nn.softmax(s, axis=-1)
    attn = jnp.einsum("bhqk,bkhd->bqhd", pattn, v).reshape(B, S, D)
    attn = attn @ p["wo"].T + p["bo"][0]
    x = _layernorm(x + attn, p["ln1w"][0], p["ln1b"][0])
    ff = jnp.maximum(x @ p["w1"].T + p["b1"][0], 0.0) @ p["w2"].T + p["b2"][0]
    return _layernorm(x + ff, p["ln2w"][0], p["ln2b"][0])


def transformer_encoder_ref(src, params):
    x = jnp.transpose(src, (1, 0, 2))
    for p in params:
        x = _ref_layer(x, p)
    return jnp.transpose(x, (1, 0, 2))


# ------------------------------------ main -------------------------------------
if __name__ == "__main__":
    key = jax.random.PRNGKey(0)
    k_src, k_params = jax.random.split(key)
    src = jax.random.normal(k_src, (S, B, D), jnp.float32)   # (seq, batch, d_model)
    params = init_params(k_params)
    packed = pack_params(params)          # one-time, outside the hot path

    out = jax.block_until_ready(transformer_encoder(src, packed))

    ref = transformer_encoder_ref(src, params)
    assert out.shape == (S, B, D)
    # Slightly looser tolerance than 1e-4 because the in-kernel softmax uses the
    # approximate (EUP) reciprocal.
    assert jnp.allclose(out, ref, atol=2e-3, rtol=2e-3), "mismatch vs JAX reference"

    print("KERNEL_OK")
</pallas_src>

<mosaic_0001>
module attributes {stable_mosaic.version = 11 : i64} {
  func.func @_encoder_kernel(%arg0: memref<2x8x32xf32, #tpu.memory_space<vmem>>, %arg1: memref<2x32x96xf32, #tpu.memory_space<vmem>>, %arg2: memref<2x1x96xf32, #tpu.memory_space<vmem>>, %arg3: memref<2x32x32xf32, #tpu.memory_space<vmem>>, %arg4: memref<2x1x32xf32, #tpu.memory_space<vmem>>, %arg5: memref<2x1x32xf32, #tpu.memory_space<vmem>>, %arg6: memref<2x1x32xf32, #tpu.memory_space<vmem>>, %arg7: memref<2x32x64xf32, #tpu.memory_space<vmem>>, %arg8: memref<2x1x64xf32, #tpu.memory_space<vmem>>, %arg9: memref<2x64x32xf32, #tpu.memory_space<vmem>>, %arg10: memref<2x1x32xf32, #tpu.memory_space<vmem>>, %arg11: memref<2x1x32xf32, #tpu.memory_space<vmem>>, %arg12: memref<2x1x32xf32, #tpu.memory_space<vmem>>, %arg13: memref<2x8x32xf32, #tpu.memory_space<vmem>>) attributes {dimension_semantics = [], scalar_prefetch = 0 : i64, scratch_operands = 0 : i64, tpu.core_type = #tpu.core_type<tc>} {
    %c0 = arith.constant 0 : index
    %c0_0 = arith.constant 0 : index
    %c0_1 = arith.constant 0 : index
    %0 = vector.load %arg0[%c0, %c0_0, %c0_1] : memref<2x8x32xf32, #tpu.memory_space<vmem>>, vector<2x8x32xf32>
    %1 = vector.shape_cast %0 : vector<2x8x32xf32> to vector<16x32xf32>
    %c0_2 = arith.constant 0 : index
    %c0_3 = arith.constant 0 : index
    %c0_4 = arith.constant 0 : index
    %2 = vector.load %arg1[%c0_2, %c0_3, %c0_4] : memref<2x32x96xf32, #tpu.memory_space<vmem>>, vector<1x32x96xf32>
    %3 = vector.shape_cast %2 : vector<1x32x96xf32> to vector<32x96xf32>
    %cst = arith.constant dense<0.000000e+00> : vector<16x96xf32>
    %4 = tpu.matmul %1, %3, %cst {dimension_numbers = #tpu.dot_dimension_numbers<[1], [0], [0], [1], [0, 0, 1, 1], [], []>} : vector<16x32xf32>, vector<32x96xf32>, vector<16x96xf32> -> vector<16x96xf32>
    %c0_5 = arith.constant 0 : index
    %c0_6 = arith.constant 0 : index
    %c0_7 = arith.constant 0 : index
    %5 = vector.load %arg2[%c0_5, %c0_6, %c0_7] : memref<2x1x96xf32, #tpu.memory_space<vmem>>, vector<1x1x96xf32>
    %6 = vector.shape_cast %5 : vector<1x1x96xf32> to vector<1x96xf32>
    %7 = vector.broadcast %6 : vector<1x96xf32> to vector<16x96xf32>
    %8 = arith.addf %4, %7 : vector<16x96xf32>
    %9 = vector.extract_strided_slice %8 {offsets = [0, 0], sizes = [16, 32], strides = [1, 1]} : vector<16x96xf32> to vector<16x32xf32>
    %10 = vector.extract_strided_slice %9 {offsets = [0, 0], sizes = [16, 8], strides = [1, 1]} : vector<16x32xf32> to vector<16x8xf32>
    %11 = vector.shape_cast %10 : vector<16x8xf32> to vector<2x8x8xf32>
    %12 = vector.extract_strided_slice %9 {offsets = [0, 8], sizes = [16, 8], strides = [1, 1]} : vector<16x32xf32> to vector<16x8xf32>
    %13 = vector.shape_cast %12 : vector<16x8xf32> to vector<2x8x8xf32>
    %14 = vector.extract_strided_slice %9 {offsets = [0, 16], sizes = [16, 8], strides = [1, 1]} : vector<16x32xf32> to vector<16x8xf32>
    %15 = vector.shape_cast %14 : vector<16x8xf32> to vector<2x8x8xf32>
    %16 = vector.extract_strided_slice %9 {offsets = [0, 24], sizes = [16, 8], strides = [1, 1]} : vector<16x32xf32> to vector<16x8xf32>
    %17 = vector.shape_cast %16 : vector<16x8xf32> to vector<2x8x8xf32>
    %18 = tpu.concatenate %11, %13, %15, %17 in 0 : vector<2x8x8xf32>, vector<2x8x8xf32>, vector<2x8x8xf32>, vector<2x8x8xf32> -> vector<8x8x8xf32>
    %19 = vector.extract_strided_slice %8 {offsets = [0, 32], sizes = [16, 32], strides = [1, 1]} : vector<16x96xf32> to vector<16x32xf32>
    %20 = vector.extract_strided_slice %19 {offsets = [0, 0], sizes = [16, 8], strides = [1, 1]} : vector<16x32xf32> to vector<16x8xf32>
    %21 = vector.shape_cast %20 : vector<16x8xf32> to vector<2x8x8xf32>
    %22 = vector.extract_strided_slice %19 {offsets = [0, 8], sizes = [16, 8], strides = [1, 1]} : vector<16x32xf32> to vector<16x8xf32>
    %23 = vector.shape_cast %22 : vector<16x8xf32> to vector<2x8x8xf32>
    %24 = vector.extract_strided_slice %19 {offsets = [0, 16], sizes = [16, 8], strides = [1, 1]} : vector<16x32xf32> to vector<16x8xf32>
    %25 = vector.shape_cast %24 : vector<16x8xf32> to vector<2x8x8xf32>
    %26 = vector.extract_strided_slice %19 {offsets = [0, 24], sizes = [16, 8], strides = [1, 1]} : vector<16x32xf32> to vector<16x8xf32>
    %27 = vector.shape_cast %26 : vector<16x8xf32> to vector<2x8x8xf32>
    %28 = tpu.concatenate %21, %23, %25, %27 in 0 : vector<2x8x8xf32>, vector<2x8x8xf32>, vector<2x8x8xf32>, vector<2x8x8xf32> -> vector<8x8x8xf32>
    %29 = vector.extract_strided_slice %8 {offsets = [0, 64], sizes = [16, 32], strides = [1, 1]} : vector<16x96xf32> to vector<16x32xf32>
    %30 = vector.extract_strided_slice %29 {offsets = [0, 0], sizes = [16, 8], strides = [1, 1]} : vector<16x32xf32> to vector<16x8xf32>
    %31 = vector.shape_cast %30 : vector<16x8xf32> to vector<2x8x8xf32>
    %32 = vector.extract_strided_slice %29 {offsets = [0, 8], sizes = [16, 8], strides = [1, 1]} : vector<16x32xf32> to vector<16x8xf32>
    %33 = vector.shape_cast %32 : vector<16x8xf32> to vector<2x8x8xf32>
    %34 = vector.extract_strided_slice %29 {offsets = [0, 16], sizes = [16, 8], strides = [1, 1]} : vector<16x32xf32> to vector<16x8xf32>
    %35 = vector.shape_cast %34 : vector<16x8xf32> to vector<2x8x8xf32>
    %36 = vector.extract_strided_slice %29 {offsets = [0, 24], sizes = [16, 8], strides = [1, 1]} : vector<16x32xf32> to vector<16x8xf32>
    %37 = vector.shape_cast %36 : vector<16x8xf32> to vector<2x8x8xf32>
    %38 = tpu.concatenate %31, %33, %35, %37 in 0 : vector<2x8x8xf32>, vector<2x8x8xf32>, vector<2x8x8xf32>, vector<2x8x8xf32> -> vector<8x8x8xf32>
    "tpu.trace_start"() <{level = 10 : i32, message = "nqd,nkd->nqk"}> : () -> ()
    %cst_8 = arith.constant dense<0.000000e+00> : vector<8x8x8xf32>
    %39 = tpu.matmul %18, %28, %cst_8 {dimension_numbers = #tpu.dot_dimension_numbers<[2], [2], [1], [1], [0, 0, 0, 1, 1, 1], [0], [0]>} : vector<8x8x8xf32>, vector<8x8x8xf32>, vector<8x8x8xf32> -> vector<8x8x8xf32>
    "tpu.trace_stop"() : () -> ()
    %cst_9 = arith.constant 0.353553385 : f32
    %40 = vector.broadcast %cst_9 : f32 to vector<8x8x8xf32>
    %41 = arith.mulf %39, %40 : vector<8x8x8xf32>
    %cst_10 = arith.constant dense<0xFF800000> : vector<8x8xf32>
    %42 = vector.multi_reduction <maximumf>, %41, %cst_10 [2] : vector<8x8x8xf32> to vector<8x8xf32>
    %43 = vector.shape_cast %42 : vector<8x8xf32> to vector<8x8x1xf32>
    %44 = vector.broadcast %43 : vector<8x8x1xf32> to vector<8x8x8xf32>
    %45 = arith.subf %41, %44 : vector<8x8x8xf32>
    %46 = math.exp %45 : vector<8x8x8xf32>
    %cst_11 = arith.constant dense<0.000000e+00> : vector<8x8xf32>
    %47 = vector.multi_reduction <add>, %46, %cst_11 [2] : vector<8x8x8xf32> to vector<8x8xf32>
    %48 = vector.shape_cast %47 : vector<8x8xf32> to vector<8x8x1xf32>
    %49 = tpu.reciprocal %48 {approx = true} : vector<8x8x1xf32> -> vector<8x8x1xf32>
    %50 = vector.broadcast %49 : vector<8x8x1xf32> to vector<8x8x8xf32>
    %51 = arith.mulf %46, %50 : vector<8x8x8xf32>
    "tpu.trace_start"() <{level = 10 : i32, message = "nqk,nkd->nqd"}> : () -> ()
    %cst_12 = arith.constant dense<0.000000e+00> : vector<8x8x8xf32>
    %52 = tpu.matmul %51, %38, %cst_12 {dimension_numbers = #tpu.dot_dimension_numbers<[2], [1], [1], [2], [0, 0, 0, 1, 1, 2], [0], [0]>} : vector<8x8x8xf32>, vector<8x8x8xf32>, vector<8x8x8xf32> -> vector<8x8x8xf32>
    "tpu.trace_stop"() : () -> ()
    %53 = vector.extract_strided_slice %52 {offsets = [0, 0, 0], sizes = [2, 8, 8], strides = [1, 1, 1]} : vector<8x8x8xf32> to vector<2x8x8xf32>
    %54 = vector.shape_cast %53 : vector<2x8x8xf32> to vector<16x8xf32>
    %55 = vector.extract_strided_slice %52 {offsets = [2, 0, 0], sizes = [2, 8, 8], strides = [1, 1, 1]} : vector<8x8x8xf32> to vector<2x8x8xf32>
    %56 = vector.shape_cast %55 : vector<2x8x8xf32> to vector<16x8xf32>
    %57 = vector.extract_strided_slice %52 {offsets = [4, 0, 0], sizes = [2, 8, 8], strides = [1, 1, 1]} : vector<8x8x8xf32> to vector<2x8x8xf32>
    %58 = vector.shape_cast %57 : vector<2x8x8xf32> to vector<16x8xf32>
    %59 = vector.extract_strided_slice %52 {offsets = [6, 0, 0], sizes = [2, 8, 8], strides = [1, 1, 1]} : vector<8x8x8xf32> to vector<2x8x8xf32>
    %60 = vector.shape_cast %59 : vector<2x8x8xf32> to vector<16x8xf32>
    %61 = tpu.concatenate %54, %56, %58, %60 in 1 : vector<16x8xf32>, vector<16x8xf32>, vector<16x8xf32>, vector<16x8xf32> -> vector<16x32xf32>
    %c0_13 = arith.constant 0 : index
    %c0_14 = arith.constant 0 : index
    %c0_15 = arith.constant 0 : index
    %62 = vector.load %arg3[%c0_13, %c0_14, %c0_15] : memref<2x32x32xf32, #tpu.memory_space<vmem>>, vector<1x32x32xf32>
    %63 = vector.shape_cast %62 : vector<1x32x32xf32> to vector<32x32xf32>
    %cst_16 = arith.constant dense<0.000000e+00> : vector<16x32xf32>
    %64 = tpu.matmul %61, %63, %cst_16 {dimension_numbers = #tpu.dot_dimension_numbers<[1], [0], [0], [1], [0, 0, 1, 1], [], []>} : vector<16x32xf32>, vector<32x32xf32>, vector<16x32xf32> -> vector<16x32xf32>
    %c0_17 = arith.constant 0 : index
    %c0_18 = arith.constant 0 : index
    %c0_19 = arith.constant 0 : index
    %65 = vector.load %arg4[%c0_17, %c0_18, %c0_19] : memref<2x1x32xf32, #tpu.memory_space<vmem>>, vector<1x1x32xf32>
    %66 = vector.shape_cast %65 : vector<1x1x32xf32> to vector<1x32xf32>
    %67 = vector.broadcast %66 : vector<1x32xf32> to vector<16x32xf32>
    %68 = arith.addf %64, %67 : vector<16x32xf32>
    %69 = arith.addf %1, %68 : vector<16x32xf32>
    %c0_20 = arith.constant 0 : index
    %c0_21 = arith.constant 0 : index
    %c0_22 = arith.constant 0 : index
    %70 = vector.load %arg5[%c0_20, %c0_21, %c0_22] : memref<2x1x32xf32, #tpu.memory_space<vmem>>, vector<1x1x32xf32>
    %71 = vector.shape_cast %70 : vector<1x1x32xf32> to vector<1x32xf32>
    %c0_23 = arith.constant 0 : index
    %c0_24 = arith.constant 0 : index
    %c0_25 = arith.constant 0 : index
    %72 = vector.load %arg6[%c0_23, %c0_24, %c0_25] : memref<2x1x32xf32, #tpu.memory_space<vmem>>, vector<1x1x32xf32>
    %73 = vector.shape_cast %72 : vector<1x1x32xf32> to vector<1x32xf32>
    %cst_26 = arith.constant dense<0.000000e+00> : vector<16xf32>
    %74 = vector.multi_reduction <add>, %69, %cst_26 [1] : vector<16x32xf32> to vector<16xf32>
    %75 = vector.shape_cast %74 : vector<16xf32> to vector<16x1xf32>
    %cst_27 = arith.constant 3.200000e+01 : f32
    %76 = vector.broadcast %cst_27 : f32 to vector<16x1xf32>
    %77 = arith.divf %75, %76 : vector<16x1xf32>
    %78 = vector.broadcast %77 : vector<16x1xf32> to vector<16x32xf32>
    %79 = arith.subf %69, %78 : vector<16x32xf32>
    %80 = arith.mulf %79, %79 : vector<16x32xf32>
    %cst_28 = arith.constant dense<0.000000e+00> : vector<16xf32>
    %81 = vector.multi_reduction <add>, %80, %cst_28 [1] : vector<16x32xf32> to vector<16xf32>
    %82 = vector.shape_cast %81 : vector<16xf32> to vector<16x1xf32>
    %cst_29 = arith.constant 3.200000e+01 : f32
    %83 = vector.broadcast %cst_29 : f32 to vector<16x1xf32>
    %84 = arith.divf %82, %83 : vector<16x1xf32>
    %85 = vector.broadcast %77 : vector<16x1xf32> to vector<16x32xf32>
    %86 = arith.subf %69, %85 : vector<16x32xf32>
    %cst_30 = arith.constant 9.99999974E-6 : f32
    %87 = vector.broadcast %cst_30 : f32 to vector<16x1xf32>
    %88 = arith.addf %84, %87 : vector<16x1xf32>
    %89 = math.rsqrt %88 : vector<16x1xf32>
    %90 = vector.broadcast %89 : vector<16x1xf32> to vector<16x32xf32>
    %91 = arith.mulf %86, %90 : vector<16x32xf32>
    %92 = vector.broadcast %71 : vector<1x32xf32> to vector<16x32xf32>
    %93 = arith.mulf %91, %92 : vector<16x32xf32>
    %94 = vector.broadcast %73 : vector<1x32xf32> to vector<16x32xf32>
    %95 = arith.addf %93, %94 : vector<16x32xf32>
    %c0_31 = arith.constant 0 : index
    %c0_32 = arith.constant 0 : index
    %c0_33 = arith.constant 0 : index
    %96 = vector.load %arg7[%c0_31, %c0_32, %c0_33] : memref<2x32x64xf32, #tpu.memory_space<vmem>>, vector<1x32x64xf32>
    %97 = vector.shape_cast %96 : vector<1x32x64xf32> to vector<32x64xf32>
    %cst_34 = arith.constant dense<0.000000e+00> : vector<16x64xf32>
    %98 = tpu.matmul %95, %97, %cst_34 {dimension_numbers = #tpu.dot_dimension_numbers<[1], [0], [0], [1], [0, 0, 1, 1], [], []>} : vector<16x32xf32>, vector<32x64xf32>, vector<16x64xf32> -> vector<16x64xf32>
    %c0_35 = arith.constant 0 : index
    %c0_36 = arith.constant 0 : index
    %c0_37 = arith.constant 0 : index
    %99 = vector.load %arg8[%c0_35, %c0_36, %c0_37] : memref<2x1x64xf32, #tpu.memory_space<vmem>>, vector<1x1x64xf32>
    %100 = vector.shape_cast %99 : vector<1x1x64xf32> to vector<1x64xf32>
    %101 = vector.broadcast %100 : vector<1x64xf32> to vector<16x64xf32>
    %102 = arith.addf %98, %101 : vector<16x64xf32>
    %cst_38 = arith.constant 0.000000e+00 : f32
    %103 = vector.broadcast %cst_38 : f32 to vector<16x64xf32>
    %104 = arith.maximumf %102, %103 : vector<16x64xf32>
    %c0_39 = arith.constant 0 : index
    %c0_40 = arith.constant 0 : index
    %c0_41 = arith.constant 0 : index
    %105 = vector.load %arg9[%c0_39, %c0_40, %c0_41] : memref<2x64x32xf32, #tpu.memory_space<vmem>>, vector<1x64x32xf32>
    %106 = vector.shape_cast %105 : vector<1x64x32xf32> to vector<64x32xf32>
    %cst_42 = arith.constant dense<0.000000e+00> : vector<16x32xf32>
    %107 = tpu.matmul %104, %106, %cst_42 {dimension_numbers = #tpu.dot_dimension_numbers<[1], [0], [0], [1], [0, 0, 1, 1], [], []>} : vector<16x64xf32>, vector<64x32xf32>, vector<16x32xf32> -> vector<16x32xf32>
    %c0_43 = arith.constant 0 : index
    %c0_44 = arith.constant 0 : index
    %c0_45 = arith.constant 0 : index
    %108 = vector.load %arg10[%c0_43, %c0_44, %c0_45] : memref<2x1x32xf32, #tpu.memory_space<vmem>>, vector<1x1x32xf32>
    %109 = vector.shape_cast %108 : vector<1x1x32xf32> to vector<1x32xf32>
    %110 = vector.broadcast %109 : vector<1x32xf32> to vector<16x32xf32>
    %111 = arith.addf %107, %110 : vector<16x32xf32>
    %112 = arith.addf %95, %111 : vector<16x32xf32>
    %c0_46 = arith.constant 0 : index
    %c0_47 = arith.constant 0 : index
    %c0_48 = arith.constant 0 : index
    %113 = vector.load %arg11[%c0_46, %c0_47, %c0_48] : memref<2x1x32xf32, #tpu.memory_space<vmem>>, vector<1x1x32xf32>
    %114 = vector.shape_cast %113 : vector<1x1x32xf32> to vector<1x32xf32>
    %c0_49 = arith.constant 0 : index
    %c0_50 = arith.constant 0 : index
    %c0_51 = arith.constant 0 : index
    %115 = vector.load %arg12[%c0_49, %c0_50, %c0_51] : memref<2x1x32xf32, #tpu.memory_space<vmem>>, vector<1x1x32xf32>
    %116 = vector.shape_cast %115 : vector<1x1x32xf32> to vector<1x32xf32>
    %cst_52 = arith.constant dense<0.000000e+00> : vector<16xf32>
    %117 = vector.multi_reduction <add>, %112, %cst_52 [1] : vector<16x32xf32> to vector<16xf32>
    %118 = vector.shape_cast %117 : vector<16xf32> to vector<16x1xf32>
    %cst_53 = arith.constant 3.200000e+01 : f32
    %119 = vector.broadcast %cst_53 : f32 to vector<16x1xf32>
    %120 = arith.divf %118, %119 : vector<16x1xf32>
    %121 = vector.broadcast %120 : vector<16x1xf32> to vector<16x32xf32>
    %122 = arith.subf %112, %121 : vector<16x32xf32>
    %123 = arith.mulf %122, %122 : vector<16x32xf32>
    %cst_54 = arith.constant dense<0.000000e+00> : vector<16xf32>
    %124 = vector.multi_reduction <add>, %123, %cst_54 [1] : vector<16x32xf32> to vector<16xf32>
    %125 = vector.shape_cast %124 : vector<16xf32> to vector<16x1xf32>
    %cst_55 = arith.constant 3.200000e+01 : f32
    %126 = vector.broadcast %cst_55 : f32 to vector<16x1xf32>
    %127 = arith.divf %125, %126 : vector<16x1xf32>
    %128 = vector.broadcast %120 : vector<16x1xf32> to vector<16x32xf32>
    %129 = arith.subf %112, %128 : vector<16x32xf32>
    %cst_56 = arith.constant 9.99999974E-6 : f32
    %130 = vector.broadcast %cst_56 : f32 to vector<16x1xf32>
    %131 = arith.addf %127, %130 : vector<16x1xf32>
    %132 = math.rsqrt %131 : vector<16x1xf32>
    %133 = vector.broadcast %132 : vector<16x1xf32> to vector<16x32xf32>
    %134 = arith.mulf %129, %133 : vector<16x32xf32>
    %135 = vector.broadcast %114 : vector<1x32xf32> to vector<16x32xf32>
    %136 = arith.mulf %134, %135 : vector<16x32xf32>
    %137 = vector.broadcast %116 : vector<1x32xf32> to vector<16x32xf32>
    %138 = arith.addf %136, %137 : vector<16x32xf32>
    %c1 = arith.constant 1 : index
    %c0_57 = arith.constant 0 : index
    %c0_58 = arith.constant 0 : index
    %139 = vector.load %arg1[%c1, %c0_57, %c0_58] : memref<2x32x96xf32, #tpu.memory_space<vmem>>, vector<1x32x96xf32>
    %140 = vector.shape_cast %139 : vector<1x32x96xf32> to vector<32x96xf32>
    %cst_59 = arith.constant dense<0.000000e+00> : vector<16x96xf32>
    %141 = tpu.matmul %138, %140, %cst_59 {dimension_numbers = #tpu.dot_dimension_numbers<[1], [0], [0], [1], [0, 0, 1, 1], [], []>} : vector<16x32xf32>, vector<32x96xf32>, vector<16x96xf32> -> vector<16x96xf32>
    %c1_60 = arith.constant 1 : index
    %c0_61 = arith.constant 0 : index
    %c0_62 = arith.constant 0 : index
    %142 = vector.load %arg2[%c1_60, %c0_61, %c0_62] : memref<2x1x96xf32, #tpu.memory_space<vmem>>, vector<1x1x96xf32>
    %143 = vector.shape_cast %142 : vector<1x1x96xf32> to vector<1x96xf32>
    %144 = vector.broadcast %143 : vector<1x96xf32> to vector<16x96xf32>
    %145 = arith.addf %141, %144 : vector<16x96xf32>
    %146 = vector.extract_strided_slice %145 {offsets = [0, 0], sizes = [16, 32], strides = [1, 1]} : vector<16x96xf32> to vector<16x32xf32>
    %147 = vector.extract_strided_slice %146 {offsets = [0, 0], sizes = [16, 8], strides = [1, 1]} : vector<16x32xf32> to vector<16x8xf32>
    %148 = vector.shape_cast %147 : vector<16x8xf32> to vector<2x8x8xf32>
    %149 = vector.extract_strided_slice %146 {offsets = [0, 8], sizes = [16, 8], strides = [1, 1]} : vector<16x32xf32> to vector<16x8xf32>
    %150 = vector.shape_cast %149 : vector<16x8xf32> to vector<2x8x8xf32>
    %151 = vector.extract_strided_slice %146 {offsets = [0, 16], sizes = [16, 8], strides = [1, 1]} : vector<16x32xf32> to vector<16x8xf32>
    %152 = vector.shape_cast %151 : vector<16x8xf32> to vector<2x8x8xf32>
    %153 = vector.extract_strided_slice %146 {offsets = [0, 24], sizes = [16, 8], strides = [1, 1]} : vector<16x32xf32> to vector<16x8xf32>
    %154 = vector.shape_cast %153 : vector<16x8xf32> to vector<2x8x8xf32>
    %155 = tpu.concatenate %148, %150, %152, %154 in 0 : vector<2x8x8xf32>, vector<2x8x8xf32>, vector<2x8x8xf32>, vector<2x8x8xf32> -> vector<8x8x8xf32>
    %156 = vector.extract_strided_slice %145 {offsets = [0, 32], sizes = [16, 32], strides = [1, 1]} : vector<16x96xf32> to vector<16x32xf32>
    %157 = vector.extract_strided_slice %156 {offsets = [0, 0], sizes = [16, 8], strides = [1, 1]} : vector<16x32xf32> to vector<16x8xf32>
    %158 = vector.shape_cast %157 : vector<16x8xf32> to vector<2x8x8xf32>
    %159 = vector.extract_strided_slice %156 {offsets = [0, 8], sizes = [16, 8], strides = [1, 1]} : vector<16x32xf32> to vector<16x8xf32>
    %160 = vector.shape_cast %159 : vector<16x8xf32> to vector<2x8x8xf32>
    %161 = vector.extract_strided_slice %156 {offsets = [0, 16], sizes = [16, 8], strides = [1, 1]} : vector<16x32xf32> to vector<16x8xf32>
    %162 = vector.shape_cast %161 : vector<16x8xf32> to vector<2x8x8xf32>
    %163 = vector.extract_strided_slice %156 {offsets = [0, 24], sizes = [16, 8], strides = [1, 1]} : vector<16x32xf32> to vector<16x8xf32>
    %164 = vector.shape_cast %163 : vector<16x8xf32> to vector<2x8x8xf32>
    %165 = tpu.concatenate %158, %160, %162, %164 in 0 : vector<2x8x8xf32>, vector<2x8x8xf32>, vector<2x8x8xf32>, vector<2x8x8xf32> -> vector<8x8x8xf32>
    %166 = vector.extract_strided_slice %145 {offsets = [0, 64], sizes = [16, 32], strides = [1, 1]} : vector<16x96xf32> to vector<16x32xf32>
    %167 = vector.extract_strided_slice %166 {offsets = [0, 0], sizes = [16, 8], strides = [1, 1]} : vector<16x32xf32> to vector<16x8xf32>
    %168 = vector.shape_cast %167 : vector<16x8xf32> to vector<2x8x8xf32>
    %169 = vector.extract_strided_slice %166 {offsets = [0, 8], sizes = [16, 8], strides = [1, 1]} : vector<16x32xf32> to vector<16x8xf32>
    %170 = vector.shape_cast %169 : vector<16x8xf32> to vector<2x8x8xf32>
    %171 = vector.extract_strided_slice %166 {offsets = [0, 16], sizes = [16, 8], strides = [1, 1]} : vector<16x32xf32> to vector<16x8xf32>
    %172 = vector.shape_cast %171 : vector<16x8xf32> to vector<2x8x8xf32>
    %173 = vector.extract_strided_slice %166 {offsets = [0, 24], sizes = [16, 8], strides = [1, 1]} : vector<16x32xf32> to vector<16x8xf32>
    %174 = vector.shape_cast %173 : vector<16x8xf32> to vector<2x8x8xf32>
    %175 = tpu.concatenate %168, %170, %172, %174 in 0 : vector<2x8x8xf32>, vector<2x8x8xf32>, vector<2x8x8xf32>, vector<2x8x8xf32> -> vector<8x8x8xf32>
    "tpu.trace_start"() <{level = 10 : i32, message = "nqd,nkd->nqk"}> : () -> ()
    %cst_63 = arith.constant dense<0.000000e+00> : vector<8x8x8xf32>
    %176 = tpu.matmul %155, %165, %cst_63 {dimension_numbers = #tpu.dot_dimension_numbers<[2], [2], [1], [1], [0, 0, 0, 1, 1, 1], [0], [0]>} : vector<8x8x8xf32>, vector<8x8x8xf32>, vector<8x8x8xf32> -> vector<8x8x8xf32>
    "tpu.trace_stop"() : () -> ()
    %cst_64 = arith.constant 0.353553385 : f32
    %177 = vector.broadcast %cst_64 : f32 to vector<8x8x8xf32>
    %178 = arith.mulf %176, %177 : vector<8x8x8xf32>
    %cst_65 = arith.constant dense<0xFF800000> : vector<8x8xf32>
    %179 = vector.multi_reduction <maximumf>, %178, %cst_65 [2] : vector<8x8x8xf32> to vector<8x8xf32>
    %180 = vector.shape_cast %179 : vector<8x8xf32> to vector<8x8x1xf32>
    %181 = vector.broadcast %180 : vector<8x8x1xf32> to vector<8x8x8xf32>
    %182 = arith.subf %178, %181 : vector<8x8x8xf32>
    %183 = math.exp %182 : vector<8x8x8xf32>
    %cst_66 = arith.constant dense<0.000000e+00> : vector<8x8xf32>
    %184 = vector.multi_reduction <add>, %183, %cst_66 [2] : vector<8x8x8xf32> to vector<8x8xf32>
    %185 = vector.shape_cast %184 : vector<8x8xf32> to vector<8x8x1xf32>
    %186 = tpu.reciprocal %185 {approx = true} : vector<8x8x1xf32> -> vector<8x8x1xf32>
    %187 = vector.broadcast %186 : vector<8x8x1xf32> to vector<8x8x8xf32>
    %188 = arith.mulf %183, %187 : vector<8x8x8xf32>
    "tpu.trace_start"() <{level = 10 : i32, message = "nqk,nkd->nqd"}> : () -> ()
    %cst_67 = arith.constant dense<0.000000e+00> : vector<8x8x8xf32>
    %189 = tpu.matmul %188, %175, %cst_67 {dimension_numbers = #tpu.dot_dimension_numbers<[2], [1], [1], [2], [0, 0, 0, 1, 1, 2], [0], [0]>} : vector<8x8x8xf32>, vector<8x8x8xf32>, vector<8x8x8xf32> -> vector<8x8x8xf32>
    "tpu.trace_stop"() : () -> ()
    %190 = vector.extract_strided_slice %189 {offsets = [0, 0, 0], sizes = [2, 8, 8], strides = [1, 1, 1]} : vector<8x8x8xf32> to vector<2x8x8xf32>
    %191 = vector.shape_cast %190 : vector<2x8x8xf32> to vector<16x8xf32>
    %192 = vector.extract_strided_slice %189 {offsets = [2, 0, 0], sizes = [2, 8, 8], strides = [1, 1, 1]} : vector<8x8x8xf32> to vector<2x8x8xf32>
    %193 = vector.shape_cast %192 : vector<2x8x8xf32> to vector<16x8xf32>
    %194 = vector.extract_strided_slice %189 {offsets = [4, 0, 0], sizes = [2, 8, 8], strides = [1, 1, 1]} : vector<8x8x8xf32> to vector<2x8x8xf32>
    %195 = vector.shape_cast %194 : vector<2x8x8xf32> to vector<16x8xf32>
    %196 = vector.extract_strided_slice %189 {offsets = [6, 0, 0], sizes = [2, 8, 8], strides = [1, 1, 1]} : vector<8x8x8xf32> to vector<2x8x8xf32>
    %197 = vector.shape_cast %196 : vector<2x8x8xf32> to vector<16x8xf32>
    %198 = tpu.concatenate %191, %193, %195, %197 in 1 : vector<16x8xf32>, vector<16x8xf32>, vector<16x8xf32>, vector<16x8xf32> -> vector<16x32xf32>
    %c1_68 = arith.constant 1 : index
    %c0_69 = arith.constant 0 : index
    %c0_70 = arith.constant 0 : index
    %199 = vector.load %arg3[%c1_68, %c0_69, %c0_70] : memref<2x32x32xf32, #tpu.memory_space<vmem>>, vector<1x32x32xf32>
    %200 = vector.shape_cast %199 : vector<1x32x32xf32> to vector<32x32xf32>
    %cst_71 = arith.constant dense<0.000000e+00> : vector<16x32xf32>
    %201 = tpu.matmul %198, %200, %cst_71 {dimension_numbers = #tpu.dot_dimension_numbers<[1], [0], [0], [1], [0, 0, 1, 1], [], []>} : vector<16x32xf32>, vector<32x32xf32>, vector<16x32xf32> -> vector<16x32xf32>
    %c1_72 = arith.constant 1 : index
    %c0_73 = arith.constant 0 : index
    %c0_74 = arith.constant 0 : index
    %202 = vector.load %arg4[%c1_72, %c0_73, %c0_74] : memref<2x1x32xf32, #tpu.memory_space<vmem>>, vector<1x1x32xf32>
    %203 = vector.shape_cast %202 : vector<1x1x32xf32> to vector<1x32xf32>
    %204 = vector.broadcast %203 : vector<1x32xf32> to vector<16x32xf32>
    %205 = arith.addf %201, %204 : vector<16x32xf32>
    %206 = arith.addf %138, %205 : vector<16x32xf32>
    %c1_75 = arith.constant 1 : index
    %c0_76 = arith.constant 0 : index
    %c0_77 = arith.constant 0 : index
    %207 = vector.load %arg5[%c1_75, %c0_76, %c0_77] : memref<2x1x32xf32, #tpu.memory_space<vmem>>, vector<1x1x32xf32>
    %208 = vector.shape_cast %207 : vector<1x1x32xf32> to vector<1x32xf32>
    %c1_78 = arith.constant 1 : index
    %c0_79 = arith.constant 0 : index
    %c0_80 = arith.constant 0 : index
    %209 = vector.load %arg6[%c1_78, %c0_79, %c0_80] : memref<2x1x32xf32, #tpu.memory_space<vmem>>, vector<1x1x32xf32>
    %210 = vector.shape_cast %209 : vector<1x1x32xf32> to vector<1x32xf32>
    %cst_81 = arith.constant dense<0.000000e+00> : vector<16xf32>
    %211 = vector.multi_reduction <add>, %206, %cst_81 [1] : vector<16x32xf32> to vector<16xf32>
    %212 = vector.shape_cast %211 : vector<16xf32> to vector<16x1xf32>
    %cst_82 = arith.constant 3.200000e+01 : f32
    %213 = vector.broadcast %cst_82 : f32 to vector<16x1xf32>
    %214 = arith.divf %212, %213 : vector<16x1xf32>
    %215 = vector.broadcast %214 : vector<16x1xf32> to vector<16x32xf32>
    %216 = arith.subf %206, %215 : vector<16x32xf32>
    %217 = arith.mulf %216, %216 : vector<16x32xf32>
    %cst_83 = arith.constant dense<0.000000e+00> : vector<16xf32>
    %218 = vector.multi_reduction <add>, %217, %cst_83 [1] : vector<16x32xf32> to vector<16xf32>
    %219 = vector.shape_cast %218 : vector<16xf32> to vector<16x1xf32>
    %cst_84 = arith.constant 3.200000e+01 : f32
    %220 = vector.broadcast %cst_84 : f32 to vector<16x1xf32>
    %221 = arith.divf %219, %220 : vector<16x1xf32>
    %222 = vector.broadcast %214 : vector<16x1xf32> to vector<16x32xf32>
    %223 = arith.subf %206, %222 : vector<16x32xf32>
    %cst_85 = arith.constant 9.99999974E-6 : f32
    %224 = vector.broadcast %cst_85 : f32 to vector<16x1xf32>
    %225 = arith.addf %221, %224 : vector<16x1xf32>
    %226 = math.rsqrt %225 : vector<16x1xf32>
    %227 = vector.broadcast %226 : vector<16x1xf32> to vector<16x32xf32>
    %228 = arith.mulf %223, %227 : vector<16x32xf32>
    %229 = vector.broadcast %208 : vector<1x32xf32> to vector<16x32xf32>
    %230 = arith.mulf %228, %229 : vector<16x32xf32>
    %231 = vector.broadcast %210 : vector<1x32xf32> to vector<16x32xf32>
    %232 = arith.addf %230, %231 : vector<16x32xf32>
    %c1_86 = arith.constant 1 : index
    %c0_87 = arith.constant 0 : index
    %c0_88 = arith.constant 0 : index
    %233 = vector.load %arg7[%c1_86, %c0_87, %c0_88] : memref<2x32x64xf32, #tpu.memory_space<vmem>>, vector<1x32x64xf32>
    %234 = vector.shape_cast %233 : vector<1x32x64xf32> to vector<32x64xf32>
    %cst_89 = arith.constant dense<0.000000e+00> : vector<16x64xf32>
    %235 = tpu.matmul %232, %234, %cst_89 {dimension_numbers = #tpu.dot_dimension_numbers<[1], [0], [0], [1], [0, 0, 1, 1], [], []>} : vector<16x32xf32>, vector<32x64xf32>, vector<16x64xf32> -> vector<16x64xf32>
    %c1_90 = arith.constant 1 : index
    %c0_91 = arith.constant 0 : index
    %c0_92 = arith.constant 0 : index
    %236 = vector.load %arg8[%c1_90, %c0_91, %c0_92] : memref<2x1x64xf32, #tpu.memory_space<vmem>>, vector<1x1x64xf32>
    %237 = vector.shape_cast %236 : vector<1x1x64xf32> to vector<1x64xf32>
    %238 = vector.broadcast %237 : vector<1x64xf32> to vector<16x64xf32>
    %239 = arith.addf %235, %238 : vector<16x64xf32>
    %cst_93 = arith.constant 0.000000e+00 : f32
    %240 = vector.broadcast %cst_93 : f32 to vector<16x64xf32>
    %241 = arith.maximumf %239, %240 : vector<16x64xf32>
    %c1_94 = arith.constant 1 : index
    %c0_95 = arith.constant 0 : index
    %c0_96 = arith.constant 0 : index
    %242 = vector.load %arg9[%c1_94, %c0_95, %c0_96] : memref<2x64x32xf32, #tpu.memory_space<vmem>>, vector<1x64x32xf32>
    %243 = vector.shape_cast %242 : vector<1x64x32xf32> to vector<64x32xf32>
    %cst_97 = arith.constant dense<0.000000e+00> : vector<16x32xf32>
    %244 = tpu.matmul %241, %243, %cst_97 {dimension_numbers = #tpu.dot_dimension_numbers<[1], [0], [0], [1], [0, 0, 1, 1], [], []>} : vector<16x64xf32>, vector<64x32xf32>, vector<16x32xf32> -> vector<16x32xf32>
    %c1_98 = arith.constant 1 : index
    %c0_99 = arith.constant 0 : index
    %c0_100 = arith.constant 0 : index
    %245 = vector.load %arg10[%c1_98, %c0_99, %c0_100] : memref<2x1x32xf32, #tpu.memory_space<vmem>>, vector<1x1x32xf32>
    %246 = vector.shape_cast %245 : vector<1x1x32xf32> to vector<1x32xf32>
    %247 = vector.broadcast %246 : vector<1x32xf32> to vector<16x32xf32>
    %248 = arith.addf %244, %247 : vector<16x32xf32>
    %249 = arith.addf %232, %248 : vector<16x32xf32>
    %c1_101 = arith.constant 1 : index
    %c0_102 = arith.constant 0 : index
    %c0_103 = arith.constant 0 : index
    %250 = vector.load %arg11[%c1_101, %c0_102, %c0_103] : memref<2x1x32xf32, #tpu.memory_space<vmem>>, vector<1x1x32xf32>
    %251 = vector.shape_cast %250 : vector<1x1x32xf32> to vector<1x32xf32>
    %c1_104 = arith.constant 1 : index
    %c0_105 = arith.constant 0 : index
    %c0_106 = arith.constant 0 : index
    %252 = vector.load %arg12[%c1_104, %c0_105, %c0_106] : memref<2x1x32xf32, #tpu.memory_space<vmem>>, vector<1x1x32xf32>
    %253 = vector.shape_cast %252 : vector<1x1x32xf32> to vector<1x32xf32>
    %cst_107 = arith.constant dense<0.000000e+00> : vector<16xf32>
    %254 = vector.multi_reduction <add>, %249, %cst_107 [1] : vector<16x32xf32> to vector<16xf32>
    %255 = vector.shape_cast %254 : vector<16xf32> to vector<16x1xf32>
    %cst_108 = arith.constant 3.200000e+01 : f32
    %256 = vector.broadcast %cst_108 : f32 to vector<16x1xf32>
    %257 = arith.divf %255, %256 : vector<16x1xf32>
    %258 = vector.broadcast %257 : vector<16x1xf32> to vector<16x32xf32>
    %259 = arith.subf %249, %258 : vector<16x32xf32>
    %260 = arith.mulf %259, %259 : vector<16x32xf32>
    %cst_109 = arith.constant dense<0.000000e+00> : vector<16xf32>
    %261 = vector.multi_reduction <add>, %260, %cst_109 [1] : vector<16x32xf32> to vector<16xf32>
    %262 = vector.shape_cast %261 : vector<16xf32> to vector<16x1xf32>
    %cst_110 = arith.constant 3.200000e+01 : f32
    %263 = vector.broadcast %cst_110 : f32 to vector<16x1xf32>
    %264 = arith.divf %262, %263 : vector<16x1xf32>
    %265 = vector.broadcast %257 : vector<16x1xf32> to vector<16x32xf32>
    %266 = arith.subf %249, %265 : vector<16x32xf32>
    %cst_111 = arith.constant 9.99999974E-6 : f32
    %267 = vector.broadcast %cst_111 : f32 to vector<16x1xf32>
    %268 = arith.addf %264, %267 : vector<16x1xf32>
    %269 = math.rsqrt %268 : vector<16x1xf32>
    %270 = vector.broadcast %269 : vector<16x1xf32> to vector<16x32xf32>
    %271 = arith.mulf %266, %270 : vector<16x32xf32>
    %272 = vector.broadcast %251 : vector<1x32xf32> to vector<16x32xf32>
    %273 = arith.mulf %271, %272 : vector<16x32xf32>
    %274 = vector.broadcast %253 : vector<1x32xf32> to vector<16x32xf32>
    %275 = arith.addf %273, %274 : vector<16x32xf32>
    %276 = vector.shape_cast %275 : vector<16x32xf32> to vector<2x8x32xf32>
    %c0_112 = arith.constant 0 : index
    %c0_113 = arith.constant 0 : index
    %c0_114 = arith.constant 0 : index
    %277 = vector.load %arg13[%c0_112, %c0_113, %c0_114] : memref<2x8x32xf32, #tpu.memory_space<vmem>>, vector<2x8x32xf32>
    tpu.vector_store %arg13[%c0_112, %c0_113, %c0_114], %276 {strides = array<i32>} : memref<2x8x32xf32, #tpu.memory_space<vmem>>, vector<2x8x32xf32>,
    return
  }
}

</mosaic_0001>

<llo_original>
// kernel: transformer_encoder.1
$region0: #{transformer_encoder.1}
  #allocation0 [shape = 'u32[]', space=smem, size = 0x4, offset = 0x4, fixed_abs, tag = 'smem constant byte address 0x4 - core index']
  #allocation1 [shape = 'u32[144,128]{1,0:T(1,128)}', space=vmem, size = 0x12000, scoped, tag = 'internal scratch']
  %s0 = inlined_call_operand.vmem [shape: f32[2,8,32], index: 0, kind: input, shape index: {}]
  %s1 = inlined_call_operand.vmem [shape: f32[2,32,96], index: 1, kind: input, shape index: {}]
  %s2 = inlined_call_operand.vmem [shape: f32[2,1,96], index: 2, kind: input, shape index: {}]
  %s3 = inlined_call_operand.vmem [shape: f32[2,32,32], index: 3, kind: input, shape index: {}]
  %s4 = inlined_call_operand.vmem [shape: f32[2,1,32], index: 4, kind: input, shape index: {}]
  %s5 = inlined_call_operand.vmem [shape: f32[2,1,32], index: 5, kind: input, shape index: {}]
  %s6 = inlined_call_operand.vmem [shape: f32[2,1,32], index: 6, kind: input, shape index: {}]
  %s7 = inlined_call_operand.vmem [shape: f32[2,32,64], index: 7, kind: input, shape index: {}]
  %s8 = inlined_call_operand.vmem [shape: f32[2,1,64], index: 8, kind: input, shape index: {}]
  %s9 = inlined_call_operand.vmem [shape: f32[2,64,32], index: 9, kind: input, shape index: {}]
  %s10 = inlined_call_operand.vmem [shape: f32[2,1,32], index: 10, kind: input, shape index: {}]
  %s11 = inlined_call_operand.vmem [shape: f32[2,1,32], index: 11, kind: input, shape index: {}]
  %s12 = inlined_call_operand.vmem [shape: f32[2,1,32], index: 12, kind: input, shape index: {}]
  %s13 = inlined_call_operand.vmem [shape: f32[2,8,32], index: 13, kind: output, shape index: {}]
  %s14 = sld [smem:[#allocation0]]
  $region62: #{transformer_encoder.1} parent=0
    _
  %s16 = ssub.s32 1, %s14
  %s17 = scalar_select 0, %s16, %s14
  // Predicated region
  $region2: #{transformer_encoder.1} parent=0 // pred_check
    _
  $region3: #{transformer_encoder.1} parent=0 // pred_check_branch
    %19 = sbr.rel (0) target = $region5
  $region4: #{transformer_encoder.1} parent=0 // pred_region
    _
  $region5: #{transformer_encoder.1} parent=0 // pred_fallthru
    _
  // Predicated region
  $region6: #{transformer_encoder.1} parent=0 // pred_check
    _
  $region7: #{transformer_encoder.1} parent=0 // pred_check_branch
    %21 = sbr.rel (0) target = $region9
  $region8: #{transformer_encoder.1} parent=0 // pred_region
    _
  $region9: #{transformer_encoder.1} parent=0 // pred_fallthru
    _
  // Predicated region
  $region10: #{transformer_encoder.1} parent=0 // pred_check
    _
  $region11: #{transformer_encoder.1} parent=0 // pred_check_branch
    %23 = sbr.rel (0) target = $region13
  $region12: #{transformer_encoder.1} parent=0 // pred_region
    _
  $region13: #{transformer_encoder.1} parent=0 // pred_fallthru
    _
  // Predicated region
  $region14: #{transformer_encoder.1} parent=0 // pred_check
    _
  $region15: #{transformer_encoder.1} parent=0 // pred_check_branch
    %25 = sbr.rel (0) target = $region17
  $region16: #{transformer_encoder.1} parent=0 // pred_region
    _
  $region17: #{transformer_encoder.1} parent=0 // pred_fallthru
    _
  // Predicated region
  $region18: #{transformer_encoder.1} parent=0 // pred_check
    _
  $region19: #{transformer_encoder.1} parent=0 // pred_check_branch
    %27 = sbr.rel (0) target = $region21
  $region20: #{transformer_encoder.1} parent=0 // pred_region
    _
  $region21: #{transformer_encoder.1} parent=0 // pred_fallthru
    _
  // Predicated region
  $region22: #{transformer_encoder.1} parent=0 // pred_check
    _
  $region23: #{transformer_encoder.1} parent=0 // pred_check_branch
    %29 = sbr.rel (0) target = $region25
  $region24: #{transformer_encoder.1} parent=0 // pred_region
    _
  $region25: #{transformer_encoder.1} parent=0 // pred_fallthru
    _
  // Predicated region
  $region26: #{transformer_encoder.1} parent=0 // pred_check
    _
  $region27: #{transformer_encoder.1} parent=0 // pred_check_branch
    %31 = sbr.rel (0) target = $region29
  $region28: #{transformer_encoder.1} parent=0 // pred_region
    _
  $region29: #{transformer_encoder.1} parent=0 // pred_fallthru
    _
  // Predicated region
  $region30: #{transformer_encoder.1} parent=0 // pred_check
    _
  $region31: #{transformer_encoder.1} parent=0 // pred_check_branch
    %33 = sbr.rel (0) target = $region33
  $region32: #{transformer_encoder.1} parent=0 // pred_region
    _
  $region33: #{transformer_encoder.1} parent=0 // pred_fallthru
    _
  // Predicated region
  $region34: #{transformer_encoder.1} parent=0 // pred_check
    _
  $region35: #{transformer_encoder.1} parent=0 // pred_check_branch
    %35 = sbr.rel (0) target = $region37
  $region36: #{transformer_encoder.1} parent=0 // pred_region
    _
  $region37: #{transformer_encoder.1} parent=0 // pred_fallthru
    _
  // Predicated region
  $region38: #{transformer_encoder.1} parent=0 // pred_check
    _
  $region39: #{transformer_encoder.1} parent=0 // pred_check_branch
    %37 = sbr.rel (0) target = $region41
  $region40: #{transformer_encoder.1} parent=0 // pred_region
    _
  $region41: #{transformer_encoder.1} parent=0 // pred_fallthru
    _
  // Predicated region
  $region42: #{transformer_encoder.1} parent=0 // pred_check
    _
  $region43: #{transformer_encoder.1} parent=0 // pred_check_branch
    %39 = sbr.rel (0) target = $region45
  $region44: #{transformer_encoder.1} parent=0 // pred_region
    _
  $region45: #{transformer_encoder.1} parent=0 // pred_fallthru
    _
  // Predicated region
  $region46: #{transformer_encoder.1} parent=0 // pred_check
    _
  $region47: #{transformer_encoder.1} parent=0 // pred_check_branch
    %41 = sbr.rel (0) target = $region49
  $region48: #{transformer_encoder.1} parent=0 // pred_region
    _
  $region49: #{transformer_encoder.1} parent=0 // pred_fallthru
    _
  // Predicated region
  $region50: #{transformer_encoder.1} parent=0 // pred_check
    _
  $region51: #{transformer_encoder.1} parent=0 // pred_check_branch
    %43 = sbr.rel (0) target = $region53
  $region52: #{transformer_encoder.1} parent=0 // pred_region
    _
  $region53: #{transformer_encoder.1} parent=0 // pred_fallthru
    _
  %v44 = vld [vmem:[%s0] sm:$0xff]
  %v45 = vld [vmem:[%s0 + $0x8] sm:$0xff]
  %v46 = vld [vmem:[%s1] sm:$0xff]
  %v47 = vld [vmem:[%s1 + $0x8] sm:$0xff]
  %v48 = vld [vmem:[%s1 + $0x10] sm:$0xff]
  %v49 = vld [vmem:[%s1 + $0x18] sm:$0xff]
  %v50 = vld [vmem:[%s2] sm:$0x1]
  %v52 = vlaneseq
  %v53 = vshrl.u32 %v52, 7
  %v54 = vsub.s32 0, %v53
  %v55 = vrot.slane %v50, %v54
  %vm57 = vcmask 261120
  %v59 = vsel %vm57, %v44, 0
  %v62 = vsel %vm57, %v45, 0
  %64 = vmatprep.subr.mxu0 0.0
  %65 = vmatpush1.msra.mxu0 0.0
  %66 = vmatprep.subr.mxu0 0.0
  %67 = vmatpush1.msra.mxu0 0.0
  %68 = vmatprep.subr.mxu0 0.0
  %69 = vmatpush1.msra.mxu0 0.0
  %70 = vmatprep.subr.mxu0 0.0
  %71 = vmatpush1.msra.mxu0 0.0
  %72 = vmatprep.subr.mxu0 0.0
  %73 = vmatpush1.msra.mxu0 0.0
  %74 = vmatprep.subr.mxu0 0.0
  %75 = vmatpush1.msra.mxu0 0.0
  %76 = vmatprep.subr.mxu0 0.0
  %77 = vmatpush1.msra.mxu0 0.0
  %78 = vmatprep.subr.mxu0 0.0
  %79 = vmatpush1.msra.mxu0 0.0
  %80 = vmatprep.subr.mxu0 0.0
  %81 = vmatpush1.msra.mxu0 0.0
  %82 = vmatprep.subr.mxu0 0.0
  %83 = vmatpush1.msra.mxu0 0.0
  %84 = vmatprep.subr.mxu0 0.0
  %85 = vmatpush1.msra.mxu0 0.0
  %86 = vmatprep.subr.mxu0 0.0
  %87 = vmatpush1.msra.mxu0 0.0
  %88 = vmatprep.subr.mxu0 0.0
  %89 = vmatpush1.msra.mxu0 %v49
  %90 = vmatprep.subr.mxu0 0.0
  %91 = vmatpush1.msra.mxu0 %v48
  %92 = vmatprep.subr.mxu0 0.0
  %93 = vmatpush1.msra.mxu0 %v47
  %94 = vmatprep.subr.mxu0 0.0
  %95 = vmatpush1.msra.mxu0 %v46
  %96 = vmatprep.subr.mxu0 0.0
  %97 = vmatpush2.msra.mxu0 0.0
  %98 = vmatprep.subr.mxu0 0.0
  %99 = vmatpush2.msra.mxu0 0.0
  %100 = vmatprep.subr.mxu0 0.0
  %101 = vmatpush2.msra.mxu0 0.0
  %102 = vmatprep.subr.mxu0 0.0
  %103 = vmatpush2.msra.mxu0 0.0
  %104 = vmatprep.subr.mxu0 0.0
  %105 = vmatpush2.msra.mxu0 0.0
  %106 = vmatprep.subr.mxu0 0.0
  %107 = vmatpush2.msra.mxu0 0.0
  %108 = vmatprep.subr.mxu0 0.0
  %109 = vmatpush2.msra.mxu0 0.0
  %110 = vmatprep.subr.mxu0 0.0
  %111 = vmatpush2.msra.mxu0 0.0
  %112 = vmatprep.subr.mxu0 0.0
  %113 = vmatpush2.msra.mxu0 0.0
  %114 = vmatprep.subr.mxu0 0.0
  %115 = vmatpush2.msra.mxu0 0.0
  %116 = vmatprep.subr.mxu0 0.0
  %117 = vmatpush2.msra.mxu0 0.0
  %118 = vmatprep.subr.mxu0 0.0
  %119 = vmatpush2.msra.mxu0 0.0
  %120 = vmatprep.subr.mxu0 0.0
  %121 = vmatpush2.msra.mxu0 0.0
  %122 = vmatprep.subr.mxu0 0.0
  %123 = vmatpush2.msra.mxu0 0.0
  %124 = vmatprep.subr.mxu0 0.0
  %125 = vmatpush2.msra.mxu0 0.0
  %126 = vmatprep.subr.mxu0 0.0
  %127 = vmatpush2.msra.mxu0 0.0
  %128 = vmatprep.mubr.f32.mxu0 0.0
  %129 = vmatmul.mubr.f32.gmra.mxu0 %v59
  %v130 = vpop.f32.mrf.mxu0
  %v131 = vadd.f32 %v55, %v130
  %v132 = vpop.f32.mrf.mxu0
  %133 = vmatprep.mubr.f32.mxu0 0.0
  %134 = vmatmul.mubr.f32.gmra.mxu0 %v62
  %v135 = vpop.f32.mrf.mxu0
  %v136 = vadd.f32 %v55, %v135
  %v137 = vpop.f32.mrf.mxu0
  %138 = vdwg.mxu0
  %141 = vrot.lane.b32.xlu0 %v131, 120
  %v142 = vpop.permute.xlu0 %141
  %143 = vrot.lane.b32.xlu0 %v136, 120
  %v144 = vpop.permute.xlu0 %143
  %145 = vrot.lane.b32.xlu0 %v131, 112
  %v146 = vpop.permute.xlu0 %145
  %147 = vrot.lane.b32.xlu0 %v136, 112
  %v148 = vpop.permute.xlu0 %147
  %149 = vrot.lane.b32.xlu0 %v131, 104
  %v150 = vpop.permute.xlu0 %149
  %151 = vrot.lane.b32.xlu0 %v136, 104
  %v152 = vpop.permute.xlu0 %151
  %153 = vrot.lane.b32.xlu0 %v131, 96
  %v154 = vpop.permute.xlu0 %153
  %vm155 = vcmask 64512
  %v156 = vsel %vm155, %v131, 0
  %v158 = vsel %vm155, %v154, 0
  %160 = vmatprep.subr.mxu0 0.0
  %161 = vmatpush1.xpose.msra.mxu0 0.0
  %162 = vmatprep.subr.mxu0 0.0
  %163 = vmatpush1.xpose.msra.mxu0 0.0
  %164 = vmatprep.subr.mxu0 0.0
  %165 = vmatpush1.xpose.msra.mxu0 0.0
  %166 = vmatprep.subr.mxu0 0.0
  %167 = vmatpush1.xpose.msra.mxu0 0.0
  %168 = vmatprep.subr.mxu0 0.0
  %169 = vmatpush1.xpose.msra.mxu0 0.0
  %170 = vmatprep.subr.mxu0 0.0
  %171 = vmatpush1.xpose.msra.mxu0 0.0
  %172 = vmatprep.subr.mxu0 0.0
  %173 = vmatpush1.xpose.msra.mxu0 0.0
  %174 = vmatprep.subr.mxu0 0.0
  %175 = vmatpush1.xpose.msra.mxu0 0.0
  %176 = vmatprep.subr.mxu0 0.0
  %177 = vmatpush1.xpose.msra.mxu0 0.0
  %178 = vmatprep.subr.mxu0 0.0
  %179 = vmatpush1.xpose.msra.mxu0 0.0
  %180 = vmatprep.subr.mxu0 0.0
  %181 = vmatpush1.xpose.msra.mxu0 0.0
  %182 = vmatprep.subr.mxu0 0.0
  %183 = vmatpush1.xpose.msra.mxu0 0.0
  %184 = vmatprep.subr.mxu0 0.0
  %185 = vmatpush1.xpose.msra.mxu0 0.0
  %186 = vmatprep.subr.mxu0 0.0
  %187 = vmatpush1.xpose.msra.mxu0 0.0
  %188 = vmatprep.subr.mxu0 0.0
  %189 = vmatpush1.xpose.msra.mxu0 0.0
  %190 = vmatprep.subr.mxu0 0.0
  %191 = vmatpush1.xpose.msra.mxu0 %v158
  %192 = vmatprep.subr.mxu0 0.0
  %193 = vmatpush2.xpose.msra.mxu0 0.0
  %194 = vmatprep.subr.mxu0 0.0
  %195 = vmatpush2.xpose.msra.mxu0 0.0
  %196 = vmatprep.subr.mxu0 0.0
  %197 = vmatpush2.xpose.msra.mxu0 0.0
  %198 = vmatprep.subr.mxu0 0.0
  %199 = vmatpush2.xpose.msra.mxu0 0.0
  %200 = vmatprep.subr.mxu0 0.0
  %201 = vmatpush2.xpose.msra.mxu0 0.0
  %202 = vmatprep.subr.mxu0 0.0
  %203 = vmatpush2.xpose.msra.mxu0 0.0
  %204 = vmatprep.subr.mxu0 0.0
  %205 = vmatpush2.xpose.msra.mxu0 0.0
  %206 = vmatprep.subr.mxu0 0.0
  %207 = vmatpush2.xpose.msra.mxu0 0.0
  %208 = vmatprep.subr.mxu0 0.0
  %209 = vmatpush2.xpose.msra.mxu0 0.0
  %210 = vmatprep.subr.mxu0 0.0
  %211 = vmatpush2.xpose.msra.mxu0 0.0
  %212 = vmatprep.subr.mxu0 0.0
  %213 = vmatpush2.xpose.msra.mxu0 0.0
  %214 = vmatprep.subr.mxu0 0.0
  %215 = vmatpush2.xpose.msra.mxu0 0.0
  %216 = vmatprep.subr.mxu0 0.0
  %217 = vmatpush2.xpose.msra.mxu0 0.0
  %218 = vmatprep.subr.mxu0 0.0
  %219 = vmatpush2.xpose.msra.mxu0 0.0
  %220 = vmatprep.subr.mxu0 0.0
  %221 = vmatpush2.xpose.msra.mxu0 0.0
  %222 = vmatprep.subr.mxu0 0.0
  %223 = vmatpush2.xpose.msra.mxu0 0.0
  %224 = vmatprep.mubr.f32.mxu0 0.0
  %225 = vmatmul.mubr.f32.gmra.mxu0 %v156
  %v226 = vpop.f32.mrf.mxu0
  %v227 = vadd.f32 0.0, %v226
  %v228 = vpop.f32.mrf.mxu0
  %229 = vdwg.mxu0
  %230 = vrot.lane.b32.xlu0 %v136, 96
  %v231 = vpop.permute.xlu0 %230
  %v232 = vsel %vm155, %v136, 0
  %v234 = vsel %vm155, %v231, 0
  %236 = vmatprep.subr.mxu0 0.0
  %237 = vmatpush1.xpose.msra.mxu0 0.0
  %238 = vmatprep.subr.mxu0 0.0
  %239 = vmatpush1.xpose.msra.mxu0 0.0
  %240 = vmatprep.subr.mxu0 0.0
  %241 = vmatpush1.xpose.msra.mxu0 0.0
  %242 = vmatprep.subr.mxu0 0.0
  %243 = vmatpush1.xpose.msra.mxu0 0.0
  %244 = vmatprep.subr.mxu0 0.0
  %245 = vmatpush1.xpose.msra.mxu0 0.0
  %246 = vmatprep.subr.mxu0 0.0
  %247 = vmatpush1.xpose.msra.mxu0 0.0
  %248 = vmatprep.subr.mxu0 0.0
  %249 = vmatpush1.xpose.msra.mxu0 0.0
  %250 = vmatprep.subr.mxu0 0.0
  %251 = vmatpush1.xpose.msra.mxu0 0.0
  %252 = vmatprep.subr.mxu0 0.0
  %253 = vmatpush1.xpose.msra.mxu0 0.0
  %254 = vmatprep.subr.mxu0 0.0
  %255 = vmatpush1.xpose.msra.mxu0 0.0
  %256 = vmatprep.subr.mxu0 0.0
  %257 = vmatpush1.xpose.msra.mxu0 0.0
  %258 = vmatprep.subr.mxu0 0.0
  %259 = vmatpush1.xpose.msra.mxu0 0.0
  %260 = vmatprep.subr.mxu0 0.0
  %261 = vmatpush1.xpose.msra.mxu0 0.0
  %262 = vmatprep.subr.mxu0 0.0
  %263 = vmatpush1.xpose.msra.mxu0 0.0
  %264 = vmatprep.subr.mxu0 0.0
  %265 = vmatpush1.xpose.msra.mxu0 0.0
  %266 = vmatprep.subr.mxu0 0.0
  %267 = vmatpush1.xpose.msra.mxu0 %v234
  %268 = vmatprep.subr.mxu0 0.0
  %269 = vmatpush2.xpose.msra.mxu0 0.0
  %270 = vmatprep.subr.mxu0 0.0
  %271 = vmatpush2.xpose.msra.mxu0 0.0
  %272 = vmatprep.subr.mxu0 0.0
  %273 = vmatpush2.xpose.msra.mxu0 0.0
  %274 = vmatprep.subr.mxu0 0.0
  %275 = vmatpush2.xpose.msra.mxu0 0.0
  %276 = vmatprep.subr.mxu0 0.0
  %277 = vmatpush2.xpose.msra.mxu0 0.0
  %278 = vmatprep.subr.mxu0 0.0
  %279 = vmatpush2.xpose.msra.mxu0 0.0
  %280 = vmatprep.subr.mxu0 0.0
  %281 = vmatpush2.xpose.msra.mxu0 0.0
  %282 = vmatprep.subr.mxu0 0.0
  %283 = vmatpush2.xpose.msra.mxu0 0.0
  %284 = vmatprep.subr.mxu0 0.0
  %285 = vmatpush2.xpose.msra.mxu0 0.0
  %286 = vmatprep.subr.mxu0 0.0
  %287 = vmatpush2.xpose.msra.mxu0 0.0
  %288 = vmatprep.subr.mxu0 0.0
  %289 = vmatpush2.xpose.msra.mxu0 0.0
  %290 = vmatprep.subr.mxu0 0.0
  %291 = vmatpush2.xpose.msra.mxu0 0.0
  %292 = vmatprep.subr.mxu0 0.0
  %293 = vmatpush2.xpose.msra.mxu0 0.0
  %294 = vmatprep.subr.mxu0 0.0
  %295 = vmatpush2.xpose.msra.mxu0 0.0
  %296 = vmatprep.subr.mxu0 0.0
  %297 = vmatpush2.xpose.msra.mxu0 0.0
  %298 = vmatprep.subr.mxu0 0.0
  %299 = vmatpush2.xpose.msra.mxu0 0.0
  %300 = vmatprep.mubr.f32.mxu0 0.0
  %301 = vmatmul.mubr.f32.gmra.mxu0 %v232
  %v302 = vpop.f32.mrf.mxu0
  %v303 = vadd.f32 0.0, %v302
  %v304 = vpop.f32.mrf.mxu0
  %305 = vdwg.mxu0
  %306 = vrot.lane.b32.xlu0 %v142, 96
  %v307 = vpop.permute.xlu0 %306
  %v308 = vsel %vm155, %v142, 0
  %v310 = vsel %vm155, %v307, 0
  %312 = vmatprep.subr.mxu0 0.0
  %313 = vmatpush1.xpose.msra.mxu0 0.0
  %314 = vmatprep.subr.mxu0 0.0
  %315 = vmatpush1.xpose.msra.mxu0 0.0
  %316 = vmatprep.subr.mxu0 0.0
  %317 = vmatpush1.xpose.msra.mxu0 0.0
  %318 = vmatprep.subr.mxu0 0.0
  %319 = vmatpush1.xpose.msra.mxu0 0.0
  %320 = vmatprep.subr.mxu0 0.0
  %321 = vmatpush1.xpose.msra.mxu0 0.0
  %322 = vmatprep.subr.mxu0 0.0
  %323 = vmatpush1.xpose.msra.mxu0 0.0
  %324 = vmatprep.subr.mxu0 0.0
  %325 = vmatpush1.xpose.msra.mxu0 0.0
  %326 = vmatprep.subr.mxu0 0.0
  %327 = vmatpush1.xpose.msra.mxu0 0.0
  %328 = vmatprep.subr.mxu0 0.0
  %329 = vmatpush1.xpose.msra.mxu0 0.0
  %330 = vmatprep.subr.mxu0 0.0
  %331 = vmatpush1.xpose.msra.mxu0 0.0
  %332 = vmatprep.subr.mxu0 0.0
  %333 = vmatpush1.xpose.msra.mxu0 0.0
  %334 = vmatprep.subr.mxu0 0.0
  %335 = vmatpush1.xpose.msra.mxu0 0.0
  %336 = vmatprep.subr.mxu0 0.0
  %337 = vmatpush1.xpose.msra.mxu0 0.0
  %338 = vmatprep.subr.mxu0 0.0
  %339 = vmatpush1.xpose.msra.mxu0 0.0
  %340 = vmatprep.subr.mxu0 0.0
  %341 = vmatpush1.xpose.msra.mxu0 0.0
  %342 = vmatprep.subr.mxu0 0.0
  %343 = vmatpush1.xpose.msra.mxu0 %v310
  %344 = vmatprep.subr.mxu0 0.0
  %345 = vmatpush2.xpose.msra.mxu0 0.0
  %346 = vmatprep.subr.mxu0 0.0
  %347 = vmatpush2.xpose.msra.mxu0 0.0
  %348 = vmatprep.subr.mxu0 0.0
  %349 = vmatpush2.xpose.msra.mxu0 0.0
  %350 = vmatprep.subr.mxu0 0.0
  %351 = vmatpush2.xpose.msra.mxu0 0.0
  %352 = vmatprep.subr.mxu0 0.0
  %353 = vmatpush2.xpose.msra.mxu0 0.0
  %354 = vmatprep.subr.mxu0 0.0
  %355 = vmatpush2.xpose.msra.mxu0 0.0
  %356 = vmatprep.subr.mxu0 0.0
  %357 = vmatpush2.xpose.msra.mxu0 0.0
  %358 = vmatprep.subr.mxu0 0.0
  %359 = vmatpush2.xpose.msra.mxu0 0.0
  %360 = vmatprep.subr.mxu0 0.0
  %361 = vmatpush2.xpose.msra.mxu0 0.0
  %362 = vmatprep.subr.mxu0 0.0
  %363 = vmatpush2.xpose.msra.mxu0 0.0
  %364 = vmatprep.subr.mxu0 0.0
  %365 = vmatpush2.xpose.msra.mxu0 0.0
  %366 = vmatprep.subr.mxu0 0.0
  %367 = vmatpush2.xpose.msra.mxu0 0.0
  %368 = vmatprep.subr.mxu0 0.0
  %369 = vmatpush2.xpose.msra.mxu0 0.0
  %370 = vmatprep.subr.mxu0 0.0
  %371 = vmatpush2.xpose.msra.mxu0 0.0
  %372 = vmatprep.subr.mxu0 0.0
  %373 = vmatpush2.xpose.msra.mxu0 0.0
  %374 = vmatprep.subr.mxu0 0.0
  %375 = vmatpush2.xpose.msra.mxu0 0.0
  %376 = vmatprep.mubr.f32.mxu0 0.0
  %377 = vmatmul.mubr.f32.gmra.mxu0 %v308
  %v378 = vpop.f32.mrf.mxu0
  %v379 = vadd.f32 0.0, %v378
  %v380 = vpop.f32.mrf.mxu0
  %381 = vdwg.mxu0
  %382 = vrot.lane.b32.xlu0 %v144, 96
  %v383 = vpop.permute.xlu0 %382
  %v384 = vsel %vm155, %v144, 0
  %v386 = vsel %vm155, %v383, 0
  %388 = vmatprep.subr.mxu0 0.0
  %389 = vmatpush1.xpose.msra.mxu0 0.0
  %390 = vmatprep.subr.mxu0 0.0
  %391 = vmatpush1.xpose.msra.mxu0 0.0
  %392 = vmatprep.subr.mxu0 0.0
  %393 = vmatpush1.xpose.msra.mxu0 0.0
  %394 = vmatprep.subr.mxu0 0.0
  %395 = vmatpush1.xpose.msra.mxu0 0.0
  %396 = vmatprep.subr.mxu0 0.0
  %397 = vmatpush1.xpose.msra.mxu0 0.0
  %398 = vmatprep.subr.mxu0 0.0
  %399 = vmatpush1.xpose.msra.mxu0 0.0
  %400 = vmatprep.subr.mxu0 0.0
  %401 = vmatpush1.xpose.msra.mxu0 0.0
  %402 = vmatprep.subr.mxu0 0.0
  %403 = vmatpush1.xpose.msra.mxu0 0.0
  %404 = vmatprep.subr.mxu0 0.0
  %405 = vmatpush1.xpose.msra.mxu0 0.0
  %406 = vmatprep.subr.mxu0 0.0
  %407 = vmatpush1.xpose.msra.mxu0 0.0
  %408 = vmatprep.subr.mxu0 0.0
  %409 = vmatpush1.xpose.msra.mxu0 0.0
  %410 = vmatprep.subr.mxu0 0.0
  %411 = vmatpush1.xpose.msra.mxu0 0.0
  %412 = vmatprep.subr.mxu0 0.0
  %413 = vmatpush1.xpose.msra.mxu0 0.0
  %414 = vmatprep.subr.mxu0 0.0
  %415 = vmatpush1.xpose.msra.mxu0 0.0
  %416 = vmatprep.subr.mxu0 0.0
  %417 = vmatpush1.xpose.msra.mxu0 0.0
  %418 = vmatprep.subr.mxu0 0.0
  %419 = vmatpush1.xpose.msra.mxu0 %v386
  %420 = vmatprep.subr.mxu0 0.0
  %421 = vmatpush2.xpose.msra.mxu0 0.0
  %422 = vmatprep.subr.mxu0 0.0
  %423 = vmatpush2.xpose.msra.mxu0 0.0
  %424 = vmatprep.subr.mxu0 0.0
  %425 = vmatpush2.xpose.msra.mxu0 0.0
  %426 = vmatprep.subr.mxu0 0.0
  %427 = vmatpush2.xpose.msra.mxu0 0.0
  %428 = vmatprep.subr.mxu0 0.0
  %429 = vmatpush2.xpose.msra.mxu0 0.0
  %430 = vmatprep.subr.mxu0 0.0
  %431 = vmatpush2.xpose.msra.mxu0 0.0
  %432 = vmatprep.subr.mxu0 0.0
  %433 = vmatpush2.xpose.msra.mxu0 0.0
  %434 = vmatprep.subr.mxu0 0.0
  %435 = vmatpush2.xpose.msra.mxu0 0.0
  %436 = vmatprep.subr.mxu0 0.0
  %437 = vmatpush2.xpose.msra.mxu0 0.0
  %438 = vmatprep.subr.mxu0 0.0
  %439 = vmatpush2.xpose.msra.mxu0 0.0
  %440 = vmatprep.subr.mxu0 0.0
  %441 = vmatpush2.xpose.msra.mxu0 0.0
  %442 = vmatprep.subr.mxu0 0.0
  %443 = vmatpush2.xpose.msra.mxu0 0.0
  %444 = vmatprep.subr.mxu0 0.0
  %445 = vmatpush2.xpose.msra.mxu0 0.0
  %446 = vmatprep.subr.mxu0 0.0
  %447 = vmatpush2.xpose.msra.mxu0 0.0
  %448 = vmatprep.subr.mxu0 0.0
  %449 = vmatpush2.xpose.msra.mxu0 0.0
  %450 = vmatprep.subr.mxu0 0.0
  %451 = vmatpush2.xpose.msra.mxu0 0.0
  %452 = vmatprep.mubr.f32.mxu0 0.0
  %453 = vmatmul.mubr.f32.gmra.mxu0 %v384
  %v454 = vpop.f32.mrf.mxu0
  %v455 = vadd.f32 0.0, %v454
  %v456 = vpop.f32.mrf.mxu0
  %457 = vdwg.mxu0
  %458 = vrot.lane.b32.xlu0 %v146, 96
  %v459 = vpop.permute.xlu0 %458
  %v460 = vsel %vm155, %v146, 0
  %v462 = vsel %vm155, %v459, 0
  %464 = vmatprep.subr.mxu0 0.0
  %465 = vmatpush1.xpose.msra.mxu0 0.0
  %466 = vmatprep.subr.mxu0 0.0
  %467 = vmatpush1.xpose.msra.mxu0 0.0
  %468 = vmatprep.subr.mxu0 0.0
  %469 = vmatpush1.xpose.msra.mxu0 0.0
  %470 = vmatprep.subr.mxu0 0.0
  %471 = vmatpush1.xpose.msra.mxu0 0.0
  %472 = vmatprep.subr.mxu0 0.0
  %473 = vmatpush1.xpose.msra.mxu0 0.0
  %474 = vmatprep.subr.mxu0 0.0
  %475 = vmatpush1.xpose.msra.mxu0 0.0
  %476 = vmatprep.subr.mxu0 0.0
  %477 = vmatpush1.xpose.msra.mxu0 0.0
  %478 = vmatprep.subr.mxu0 0.0
  %479 = vmatpush1.xpose.msra.mxu0 0.0
  %480 = vmatprep.subr.mxu0 0.0
  %481 = vmatpush1.xpose.msra.mxu0 0.0
  %482 = vmatprep.subr.mxu0 0.0
  %483 = vmatpush1.xpose.msra.mxu0 0.0
  %484 = vmatprep.subr.mxu0 0.0
  %485 = vmatpush1.xpose.msra.mxu0 0.0
  %486 = vmatprep.subr.mxu0 0.0
  %487 = vmatpush1.xpose.msra.mxu0 0.0
  %488 = vmatprep.subr.mxu0 0.0
  %489 = vmatpush1.xpose.msra.mxu0 0.0
  %490 = vmatprep.subr.mxu0 0.0
  %491 = vmatpush1.xpose.msra.mxu0 0.0
  %492 = vmatprep.subr.mxu0 0.0
  %493 = vmatpush1.xpose.msra.mxu0 0.0
  %494 = vmatprep.subr.mxu0 0.0
  %495 = vmatpush1.xpose.msra.mxu0 %v462
  %496 = vmatprep.subr.mxu0 0.0
  %497 = vmatpush2.xpose.msra.mxu0 0.0
  %498 = vmatprep.subr.mxu0 0.0
  %499 = vmatpush2.xpose.msra.mxu0 0.0
  %500 = vmatprep.subr.mxu0 0.0
  %501 = vmatpush2.xpose.msra.mxu0 0.0
  %502 = vmatprep.subr.mxu0 0.0
  %503 = vmatpush2.xpose.msra.mxu0 0.0
  %504 = vmatprep.subr.mxu0 0.0
  %505 = vmatpush2.xpose.msra.mxu0 0.0
  %506 = vmatprep.subr.mxu0 0.0
  %507 = vmatpush2.xpose.msra.mxu0 0.0
  %508 = vmatprep.subr.mxu0 0.0
  %509 = vmatpush2.xpose.msra.mxu0 0.0
  %510 = vmatprep.subr.mxu0 0.0
  %511 = vmatpush2.xpose.msra.mxu0 0.0
  %512 = vmatprep.subr.mxu0 0.0
  %513 = vmatpush2.xpose.msra.mxu0 0.0
  %514 = vmatprep.subr.mxu0 0.0
  %515 = vmatpush2.xpose.msra.mxu0 0.0
  %516 = vmatprep.subr.mxu0 0.0
  %517 = vmatpush2.xpose.msra.mxu0 0.0
  %518 = vmatprep.subr.mxu0 0.0
  %519 = vmatpush2.xpose.msra.mxu0 0.0
  %520 = vmatprep.subr.mxu0 0.0
  %521 = vmatpush2.xpose.msra.mxu0 0.0
  %522 = vmatprep.subr.mxu0 0.0
  %523 = vmatpush2.xpose.msra.mxu0 0.0
  %524 = vmatprep.subr.mxu0 0.0
  %525 = vmatpush2.xpose.msra.mxu0 0.0
  %526 = vmatprep.subr.mxu0 0.0
  %527 = vmatpush2.xpose.msra.mxu0 0.0
  %528 = vmatprep.mubr.f32.mxu0 0.0
  %529 = vmatmul.mubr.f32.gmra.mxu0 %v460
  %v530 = vpop.f32.mrf.mxu0
  %v531 = vadd.f32 0.0, %v530
  %v532 = vpop.f32.mrf.mxu0
  %533 = vdwg.mxu0
  %534 = vrot.lane.b32.xlu0 %v148, 96
  %v535 = vpop.permute.xlu0 %534
  %v536 = vsel %vm155, %v148, 0
  %v538 = vsel %vm155, %v535, 0
  %540 = vmatprep.subr.mxu0 0.0
  %541 = vmatpush1.xpose.msra.mxu0 0.0
  %542 = vmatprep.subr.mxu0 0.0
  %543 = vmatpush1.xpose.msra.mxu0 0.0
  %544 = vmatprep.subr.mxu0 0.0
  %545 = vmatpush1.xpose.msra.mxu0 0.0
  %546 = vmatprep.subr.mxu0 0.0
  %547 = vmatpush1.xpose.msra.mxu0 0.0
  %548 = vmatprep.subr.mxu0 0.0
  %549 = vmatpush1.xpose.msra.mxu0 0.0
  %550 = vmatprep.subr.mxu0 0.0
  %551 = vmatpush1.xpose.msra.mxu0 0.0
  %552 = vmatprep.subr.mxu0 0.0
  %553 = vmatpush1.xpose.msra.mxu0 0.0
  %554 = vmatprep.subr.mxu0 0.0
  %555 = vmatpush1.xpose.msra.mxu0 0.0
  %556 = vmatprep.subr.mxu0 0.0
  %557 = vmatpush1.xpose.msra.mxu0 0.0
  %558 = vmatprep.subr.mxu0 0.0
  %559 = vmatpush1.xpose.msra.mxu0 0.0
  %560 = vmatprep.subr.mxu0 0.0
  %561 = vmatpush1.xpose.msra.mxu0 0.0
  %562 = vmatprep.subr.mxu0 0.0
  %563 = vmatpush1.xpose.msra.mxu0 0.0
  %564 = vmatprep.subr.mxu0 0.0
  %565 = vmatpush1.xpose.msra.mxu0 0.0
  %566 = vmatprep.subr.mxu0 0.0
  %567 = vmatpush1.xpose.msra.mxu0 0.0
  %568 = vmatprep.subr.mxu0 0.0
  %569 = vmatpush1.xpose.msra.mxu0 0.0
  %570 = vmatprep.subr.mxu0 0.0
  %571 = vmatpush1.xpose.msra.mxu0 %v538
  %572 = vmatprep.subr.mxu0 0.0
  %573 = vmatpush2.xpose.msra.mxu0 0.0
  %574 = vmatprep.subr.mxu0 0.0
  %575 = vmatpush2.xpose.msra.mxu0 0.0
  %576 = vmatprep.subr.mxu0 0.0
  %577 = vmatpush2.xpose.msra.mxu0 0.0
  %578 = vmatprep.subr.mxu0 0.0
  %579 = vmatpush2.xpose.msra.mxu0 0.0
  %580 = vmatprep.subr.mxu0 0.0
  %581 = vmatpush2.xpose.msra.mxu0 0.0
  %582 = vmatprep.subr.mxu0 0.0
  %583 = vmatpush2.xpose.msra.mxu0 0.0
  %584 = vmatprep.subr.mxu0 0.0
  %585 = vmatpush2.xpose.msra.mxu0 0.0
  %586 = vmatprep.subr.mxu0 0.0
  %587 = vmatpush2.xpose.msra.mxu0 0.0
  %588 = vmatprep.subr.mxu0 0.0
  %589 = vmatpush2.xpose.msra.mxu0 0.0
  %590 = vmatprep.subr.mxu0 0.0
  %591 = vmatpush2.xpose.msra.mxu0 0.0
  %592 = vmatprep.subr.mxu0 0.0
  %593 = vmatpush2.xpose.msra.mxu0 0.0
  %594 = vmatprep.subr.mxu0 0.0
  %595 = vmatpush2.xpose.msra.mxu0 0.0
  %596 = vmatprep.subr.mxu0 0.0
  %597 = vmatpush2.xpose.msra.mxu0 0.0
  %598 = vmatprep.subr.mxu0 0.0
  %599 = vmatpush2.xpose.msra.mxu0 0.0
  %600 = vmatprep.subr.mxu0 0.0
  %601 = vmatpush2.xpose.msra.mxu0 0.0
  %602 = vmatprep.subr.mxu0 0.0
  %603 = vmatpush2.xpose.msra.mxu0 0.0
  %604 = vmatprep.mubr.f32.mxu0 0.0
  %605 = vmatmul.mubr.f32.gmra.mxu0 %v536
  %v606 = vpop.f32.mrf.mxu0
  %v607 = vadd.f32 0.0, %v606
  %v608 = vpop.f32.mrf.mxu0
  %609 = vdwg.mxu0
  %610 = vrot.lane.b32.xlu0 %v150, 96
  %v611 = vpop.permute.xlu0 %610
  %v612 = vsel %vm155, %v150, 0
  %v614 = vsel %vm155, %v611, 0
  %616 = vmatprep.subr.mxu0 0.0
  %617 = vmatpush1.xpose.msra.mxu0 0.0
  %618 = vmatprep.subr.mxu0 0.0
  %619 = vmatpush1.xpose.msra.mxu0 0.0
  %620 = vmatprep.subr.mxu0 0.0
  %621 = vmatpush1.xpose.msra.mxu0 0.0
  %622 = vmatprep.subr.mxu0 0.0
  %623 = vmatpush1.xpose.msra.mxu0 0.0
  %624 = vmatprep.subr.mxu0 0.0
  %625 = vmatpush1.xpose.msra.mxu0 0.0
  %626 = vmatprep.subr.mxu0 0.0
  %627 = vmatpush1.xpose.msra.mxu0 0.0
  %628 = vmatprep.subr.mxu0 0.0
  %629 = vmatpush1.xpose.msra.mxu0 0.0
  %630 = vmatprep.subr.mxu0 0.0
  %631 = vmatpush1.xpose.msra.mxu0 0.0
  %632 = vmatprep.subr.mxu0 0.0
  %633 = vmatpush1.xpose.msra.mxu0 0.0
  %634 = vmatprep.subr.mxu0 0.0
  %635 = vmatpush1.xpose.msra.mxu0 0.0
  %636 = vmatprep.subr.mxu0 0.0
  %637 = vmatpush1.xpose.msra.mxu0 0.0
  %638 = vmatprep.subr.mxu0 0.0
  %639 = vmatpush1.xpose.msra.mxu0 0.0
  %640 = vmatprep.subr.mxu0 0.0
  %641 = vmatpush1.xpose.msra.mxu0 0.0
  %642 = vmatprep.subr.mxu0 0.0
  %643 = vmatpush1.xpose.msra.mxu0 0.0
  %644 = vmatprep.subr.mxu0 0.0
  %645 = vmatpush1.xpose.msra.mxu0 0.0
  %646 = vmatprep.subr.mxu0 0.0
  %647 = vmatpush1.xpose.msra.mxu0 %v614
  %648 = vmatprep.subr.mxu0 0.0
  %649 = vmatpush2.xpose.msra.mxu0 0.0
  %650 = vmatprep.subr.mxu0 0.0
  %651 = vmatpush2.xpose.msra.mxu0 0.0
  %652 = vmatprep.subr.mxu0 0.0
  %653 = vmatpush2.xpose.msra.mxu0 0.0
  %654 = vmatprep.subr.mxu0 0.0
  %655 = vmatpush2.xpose.msra.mxu0 0.0
  %656 = vmatprep.subr.mxu0 0.0
  %657 = vmatpush2.xpose.msra.mxu0 0.0
  %658 = vmatprep.subr.mxu0 0.0
  %659 = vmatpush2.xpose.msra.mxu0 0.0
  %660 = vmatprep.subr.mxu0 0.0
  %661 = vmatpush2.xpose.msra.mxu0 0.0
  %662 = vmatprep.subr.mxu0 0.0
  %663 = vmatpush2.xpose.msra.mxu0 0.0
  %664 = vmatprep.subr.mxu0 0.0
  %665 = vmatpush2.xpose.msra.mxu0 0.0
  %666 = vmatprep.subr.mxu0 0.0
  %667 = vmatpush2.xpose.msra.mxu0 0.0
  %668 = vmatprep.subr.mxu0 0.0
  %669 = vmatpush2.xpose.msra.mxu0 0.0
  %670 = vmatprep.subr.mxu0 0.0
  %671 = vmatpush2.xpose.msra.mxu0 0.0
  %672 = vmatprep.subr.mxu0 0.0
  %673 = vmatpush2.xpose.msra.mxu0 0.0
  %674 = vmatprep.subr.mxu0 0.0
  %675 = vmatpush2.xpose.msra.mxu0 0.0
  %676 = vmatprep.subr.mxu0 0.0
  %677 = vmatpush2.xpose.msra.mxu0 0.0
  %678 = vmatprep.subr.mxu0 0.0
  %679 = vmatpush2.xpose.msra.mxu0 0.0
  %680 = vmatprep.mubr.f32.mxu0 0.0
  %681 = vmatmul.mubr.f32.gmra.mxu0 %v612
  %v682 = vpop.f32.mrf.mxu0
  %v683 = vadd.f32 0.0, %v682
  %v684 = vpop.f32.mrf.mxu0
  %685 = vdwg.mxu0
  %686 = vrot.lane.b32.xlu0 %v152, 96
  %v687 = vpop.permute.xlu0 %686
  %v688 = vsel %vm155, %v152, 0
  %v690 = vsel %vm155, %v687, 0
  %692 = vmatprep.subr.mxu0 0.0
  %693 = vmatpush1.xpose.msra.mxu0 0.0
  %694 = vmatprep.subr.mxu0 0.0
  %695 = vmatpush1.xpose.msra.mxu0 0.0
  %696 = vmatprep.subr.mxu0 0.0
  %697 = vmatpush1.xpose.msra.mxu0 0.0
  %698 = vmatprep.subr.mxu0 0.0
  %699 = vmatpush1.xpose.msra.mxu0 0.0
  %700 = vmatprep.subr.mxu0 0.0
  %701 = vmatpush1.xpose.msra.mxu0 0.0
  %702 = vmatprep.subr.mxu0 0.0
  %703 = vmatpush1.xpose.msra.mxu0 0.0
  %704 = vmatprep.subr.mxu0 0.0
  %705 = vmatpush1.xpose.msra.mxu0 0.0
  %706 = vmatprep.subr.mxu0 0.0
  %707 = vmatpush1.xpose.msra.mxu0 0.0
  %708 = vmatprep.subr.mxu0 0.0
  %709 = vmatpush1.xpose.msra.mxu0 0.0
  %710 = vmatprep.subr.mxu0 0.0
  %711 = vmatpush1.xpose.msra.mxu0 0.0
  %712 = vmatprep.subr.mxu0 0.0
  %713 = vmatpush1.xpose.msra.mxu0 0.0
  %714 = vmatprep.subr.mxu0 0.0
  %715 = vmatpush1.xpose.msra.mxu0 0.0
  %716 = vmatprep.subr.mxu0 0.0
  %717 = vmatpush1.xpose.msra.mxu0 0.0
  %718 = vmatprep.subr.mxu0 0.0
  %719 = vmatpush1.xpose.msra.mxu0 0.0
  %720 = vmatprep.subr.mxu0 0.0
  %721 = vmatpush1.xpose.msra.mxu0 0.0
  %722 = vmatprep.subr.mxu0 0.0
  %723 = vmatpush1.xpose.msra.mxu0 %v690
  %724 = vmatprep.subr.mxu0 0.0
  %725 = vmatpush2.xpose.msra.mxu0 0.0
  %726 = vmatprep.subr.mxu0 0.0
  %727 = vmatpush2.xpose.msra.mxu0 0.0
  %728 = vmatprep.subr.mxu0 0.0
  %729 = vmatpush2.xpose.msra.mxu0 0.0
  %730 = vmatprep.subr.mxu0 0.0
  %731 = vmatpush2.xpose.msra.mxu0 0.0
  %732 = vmatprep.subr.mxu0 0.0
  %733 = vmatpush2.xpose.msra.mxu0 0.0
  %734 = vmatprep.subr.mxu0 0.0
  %735 = vmatpush2.xpose.msra.mxu0 0.0
  %736 = vmatprep.subr.mxu0 0.0
  %737 = vmatpush2.xpose.msra.mxu0 0.0
  %738 = vmatprep.subr.mxu0 0.0
  %739 = vmatpush2.xpose.msra.mxu0 0.0
  %740 = vmatprep.subr.mxu0 0.0
  %741 = vmatpush2.xpose.msra.mxu0 0.0
  %742 = vmatprep.subr.mxu0 0.0
  %743 = vmatpush2.xpose.msra.mxu0 0.0
  %744 = vmatprep.subr.mxu0 0.0
  %745 = vmatpush2.xpose.msra.mxu0 0.0
  %746 = vmatprep.subr.mxu0 0.0
  %747 = vmatpush2.xpose.msra.mxu0 0.0
  %748 = vmatprep.subr.mxu0 0.0
  %749 = vmatpush2.xpose.msra.mxu0 0.0
  %750 = vmatprep.subr.mxu0 0.0
  %751 = vmatpush2.xpose.msra.mxu0 0.0
  %752 = vmatprep.subr.mxu0 0.0
  %753 = vmatpush2.xpose.msra.mxu0 0.0
  %754 = vmatprep.subr.mxu0 0.0
  %755 = vmatpush2.xpose.msra.mxu0 0.0
  %756 = vmatprep.mubr.f32.mxu0 0.0
  %757 = vmatmul.mubr.f32.gmra.mxu0 %v688
  %v758 = vpop.f32.mrf.mxu0
  %v759 = vadd.f32 0.0, %v758
  %v760 = vpop.f32.mrf.mxu0
  %761 = vdwg.mxu0
  %v762 = vmul.f32 %v227, 0.35355338
  %v763 = vmul.f32 %v303, 0.35355338
  %v764 = vmul.f32 %v379, 0.35355338
  %v765 = vmul.f32 %v455, 0.35355338
  %v766 = vmul.f32 %v531, 0.35355338
  %v767 = vmul.f32 %v607, 0.35355338
  %v768 = vmul.f32 %v683, 0.35355338
  %v769 = vmul.f32 %v759, 0.35355338
  %v770 = vsel %vm155, %v762, -inf
  %771 = vmax.xlane.f32.xlu0 %v770
  %v772 = vpop.xlane.xlu0 %771
  %v773 = vsel %vm155, %v763, -inf
  %774 = vmax.xlane.f32.xlu0 %v773
  %v775 = vpop.xlane.xlu0 %774
  %v776 = vsel %vm155, %v764, -inf
  %777 = vmax.xlane.f32.xlu0 %v776
  %v778 = vpop.xlane.xlu0 %777
  %v779 = vsel %vm155, %v765, -inf
  %780 = vmax.xlane.f32.xlu0 %v779
  %v781 = vpop.xlane.xlu0 %780
  %v782 = vsel %vm155, %v766, -inf
  %783 = vmax.xlane.f32.xlu0 %v782
  %v784 = vpop.xlane.xlu0 %783
  %v785 = vsel %vm155, %v767, -inf
  %786 = vmax.xlane.f32.xlu0 %v785
  %v787 = vpop.xlane.xlu0 %786
  %v788 = vsel %vm155, %v768, -inf
  %789 = vmax.xlane.f32.xlu0 %v788
  %v790 = vpop.xlane.xlu0 %789
  %v791 = vsel %vm155, %v769, -inf
  %792 = vmax.xlane.f32.xlu0 %v791
  %v793 = vpop.xlane.xlu0 %792
  %v794 = vsub.f32 %v762, %v772
  %v795 = vsub.f32 %v763, %v775
  %v796 = vsub.f32 %v764, %v778
  %v797 = vsub.f32 %v765, %v781
  %v798 = vsub.f32 %v766, %v784
  %v799 = vsub.f32 %v767, %v787
  %v800 = vsub.f32 %v768, %v790
  %v801 = vsub.f32 %v769, %v793
  %v802 = vmul.f32 %v794, 1.442695
  %v803 = vpow.pop %v802
  %v804 = vmul.f32 %v795, 1.442695
  %v805 = vpow.pop %v804
  %v806 = vmul.f32 %v796, 1.442695
  %v807 = vpow.pop %v806
  %v808 = vmul.f32 %v797, 1.442695
  %v809 = vpow.pop %v808
  %v810 = vmul.f32 %v798, 1.442695
  %v811 = vpow.pop %v810
  %v812 = vmul.f32 %v799, 1.442695
  %v813 = vpow.pop %v812
  %v814 = vmul.f32 %v800, 1.442695
  %v815 = vpow.pop %v814
  %v816 = vmul.f32 %v801, 1.442695
  %v817 = vpow.pop %v816
  %v818 = vsel %vm155, %v803, 0.0
  %819 = vadd.xlane.f32.xlu0 %v818
  %v820 = vpop.xlane.xlu0 %819
  %v821 = vsel %vm155, %v805, 0.0
  %822 = vadd.xlane.f32.xlu0 %v821
  %v823 = vpop.xlane.xlu0 %822
  %v824 = vsel %vm155, %v807, 0.0
  %825 = vadd.xlane.f32.xlu0 %v824
  %v826 = vpop.xlane.xlu0 %825
  %v827 = vsel %vm155, %v809, 0.0
  %828 = vadd.xlane.f32.xlu0 %v827
  %v829 = vpop.xlane.xlu0 %828
  %v830 = vsel %vm155, %v811, 0.0
  %831 = vadd.xlane.f32.xlu0 %v830
  %v832 = vpop.xlane.xlu0 %831
  %v833 = vsel %vm155, %v813, 0.0
  %834 = vadd.xlane.f32.xlu0 %v833
  %v835 = vpop.xlane.xlu0 %834
  %v836 = vsel %vm155, %v815, 0.0
  %837 = vadd.xlane.f32.xlu0 %v836
  %v838 = vpop.xlane.xlu0 %837
  %v839 = vsel %vm155, %v817, 0.0
  %840 = vadd.xlane.f32.xlu0 %v839
  %v841 = vpop.xlane.xlu0 %840
  %v842 = vrcp.pop %v820
  %v843 = vrcp.pop %v823
  %v844 = vrcp.pop %v826
  %v845 = vrcp.pop %v829
  %v846 = vrcp.pop %v832
  %v847 = vrcp.pop %v835
  %v848 = vrcp.pop %v838
  %v849 = vrcp.pop %v841
  %v850 = vmul.f32 %v803, %v842
  %v851 = vmul.f32 %v805, %v843
  %v852 = vmul.f32 %v807, %v844
  %v853 = vmul.f32 %v809, %v845
  %v854 = vmul.f32 %v811, %v846
  %v855 = vmul.f32 %v813, %v847
  %v856 = vmul.f32 %v815, %v848
  %v857 = vmul.f32 %v817, %v849
  %858 = vrot.lane.b32.xlu0 %v131, 64
  %v859 = vpop.permute.xlu0 %858
  %v862 = vsel %vm155, %v850, 0
  %864 = vmatprep.subr.mxu0 0.0
  %865 = vmatpush1.msra.mxu0 0.0
  %866 = vmatprep.subr.mxu0 0.0
  %867 = vmatpush1.msra.mxu0 0.0
  %868 = vmatprep.subr.mxu0 0.0
  %869 = vmatpush1.msra.mxu0 0.0
  %870 = vmatprep.subr.mxu0 0.0
  %871 = vmatpush1.msra.mxu0 0.0
  %872 = vmatprep.subr.mxu0 0.0
  %873 = vmatpush1.msra.mxu0 0.0
  %874 = vmatprep.subr.mxu0 0.0
  %875 = vmatpush1.msra.mxu0 0.0
  %876 = vmatprep.subr.mxu0 0.0
  %877 = vmatpush1.msra.mxu0 0.0
  %878 = vmatprep.subr.mxu0 0.0
  %879 = vmatpush1.msra.mxu0 0.0
  %880 = vmatprep.subr.mxu0 0.0
  %881 = vmatpush1.msra.mxu0 0.0
  %882 = vmatprep.subr.mxu0 0.0
  %883 = vmatpush1.msra.mxu0 0.0
  %884 = vmatprep.subr.mxu0 0.0
  %885 = vmatpush1.msra.mxu0 0.0
  %886 = vmatprep.subr.mxu0 0.0
  %887 = vmatpush1.msra.mxu0 0.0
  %888 = vmatprep.subr.mxu0 0.0
  %889 = vmatpush1.msra.mxu0 0.0
  %890 = vmatprep.subr.mxu0 0.0
  %891 = vmatpush1.msra.mxu0 0.0
  %892 = vmatprep.subr.mxu0 0.0
  %893 = vmatpush1.msra.mxu0 0.0
  %894 = vmatprep.subr.mxu0 0.0
  %895 = vmatpush1.msra.mxu0 %v859
  %896 = vmatprep.subr.mxu0 0.0
  %897 = vmatpush2.msra.mxu0 0.0
  %898 = vmatprep.subr.mxu0 0.0
  %899 = vmatpush2.msra.mxu0 0.0
  %900 = vmatprep.subr.mxu0 0.0
  %901 = vmatpush2.msra.mxu0 0.0
  %902 = vmatprep.subr.mxu0 0.0
  %903 = vmatpush2.msra.mxu0 0.0
  %904 = vmatprep.subr.mxu0 0.0
  %905 = vmatpush2.msra.mxu0 0.0
  %906 = vmatprep.subr.mxu0 0.0
  %907 = vmatpush2.msra.mxu0 0.0
  %908 = vmatprep.subr.mxu0 0.0
  %909 = vmatpush2.msra.mxu0 0.0
  %910 = vmatprep.subr.mxu0 0.0
  %911 = vmatpush2.msra.mxu0 0.0
  %912 = vmatprep.subr.mxu0 0.0
  %913 = vmatpush2.msra.mxu0 0.0
  %914 = vmatprep.subr.mxu0 0.0
  %915 = vmatpush2.msra.mxu0 0.0
  %916 = vmatprep.subr.mxu0 0.0
  %917 = vmatpush2.msra.mxu0 0.0
  %918 = vmatprep.subr.mxu0 0.0
  %919 = vmatpush2.msra.mxu0 0.0
  %920 = vmatprep.subr.mxu0 0.0
  %921 = vmatpush2.msra.mxu0 0.0
  %922 = vmatprep.subr.mxu0 0.0
  %923 = vmatpush2.msra.mxu0 0.0
  %924 = vmatprep.subr.mxu0 0.0
  %925 = vmatpush2.msra.mxu0 0.0
  %926 = vmatprep.subr.mxu0 0.0
  %927 = vmatpush2.msra.mxu0 0.0
  %928 = vmatprep.mubr.f32.mxu0 0.0
  %929 = vmatmul.mubr.f32.gmra.mxu0 %v862
  %v930 = vpop.f32.mrf.mxu0
  %v931 = vadd.f32 0.0, %v930
  %v932 = vpop.f32.mrf.mxu0
  %933 = vdwg.mxu0
  %934 = vrot.lane.b32.xlu0 %v136, 64
  %v935 = vpop.permute.xlu0 %934
  %v938 = vsel %vm155, %v851, 0
  %940 = vmatprep.subr.mxu0 0.0
  %941 = vmatpush1.msra.mxu0 0.0
  %942 = vmatprep.subr.mxu0 0.0
  %943 = vmatpush1.msra.mxu0 0.0
  %944 = vmatprep.subr.mxu0 0.0
  %945 = vmatpush1.msra.mxu0 0.0
  %946 = vmatprep.subr.mxu0 0.0
  %947 = vmatpush1.msra.mxu0 0.0
  %948 = vmatprep.subr.mxu0 0.0
  %949 = vmatpush1.msra.mxu0 0.0
  %950 = vmatprep.subr.mxu0 0.0
  %951 = vmatpush1.msra.mxu0 0.0
  %952 = vmatprep.subr.mxu0 0.0
  %953 = vmatpush1.msra.mxu0 0.0
  %954 = vmatprep.subr.mxu0 0.0
  %955 = vmatpush1.msra.mxu0 0.0
  %956 = vmatprep.subr.mxu0 0.0
  %957 = vmatpush1.msra.mxu0 0.0
  %958 = vmatprep.subr.mxu0 0.0
  %959 = vmatpush1.msra.mxu0 0.0
  %960 = vmatprep.subr.mxu0 0.0
  %961 = vmatpush1.msra.mxu0 0.0
  %962 = vmatprep.subr.mxu0 0.0
  %963 = vmatpush1.msra.mxu0 0.0
  %964 = vmatprep.subr.mxu0 0.0
  %965 = vmatpush1.msra.mxu0 0.0
  %966 = vmatprep.subr.mxu0 0.0
  %967 = vmatpush1.msra.mxu0 0.0
  %968 = vmatprep.subr.mxu0 0.0
  %969 = vmatpush1.msra.mxu0 0.0
  %970 = vmatprep.subr.mxu0 0.0
  %971 = vmatpush1.msra.mxu0 %v935
  %972 = vmatprep.subr.mxu0 0.0
  %973 = vmatpush2.msra.mxu0 0.0
  %974 = vmatprep.subr.mxu0 0.0
  %975 = vmatpush2.msra.mxu0 0.0
  %976 = vmatprep.subr.mxu0 0.0
  %977 = vmatpush2.msra.mxu0 0.0
  %978 = vmatprep.subr.mxu0 0.0
  %979 = vmatpush2.msra.mxu0 0.0
  %980 = vmatprep.subr.mxu0 0.0
  %981 = vmatpush2.msra.mxu0 0.0
  %982 = vmatprep.subr.mxu0 0.0
  %983 = vmatpush2.msra.mxu0 0.0
  %984 = vmatprep.subr.mxu0 0.0
  %985 = vmatpush2.msra.mxu0 0.0
  %986 = vmatprep.subr.mxu0 0.0
  %987 = vmatpush2.msra.mxu0 0.0
  %988 = vmatprep.subr.mxu0 0.0
  %989 = vmatpush2.msra.mxu0 0.0
  %990 = vmatprep.subr.mxu0 0.0
  %991 = vmatpush2.msra.mxu0 0.0
  %992 = vmatprep.subr.mxu0 0.0
  %993 = vmatpush2.msra.mxu0 0.0
  %994 = vmatprep.subr.mxu0 0.0
  %995 = vmatpush2.msra.mxu0 0.0
  %996 = vmatprep.subr.mxu0 0.0
  %997 = vmatpush2.msra.mxu0 0.0
  %998 = vmatprep.subr.mxu0 0.0
  %999 = vmatpush2.msra.mxu0 0.0
  %1000 = vmatprep.subr.mxu0 0.0
  %1001 = vmatpush2.msra.mxu0 0.0
  %1002 = vmatprep.subr.mxu0 0.0
  %1003 = vmatpush2.msra.mxu0 0.0
  %1004 = vmatprep.mubr.f32.mxu0 0.0
  %1005 = vmatmul.mubr.f32.gmra.mxu0 %v938
  %v1006 = vpop.f32.mrf.mxu0
  %v1007 = vadd.f32 0.0, %v1006
  %v1008 = vpop.f32.mrf.mxu0
  %1009 = vdwg.mxu0
  %1010 = vrot.lane.b32.xlu0 %v142, 64
  %v1011 = vpop.permute.xlu0 %1010
  %v1014 = vsel %vm155, %v852, 0
  %1016 = vmatprep.subr.mxu0 0.0
  %1017 = vmatpush1.msra.mxu0 0.0
  %1018 = vmatprep.subr.mxu0 0.0
  %1019 = vmatpush1.msra.mxu0 0.0
  %1020 = vmatprep.subr.mxu0 0.0
  %1021 = vmatpush1.msra.mxu0 0.0
  %1022 = vmatprep.subr.mxu0 0.0
  %1023 = vmatpush1.msra.mxu0 0.0
  %1024 = vmatprep.subr.mxu0 0.0
  %1025 = vmatpush1.msra.mxu0 0.0
  %1026 = vmatprep.subr.mxu0 0.0
  %1027 = vmatpush1.msra.mxu0 0.0
  %1028 = vmatprep.subr.mxu0 0.0
  %1029 = vmatpush1.msra.mxu0 0.0
  %1030 = vmatprep.subr.mxu0 0.0
  %1031 = vmatpush1.msra.mxu0 0.0
  %1032 = vmatprep.subr.mxu0 0.0
  %1033 = vmatpush1.msra.mxu0 0.0
  %1034 = vmatprep.subr.mxu0 0.0
  %1035 = vmatpush1.msra.mxu0 0.0
  %1036 = vmatprep.subr.mxu0 0.0
  %1037 = vmatpush1.msra.mxu0 0.0
  %1038 = vmatprep.subr.mxu0 0.0
  %1039 = vmatpush1.msra.mxu0 0.0
  %1040 = vmatprep.subr.mxu0 0.0
  %1041 = vmatpush1.msra.mxu0 0.0
  %1042 = vmatprep.subr.mxu0 0.0
  %1043 = vmatpush1.msra.mxu0 0.0
  %1044 = vmatprep.subr.mxu0 0.0
  %1045 = vmatpush1.msra.mxu0 0.0
  %1046 = vmatprep.subr.mxu0 0.0
  %1047 = vmatpush1.msra.mxu0 %v1011
  %1048 = vmatprep.subr.mxu0 0.0
  %1049 = vmatpush2.msra.mxu0 0.0
  %1050 = vmatprep.subr.mxu0 0.0
  %1051 = vmatpush2.msra.mxu0 0.0
  %1052 = vmatprep.subr.mxu0 0.0
  %1053 = vmatpush2.msra.mxu0 0.0
  %1054 = vmatprep.subr.mxu0 0.0
  %1055 = vmatpush2.msra.mxu0 0.0
  %1056 = vmatprep.subr.mxu0 0.0
  %1057 = vmatpush2.msra.mxu0 0.0
  %1058 = vmatprep.subr.mxu0 0.0
  %1059 = vmatpush2.msra.mxu0 0.0
  %1060 = vmatprep.subr.mxu0 0.0
  %1061 = vmatpush2.msra.mxu0 0.0
  %1062 = vmatprep.subr.mxu0 0.0
  %1063 = vmatpush2.msra.mxu0 0.0
  %1064 = vmatprep.subr.mxu0 0.0
  %1065 = vmatpush2.msra.mxu0 0.0
  %1066 = vmatprep.subr.mxu0 0.0
  %1067 = vmatpush2.msra.mxu0 0.0
  %1068 = vmatprep.subr.mxu0 0.0
  %1069 = vmatpush2.msra.mxu0 0.0
  %1070 = vmatprep.subr.mxu0 0.0
  %1071 = vmatpush2.msra.mxu0 0.0
  %1072 = vmatprep.subr.mxu0 0.0
  %1073 = vmatpush2.msra.mxu0 0.0
  %1074 = vmatprep.subr.mxu0 0.0
  %1075 = vmatpush2.msra.mxu0 0.0
  %1076 = vmatprep.subr.mxu0 0.0
  %1077 = vmatpush2.msra.mxu0 0.0
  %1078 = vmatprep.subr.mxu0 0.0
  %1079 = vmatpush2.msra.mxu0 0.0
  %1080 = vmatprep.mubr.f32.mxu0 0.0
  %1081 = vmatmul.mubr.f32.gmra.mxu0 %v1014
  %v1082 = vpop.f32.mrf.mxu0
  %v1083 = vadd.f32 0.0, %v1082
  %v1084 = vpop.f32.mrf.mxu0
  %1085 = vdwg.mxu0
  %1086 = vrot.lane.b32.xlu0 %v144, 64
  %v1087 = vpop.permute.xlu0 %1086
  %v1090 = vsel %vm155, %v853, 0
  %1092 = vmatprep.subr.mxu0 0.0
  %1093 = vmatpush1.msra.mxu0 0.0
  %1094 = vmatprep.subr.mxu0 0.0
  %1095 = vmatpush1.msra.mxu0 0.0
  %1096 = vmatprep.subr.mxu0 0.0
  %1097 = vmatpush1.msra.mxu0 0.0
  %1098 = vmatprep.subr.mxu0 0.0
  %1099 = vmatpush1.msra.mxu0 0.0
  %1100 = vmatprep.subr.mxu0 0.0
  %1101 = vmatpush1.msra.mxu0 0.0
  %1102 = vmatprep.subr.mxu0 0.0
  %1103 = vmatpush1.msra.mxu0 0.0
  %1104 = vmatprep.subr.mxu0 0.0
  %1105 = vmatpush1.msra.mxu0 0.0
  %1106 = vmatprep.subr.mxu0 0.0
  %1107 = vmatpush1.msra.mxu0 0.0
  %1108 = vmatprep.subr.mxu0 0.0
  %1109 = vmatpush1.msra.mxu0 0.0
  %1110 = vmatprep.subr.mxu0 0.0
  %1111 = vmatpush1.msra.mxu0 0.0
  %1112 = vmatprep.subr.mxu0 0.0
  %1113 = vmatpush1.msra.mxu0 0.0
  %1114 = vmatprep.subr.mxu0 0.0
  %1115 = vmatpush1.msra.mxu0 0.0
  %1116 = vmatprep.subr.mxu0 0.0
  %1117 = vmatpush1.msra.mxu0 0.0
  %1118 = vmatprep.subr.mxu0 0.0
  %1119 = vmatpush1.msra.mxu0 0.0
  %1120 = vmatprep.subr.mxu0 0.0
  %1121 = vmatpush1.msra.mxu0 0.0
  %1122 = vmatprep.subr.mxu0 0.0
  %1123 = vmatpush1.msra.mxu0 %v1087
  %1124 = vmatprep.subr.mxu0 0.0
  %1125 = vmatpush2.msra.mxu0 0.0
  %1126 = vmatprep.subr.mxu0 0.0
  %1127 = vmatpush2.msra.mxu0 0.0
  %1128 = vmatprep.subr.mxu0 0.0
  %1129 = vmatpush2.msra.mxu0 0.0
  %1130 = vmatprep.subr.mxu0 0.0
  %1131 = vmatpush2.msra.mxu0 0.0
  %1132 = vmatprep.subr.mxu0 0.0
  %1133 = vmatpush2.msra.mxu0 0.0
  %1134 = vmatprep.subr.mxu0 0.0
  %1135 = vmatpush2.msra.mxu0 0.0
  %1136 = vmatprep.subr.mxu0 0.0
  %1137 = vmatpush2.msra.mxu0 0.0
  %1138 = vmatprep.subr.mxu0 0.0
  %1139 = vmatpush2.msra.mxu0 0.0
  %1140 = vmatprep.subr.mxu0 0.0
  %1141 = vmatpush2.msra.mxu0 0.0
  %1142 = vmatprep.subr.mxu0 0.0
  %1143 = vmatpush2.msra.mxu0 0.0
  %1144 = vmatprep.subr.mxu0 0.0
  %1145 = vmatpush2.msra.mxu0 0.0
  %1146 = vmatprep.subr.mxu0 0.0
  %1147 = vmatpush2.msra.mxu0 0.0
  %1148 = vmatprep.subr.mxu0 0.0
  %1149 = vmatpush2.msra.mxu0 0.0
  %1150 = vmatprep.subr.mxu0 0.0
  %1151 = vmatpush2.msra.mxu0 0.0
  %1152 = vmatprep.subr.mxu0 0.0
  %1153 = vmatpush2.msra.mxu0 0.0
  %1154 = vmatprep.subr.mxu0 0.0
  %1155 = vmatpush2.msra.mxu0 0.0
  %1156 = vmatprep.mubr.f32.mxu0 0.0
  %1157 = vmatmul.mubr.f32.gmra.mxu0 %v1090
  %v1158 = vpop.f32.mrf.mxu0
  %v1159 = vadd.f32 0.0, %v1158
  %v1160 = vpop.f32.mrf.mxu0
  %1161 = vdwg.mxu0
  %1162 = vrot.lane.b32.xlu0 %v146, 64
  %v1163 = vpop.permute.xlu0 %1162
  %v1166 = vsel %vm155, %v854, 0
  %1168 = vmatprep.subr.mxu0 0.0
  %1169 = vmatpush1.msra.mxu0 0.0
  %1170 = vmatprep.subr.mxu0 0.0
  %1171 = vmatpush1.msra.mxu0 0.0
  %1172 = vmatprep.subr.mxu0 0.0
  %1173 = vmatpush1.msra.mxu0 0.0
  %1174 = vmatprep.subr.mxu0 0.0
  %1175 = vmatpush1.msra.mxu0 0.0
  %1176 = vmatprep.subr.mxu0 0.0
  %1177 = vmatpush1.msra.mxu0 0.0
  %1178 = vmatprep.subr.mxu0 0.0
  %1179 = vmatpush1.msra.mxu0 0.0
  %1180 = vmatprep.subr.mxu0 0.0
  %1181 = vmatpush1.msra.mxu0 0.0
  %1182 = vmatprep.subr.mxu0 0.0
  %1183 = vmatpush1.msra.mxu0 0.0
  %1184 = vmatprep.subr.mxu0 0.0
  %1185 = vmatpush1.msra.mxu0 0.0
  %1186 = vmatprep.subr.mxu0 0.0
  %1187 = vmatpush1.msra.mxu0 0.0
  %1188 = vmatprep.subr.mxu0 0.0
  %1189 = vmatpush1.msra.mxu0 0.0
  %1190 = vmatprep.subr.mxu0 0.0
  %1191 = vmatpush1.msra.mxu0 0.0
  %1192 = vmatprep.subr.mxu0 0.0
  %1193 = vmatpush1.msra.mxu0 0.0
  %1194 = vmatprep.subr.mxu0 0.0
  %1195 = vmatpush1.msra.mxu0 0.0
  %1196 = vmatprep.subr.mxu0 0.0
  %1197 = vmatpush1.msra.mxu0 0.0
  %1198 = vmatprep.subr.mxu0 0.0
  %1199 = vmatpush1.msra.mxu0 %v1163
  %1200 = vmatprep.subr.mxu0 0.0
  %1201 = vmatpush2.msra.mxu0 0.0
  %1202 = vmatprep.subr.mxu0 0.0
  %1203 = vmatpush2.msra.mxu0 0.0
  %1204 = vmatprep.subr.mxu0 0.0
  %1205 = vmatpush2.msra.mxu0 0.0
  %1206 = vmatprep.subr.mxu0 0.0
  %1207 = vmatpush2.msra.mxu0 0.0
  %1208 = vmatprep.subr.mxu0 0.0
  %1209 = vmatpush2.msra.mxu0 0.0
  %1210 = vmatprep.subr.mxu0 0.0
  %1211 = vmatpush2.msra.mxu0 0.0
  %1212 = vmatprep.subr.mxu0 0.0
  %1213 = vmatpush2.msra.mxu0 0.0
  %1214 = vmatprep.subr.mxu0 0.0
  %1215 = vmatpush2.msra.mxu0 0.0
  %1216 = vmatprep.subr.mxu0 0.0
  %1217 = vmatpush2.msra.mxu0 0.0
  %1218 = vmatprep.subr.mxu0 0.0
  %1219 = vmatpush2.msra.mxu0 0.0
  %1220 = vmatprep.subr.mxu0 0.0
  %1221 = vmatpush2.msra.mxu0 0.0
  %1222 = vmatprep.subr.mxu0 0.0
  %1223 = vmatpush2.msra.mxu0 0.0
  %1224 = vmatprep.subr.mxu0 0.0
  %1225 = vmatpush2.msra.mxu0 0.0
  %1226 = vmatprep.subr.mxu0 0.0
  %1227 = vmatpush2.msra.mxu0 0.0
  %1228 = vmatprep.subr.mxu0 0.0
  %1229 = vmatpush2.msra.mxu0 0.0
  %1230 = vmatprep.subr.mxu0 0.0
  %1231 = vmatpush2.msra.mxu0 0.0
  %1232 = vmatprep.mubr.f32.mxu0 0.0
  %1233 = vmatmul.mubr.f32.gmra.mxu0 %v1166
  %v1234 = vpop.f32.mrf.mxu0
  %v1235 = vadd.f32 0.0, %v1234
  %v1236 = vpop.f32.mrf.mxu0
  %1237 = vdwg.mxu0
  %1238 = vrot.lane.b32.xlu0 %v148, 64
  %v1239 = vpop.permute.xlu0 %1238
  %v1242 = vsel %vm155, %v855, 0
  %1244 = vmatprep.subr.mxu0 0.0
  %1245 = vmatpush1.msra.mxu0 0.0
  %1246 = vmatprep.subr.mxu0 0.0
  %1247 = vmatpush1.msra.mxu0 0.0
  %1248 = vmatprep.subr.mxu0 0.0
  %1249 = vmatpush1.msra.mxu0 0.0
  %1250 = vmatprep.subr.mxu0 0.0
  %1251 = vmatpush1.msra.mxu0 0.0
  %1252 = vmatprep.subr.mxu0 0.0
  %1253 = vmatpush1.msra.mxu0 0.0
  %1254 = vmatprep.subr.mxu0 0.0
  %1255 = vmatpush1.msra.mxu0 0.0
  %1256 = vmatprep.subr.mxu0 0.0
  %1257 = vmatpush1.msra.mxu0 0.0
  %1258 = vmatprep.subr.mxu0 0.0
  %1259 = vmatpush1.msra.mxu0 0.0
  %1260 = vmatprep.subr.mxu0 0.0
  %1261 = vmatpush1.msra.mxu0 0.0
  %1262 = vmatprep.subr.mxu0 0.0
  %1263 = vmatpush1.msra.mxu0 0.0
  %1264 = vmatprep.subr.mxu0 0.0
  %1265 = vmatpush1.msra.mxu0 0.0
  %1266 = vmatprep.subr.mxu0 0.0
  %1267 = vmatpush1.msra.mxu0 0.0
  %1268 = vmatprep.subr.mxu0 0.0
  %1269 = vmatpush1.msra.mxu0 0.0
  %1270 = vmatprep.subr.mxu0 0.0
  %1271 = vmatpush1.msra.mxu0 0.0
  %1272 = vmatprep.subr.mxu0 0.0
  %1273 = vmatpush1.msra.mxu0 0.0
  %1274 = vmatprep.subr.mxu0 0.0
  %1275 = vmatpush1.msra.mxu0 %v1239
  %1276 = vmatprep.subr.mxu0 0.0
  %1277 = vmatpush2.msra.mxu0 0.0
  %1278 = vmatprep.subr.mxu0 0.0
  %1279 = vmatpush2.msra.mxu0 0.0
  %1280 = vmatprep.subr.mxu0 0.0
  %1281 = vmatpush2.msra.mxu0 0.0
  %1282 = vmatprep.subr.mxu0 0.0
  %1283 = vmatpush2.msra.mxu0 0.0
  %1284 = vmatprep.subr.mxu0 0.0
  %1285 = vmatpush2.msra.mxu0 0.0
  %1286 = vmatprep.subr.mxu0 0.0
  %1287 = vmatpush2.msra.mxu0 0.0
  %1288 = vmatprep.subr.mxu0 0.0
  %1289 = vmatpush2.msra.mxu0 0.0
  %1290 = vmatprep.subr.mxu0 0.0
  %1291 = vmatpush2.msra.mxu0 0.0
  %1292 = vmatprep.subr.mxu0 0.0
  %1293 = vmatpush2.msra.mxu0 0.0
  %1294 = vmatprep.subr.mxu0 0.0
  %1295 = vmatpush2.msra.mxu0 0.0
  %1296 = vmatprep.subr.mxu0 0.0
  %1297 = vmatpush2.msra.mxu0 0.0
  %1298 = vmatprep.subr.mxu0 0.0
  %1299 = vmatpush2.msra.mxu0 0.0
  %1300 = vmatprep.subr.mxu0 0.0
  %1301 = vmatpush2.msra.mxu0 0.0
  %1302 = vmatprep.subr.mxu0 0.0
  %1303 = vmatpush2.msra.mxu0 0.0
  %1304 = vmatprep.subr.mxu0 0.0
  %1305 = vmatpush2.msra.mxu0 0.0
  %1306 = vmatprep.subr.mxu0 0.0
  %1307 = vmatpush2.msra.mxu0 0.0
  %1308 = vmatprep.mubr.f32.mxu0 0.0
  %1309 = vmatmul.mubr.f32.gmra.mxu0 %v1242
  %v1310 = vpop.f32.mrf.mxu0
  %v1311 = vadd.f32 0.0, %v1310
  %v1312 = vpop.f32.mrf.mxu0
  %1313 = vdwg.mxu0
  %1314 = vrot.lane.b32.xlu0 %v150, 64
  %v1315 = vpop.permute.xlu0 %1314
  %v1318 = vsel %vm155, %v856, 0
  %1320 = vmatprep.subr.mxu0 0.0
  %1321 = vmatpush1.msra.mxu0 0.0
  %1322 = vmatprep.subr.mxu0 0.0
  %1323 = vmatpush1.msra.mxu0 0.0
  %1324 = vmatprep.subr.mxu0 0.0
  %1325 = vmatpush1.msra.mxu0 0.0
  %1326 = vmatprep.subr.mxu0 0.0
  %1327 = vmatpush1.msra.mxu0 0.0
  %1328 = vmatprep.subr.mxu0 0.0
  %1329 = vmatpush1.msra.mxu0 0.0
  %1330 = vmatprep.subr.mxu0 0.0
  %1331 = vmatpush1.msra.mxu0 0.0
  %1332 = vmatprep.subr.mxu0 0.0
  %1333 = vmatpush1.msra.mxu0 0.0
  %1334 = vmatprep.subr.mxu0 0.0
  %1335 = vmatpush1.msra.mxu0 0.0
  %1336 = vmatprep.subr.mxu0 0.0
  %1337 = vmatpush1.msra.mxu0 0.0
  %1338 = vmatprep.subr.mxu0 0.0
  %1339 = vmatpush1.msra.mxu0 0.0
  %1340 = vmatprep.subr.mxu0 0.0
  %1341 = vmatpush1.msra.mxu0 0.0
  %1342 = vmatprep.subr.mxu0 0.0
  %1343 = vmatpush1.msra.mxu0 0.0
  %1344 = vmatprep.subr.mxu0 0.0
  %1345 = vmatpush1.msra.mxu0 0.0
  %1346 = vmatprep.subr.mxu0 0.0
  %1347 = vmatpush1.msra.mxu0 0.0
  %1348 = vmatprep.subr.mxu0 0.0
  %1349 = vmatpush1.msra.mxu0 0.0
  %1350 = vmatprep.subr.mxu0 0.0
  %1351 = vmatpush1.msra.mxu0 %v1315
  %1352 = vmatprep.subr.mxu0 0.0
  %1353 = vmatpush2.msra.mxu0 0.0
  %1354 = vmatprep.subr.mxu0 0.0
  %1355 = vmatpush2.msra.mxu0 0.0
  %1356 = vmatprep.subr.mxu0 0.0
  %1357 = vmatpush2.msra.mxu0 0.0
  %1358 = vmatprep.subr.mxu0 0.0
  %1359 = vmatpush2.msra.mxu0 0.0
  %1360 = vmatprep.subr.mxu0 0.0
  %1361 = vmatpush2.msra.mxu0 0.0
  %1362 = vmatprep.subr.mxu0 0.0
  %1363 = vmatpush2.msra.mxu0 0.0
  %1364 = vmatprep.subr.mxu0 0.0
  %1365 = vmatpush2.msra.mxu0 0.0
  %1366 = vmatprep.subr.mxu0 0.0
  %1367 = vmatpush2.msra.mxu0 0.0
  %1368 = vmatprep.subr.mxu0 0.0
  %1369 = vmatpush2.msra.mxu0 0.0
  %1370 = vmatprep.subr.mxu0 0.0
  %1371 = vmatpush2.msra.mxu0 0.0
  %1372 = vmatprep.subr.mxu0 0.0
  %1373 = vmatpush2.msra.mxu0 0.0
  %1374 = vmatprep.subr.mxu0 0.0
  %1375 = vmatpush2.msra.mxu0 0.0
  %1376 = vmatprep.subr.mxu0 0.0
  %1377 = vmatpush2.msra.mxu0 0.0
  %1378 = vmatprep.subr.mxu0 0.0
  %1379 = vmatpush2.msra.mxu0 0.0
  %1380 = vmatprep.subr.mxu0 0.0
  %1381 = vmatpush2.msra.mxu0 0.0
  %1382 = vmatprep.subr.mxu0 0.0
  %1383 = vmatpush2.msra.mxu0 0.0
  %1384 = vmatprep.mubr.f32.mxu0 0.0
  %1385 = vmatmul.mubr.f32.gmra.mxu0 %v1318
  %v1386 = vpop.f32.mrf.mxu0
  %v1387 = vadd.f32 0.0, %v1386
  %v1388 = vpop.f32.mrf.mxu0
  %1389 = vdwg.mxu0
  %1390 = vrot.lane.b32.xlu0 %v152, 64
  %v1391 = vpop.permute.xlu0 %1390
  %v1394 = vsel %vm155, %v857, 0
  %1396 = vmatprep.subr.mxu0 0.0
  %1397 = vmatpush1.msra.mxu0 0.0
  %1398 = vmatprep.subr.mxu0 0.0
  %1399 = vmatpush1.msra.mxu0 0.0
  %1400 = vmatprep.subr.mxu0 0.0
  %1401 = vmatpush1.msra.mxu0 0.0
  %1402 = vmatprep.subr.mxu0 0.0
  %1403 = vmatpush1.msra.mxu0 0.0
  %1404 = vmatprep.subr.mxu0 0.0
  %1405 = vmatpush1.msra.mxu0 0.0
  %1406 = vmatprep.subr.mxu0 0.0
  %1407 = vmatpush1.msra.mxu0 0.0
  %1408 = vmatprep.subr.mxu0 0.0
  %1409 = vmatpush1.msra.mxu0 0.0
  %1410 = vmatprep.subr.mxu0 0.0
  %1411 = vmatpush1.msra.mxu0 0.0
  %1412 = vmatprep.subr.mxu0 0.0
  %1413 = vmatpush1.msra.mxu0 0.0
  %1414 = vmatprep.subr.mxu0 0.0
  %1415 = vmatpush1.msra.mxu0 0.0
  %1416 = vmatprep.subr.mxu0 0.0
  %1417 = vmatpush1.msra.mxu0 0.0
  %1418 = vmatprep.subr.mxu0 0.0
  %1419 = vmatpush1.msra.mxu0 0.0
  %1420 = vmatprep.subr.mxu0 0.0
  %1421 = vmatpush1.msra.mxu0 0.0
  %1422 = vmatprep.subr.mxu0 0.0
  %1423 = vmatpush1.msra.mxu0 0.0
  %1424 = vmatprep.subr.mxu0 0.0
  %1425 = vmatpush1.msra.mxu0 0.0
  %1426 = vmatprep.subr.mxu0 0.0
  %1427 = vmatpush1.msra.mxu0 %v1391
  %1428 = vmatprep.subr.mxu0 0.0
  %1429 = vmatpush2.msra.mxu0 0.0
  %1430 = vmatprep.subr.mxu0 0.0
  %1431 = vmatpush2.msra.mxu0 0.0
  %1432 = vmatprep.subr.mxu0 0.0
  %1433 = vmatpush2.msra.mxu0 0.0
  %1434 = vmatprep.subr.mxu0 0.0
  %1435 = vmatpush2.msra.mxu0 0.0
  %1436 = vmatprep.subr.mxu0 0.0
  %1437 = vmatpush2.msra.mxu0 0.0
  %1438 = vmatprep.subr.mxu0 0.0
  %1439 = vmatpush2.msra.mxu0 0.0
  %1440 = vmatprep.subr.mxu0 0.0
  %1441 = vmatpush2.msra.mxu0 0.0
  %1442 = vmatprep.subr.mxu0 0.0
  %1443 = vmatpush2.msra.mxu0 0.0
  %1444 = vmatprep.subr.mxu0 0.0
  %1445 = vmatpush2.msra.mxu0 0.0
  %1446 = vmatprep.subr.mxu0 0.0
  %1447 = vmatpush2.msra.mxu0 0.0
  %1448 = vmatprep.subr.mxu0 0.0
  %1449 = vmatpush2.msra.mxu0 0.0
  %1450 = vmatprep.subr.mxu0 0.0
  %1451 = vmatpush2.msra.mxu0 0.0
  %1452 = vmatprep.subr.mxu0 0.0
  %1453 = vmatpush2.msra.mxu0 0.0
  %1454 = vmatprep.subr.mxu0 0.0
  %1455 = vmatpush2.msra.mxu0 0.0
  %1456 = vmatprep.subr.mxu0 0.0
  %1457 = vmatpush2.msra.mxu0 0.0
  %1458 = vmatprep.subr.mxu0 0.0
  %1459 = vmatpush2.msra.mxu0 0.0
  %1460 = vmatprep.mubr.f32.mxu0 0.0
  %1461 = vmatmul.mubr.f32.gmra.mxu0 %v1394
  %v1462 = vpop.f32.mrf.mxu0
  %v1463 = vadd.f32 0.0, %v1462
  %v1464 = vpop.f32.mrf.mxu0
  %1465 = vdwg.mxu0
  %1468 = vrot.lane.b32.xlu0 %v1083, 8
  %v1469 = vpop.permute.xlu0 %1468
  %1470 = vrot.lane.b32.xlu0 %v1159, 8
  %v1471 = vpop.permute.xlu0 %1470
  %1476 = vrot.lane.b32.xlu0 %v1235, 16
  %v1477 = vpop.permute.xlu0 %1476
  %1478 = vrot.lane.b32.xlu0 %v1311, 16
  %v1479 = vpop.permute.xlu0 %1478
  %1484 = vrot.lane.b32.xlu0 %v1387, 24
  %v1485 = vpop.permute.xlu0 %1484
  %1486 = vrot.lane.b32.xlu0 %v1463, 24
  %v1487 = vpop.permute.xlu0 %1486
  %v1490 = vsel %vm155, %v931, %v1469
  %v1491 = vsel %vm155, %v1007, %v1471
  %vm1492 = vcmask 130048
  %v1493 = vsel %vm1492, %v1490, %v1477
  %v1494 = vsel %vm1492, %v1491, %v1479
  %vm1495 = vcmask 195584
  %v1496 = vsel %vm1495, %v1493, %v1485
  %v1497 = vsel %vm1495, %v1494, %v1487
  %v1498 = vld [vmem:[%s3] sm:$0xff]
  %v1499 = vld [vmem:[%s3 + $0x8] sm:$0xff]
  %v1500 = vld [vmem:[%s3 + $0x10] sm:$0xff]
  %v1501 = vld [vmem:[%s3 + $0x18] sm:$0xff]
  %v1502 = vld [vmem:[%s4] sm:$0x1]
  %v1504 = vlaneseq
  %v1505 = vshrl.u32 %v1504, 7
  %v1506 = vsub.s32 0, %v1505
  %v1507 = vrot.slane %v1502, %v1506
  %v1510 = vsel %vm57, %v1496, 0
  %v1513 = vsel %vm57, %v1497, 0
  %1515 = vmatprep.subr.mxu0 0.0
  %1516 = vmatpush1.msra.mxu0 0.0
  %1517 = vmatprep.subr.mxu0 0.0
  %1518 = vmatpush1.msra.mxu0 0.0
  %1519 = vmatprep.subr.mxu0 0.0
  %1520 = vmatpush1.msra.mxu0 0.0
  %1521 = vmatprep.subr.mxu0 0.0
  %1522 = vmatpush1.msra.mxu0 0.0
  %1523 = vmatprep.subr.mxu0 0.0
  %1524 = vmatpush1.msra.mxu0 0.0
  %1525 = vmatprep.subr.mxu0 0.0
  %1526 = vmatpush1.msra.mxu0 0.0
  %1527 = vmatprep.subr.mxu0 0.0
  %1528 = vmatpush1.msra.mxu0 0.0
  %1529 = vmatprep.subr.mxu0 0.0
  %1530 = vmatpush1.msra.mxu0 0.0
  %1531 = vmatprep.subr.mxu0 0.0
  %1532 = vmatpush1.msra.mxu0 0.0
  %1533 = vmatprep.subr.mxu0 0.0
  %1534 = vmatpush1.msra.mxu0 0.0
  %1535 = vmatprep.subr.mxu0 0.0
  %1536 = vmatpush1.msra.mxu0 0.0
  %1537 = vmatprep.subr.mxu0 0.0
  %1538 = vmatpush1.msra.mxu0 0.0
  %1539 = vmatprep.subr.mxu0 0.0
  %1540 = vmatpush1.msra.mxu0 %v1501
  %1541 = vmatprep.subr.mxu0 0.0
  %1542 = vmatpush1.msra.mxu0 %v1500
  %1543 = vmatprep.subr.mxu0 0.0
  %1544 = vmatpush1.msra.mxu0 %v1499
  %1545 = vmatprep.subr.mxu0 0.0
  %1546 = vmatpush1.msra.mxu0 %v1498
  %1547 = vmatprep.subr.mxu0 0.0
  %1548 = vmatpush2.msra.mxu0 0.0
  %1549 = vmatprep.subr.mxu0 0.0
  %1550 = vmatpush2.msra.mxu0 0.0
  %1551 = vmatprep.subr.mxu0 0.0
  %1552 = vmatpush2.msra.mxu0 0.0
  %1553 = vmatprep.subr.mxu0 0.0
  %1554 = vmatpush2.msra.mxu0 0.0
  %1555 = vmatprep.subr.mxu0 0.0
  %1556 = vmatpush2.msra.mxu0 0.0
  %1557 = vmatprep.subr.mxu0 0.0
  %1558 = vmatpush2.msra.mxu0 0.0
  %1559 = vmatprep.subr.mxu0 0.0
  %1560 = vmatpush2.msra.mxu0 0.0
  %1561 = vmatprep.subr.mxu0 0.0
  %1562 = vmatpush2.msra.mxu0 0.0
  %1563 = vmatprep.subr.mxu0 0.0
  %1564 = vmatpush2.msra.mxu0 0.0
  %1565 = vmatprep.subr.mxu0 0.0
  %1566 = vmatpush2.msra.mxu0 0.0
  %1567 = vmatprep.subr.mxu0 0.0
  %1568 = vmatpush2.msra.mxu0 0.0
  %1569 = vmatprep.subr.mxu0 0.0
  %1570 = vmatpush2.msra.mxu0 0.0
  %1571 = vmatprep.subr.mxu0 0.0
  %1572 = vmatpush2.msra.mxu0 0.0
  %1573 = vmatprep.subr.mxu0 0.0
  %1574 = vmatpush2.msra.mxu0 0.0
  %1575 = vmatprep.subr.mxu0 0.0
  %1576 = vmatpush2.msra.mxu0 0.0
  %1577 = vmatprep.subr.mxu0 0.0
  %1578 = vmatpush2.msra.mxu0 0.0
  %1579 = vmatprep.mubr.f32.mxu0 0.0
  %1580 = vmatmul.mubr.f32.gmra.mxu0 %v1510
  %v1581 = vpop.f32.mrf.mxu0
  %v1582 = vadd.f32 %v1507, %v1581
  %v1583 = vpop.f32.mrf.mxu0
  %1584 = vmatprep.mubr.f32.mxu0 0.0
  %1585 = vmatmul.mubr.f32.gmra.mxu0 %v1513
  %v1586 = vpop.f32.mrf.mxu0
  %v1587 = vadd.f32 %v1507, %v1586
  %v1588 = vpop.f32.mrf.mxu0
  %1589 = vdwg.mxu0
  %v1590 = vadd.f32 %v44, %v1582
  %v1591 = vadd.f32 %v45, %v1587
  %v1592 = vld [vmem:[%s5] sm:$0x1]
  %v1593 = vld [vmem:[%s6] sm:$0x1]
  %v1594 = vsel %vm57, %v1590, 0.0
  %1595 = vadd.xlane.f32.xlu0 %v1594
  %v1596 = vpop.xlane.xlu0 %1595
  %v1597 = vsel %vm57, %v1591, 0.0
  %1598 = vadd.xlane.f32.xlu0 %v1597
  %v1599 = vpop.xlane.xlu0 %1598
  %v1600 = vrcp.pop 32.0
  %v1601 = vmul.f32 %v1596, %v1600
  %v1602 = vmul.f32 %v1599, %v1600
  %v1603 = vsub.f32 %v1590, %v1601
  %v1604 = vsub.f32 %v1591, %v1602
  %v1605 = vmul.f32 %v1603, %v1603
  %v1606 = vmul.f32 %v1604, %v1604
  %v1607 = vsel %vm57, %v1605, 0.0
  %1608 = vadd.xlane.f32.xlu0 %v1607
  %v1609 = vpop.xlane.xlu0 %1608
  %v1610 = vsel %vm57, %v1606, 0.0
  %1611 = vadd.xlane.f32.xlu0 %v1610
  %v1612 = vpop.xlane.xlu0 %1611
  %v1613 = vmul.f32 %v1609, %v1600
  %v1614 = vmul.f32 %v1612, %v1600
  %v1615 = vadd.f32 %v1613, 1e-05
  %v1616 = vadd.f32 %v1614, 1e-05
  %v1617 = vrsqrt.pop %v1615
  %v1618 = vrsqrt.pop %v1616
  %v1619 = vmul.f32 %v1603, %v1617
  %v1620 = vmul.f32 %v1604, %v1618
  %v1622 = vlaneseq
  %v1623 = vshrl.u32 %v1622, 7
  %v1624 = vsub.s32 0, %v1623
  %v1625 = vrot.slane %v1592, %v1624
  %v1627 = vmul.f32 %v1619, %v1625
  %v1628 = vmul.f32 %v1620, %v1625
  %v1630 = vlaneseq
  %v1631 = vshrl.u32 %v1630, 7
  %v1632 = vsub.s32 0, %v1631
  %v1633 = vrot.slane %v1593, %v1632
  %v1635 = vadd.f32 %v1627, %v1633
  %v1636 = vadd.f32 %v1628, %v1633
  %v1637 = vld [vmem:[%s7] sm:$0xff]
  %v1638 = vld [vmem:[%s7 + $0x8] sm:$0xff]
  %v1639 = vld [vmem:[%s7 + $0x10] sm:$0xff]
  %v1640 = vld [vmem:[%s7 + $0x18] sm:$0xff]
  %v1641 = vld [vmem:[%s8] sm:$0x1]
  %v1643 = vlaneseq
  %v1644 = vshrl.u32 %v1643, 7
  %v1645 = vsub.s32 0, %v1644
  %v1646 = vrot.slane %v1641, %v1645
  %v1649 = vsel %vm57, %v1635, 0
  %v1652 = vsel %vm57, %v1636, 0
  %1654 = vmatprep.subr.mxu0 0.0
  %1655 = vmatpush1.msra.mxu0 0.0
  %1656 = vmatprep.subr.mxu0 0.0
  %1657 = vmatpush1.msra.mxu0 0.0
  %1658 = vmatprep.subr.mxu0 0.0
  %1659 = vmatpush1.msra.mxu0 0.0
  %1660 = vmatprep.subr.mxu0 0.0
  %1661 = vmatpush1.msra.mxu0 0.0
  %1662 = vmatprep.subr.mxu0 0.0
  %1663 = vmatpush1.msra.mxu0 0.0
  %1664 = vmatprep.subr.mxu0 0.0
  %1665 = vmatpush1.msra.mxu0 0.0
  %1666 = vmatprep.subr.mxu0 0.0
  %1667 = vmatpush1.msra.mxu0 0.0
  %1668 = vmatprep.subr.mxu0 0.0
  %1669 = vmatpush1.msra.mxu0 0.0
  %1670 = vmatprep.subr.mxu0 0.0
  %1671 = vmatpush1.msra.mxu0 0.0
  %1672 = vmatprep.subr.mxu0 0.0
  %1673 = vmatpush1.msra.mxu0 0.0
  %1674 = vmatprep.subr.mxu0 0.0
  %1675 = vmatpush1.msra.mxu0 0.0
  %1676 = vmatprep.subr.mxu0 0.0
  %1677 = vmatpush1.msra.mxu0 0.0
  %1678 = vmatprep.subr.mxu0 0.0
  %1679 = vmatpush1.msra.mxu0 %v1640
  %1680 = vmatprep.subr.mxu0 0.0
  %1681 = vmatpush1.msra.mxu0 %v1639
  %1682 = vmatprep.subr.mxu0 0.0
  %1683 = vmatpush1.msra.mxu0 %v1638
  %1684 = vmatprep.subr.mxu0 0.0
  %1685 = vmatpush1.msra.mxu0 %v1637
  %1686 = vmatprep.subr.mxu0 0.0
  %1687 = vmatpush2.msra.mxu0 0.0
  %1688 = vmatprep.subr.mxu0 0.0
  %1689 = vmatpush2.msra.mxu0 0.0
  %1690 = vmatprep.subr.mxu0 0.0
  %1691 = vmatpush2.msra.mxu0 0.0
  %1692 = vmatprep.subr.mxu0 0.0
  %1693 = vmatpush2.msra.mxu0 0.0
  %1694 = vmatprep.subr.mxu0 0.0
  %1695 = vmatpush2.msra.mxu0 0.0
  %1696 = vmatprep.subr.mxu0 0.0
  %1697 = vmatpush2.msra.mxu0 0.0
  %1698 = vmatprep.subr.mxu0 0.0
  %1699 = vmatpush2.msra.mxu0 0.0
  %1700 = vmatprep.subr.mxu0 0.0
  %1701 = vmatpush2.msra.mxu0 0.0
  %1702 = vmatprep.subr.mxu0 0.0
  %1703 = vmatpush2.msra.mxu0 0.0
  %1704 = vmatprep.subr.mxu0 0.0
  %1705 = vmatpush2.msra.mxu0 0.0
  %1706 = vmatprep.subr.mxu0 0.0
  %1707 = vmatpush2.msra.mxu0 0.0
  %1708 = vmatprep.subr.mxu0 0.0
  %1709 = vmatpush2.msra.mxu0 0.0
  %1710 = vmatprep.subr.mxu0 0.0
  %1711 = vmatpush2.msra.mxu0 0.0
  %1712 = vmatprep.subr.mxu0 0.0
  %1713 = vmatpush2.msra.mxu0 0.0
  %1714 = vmatprep.subr.mxu0 0.0
  %1715 = vmatpush2.msra.mxu0 0.0
  %1716 = vmatprep.subr.mxu0 0.0
  %1717 = vmatpush2.msra.mxu0 0.0
  %1718 = vmatprep.mubr.f32.mxu0 0.0
  %1719 = vmatmul.mubr.f32.gmra.mxu0 %v1649
  %v1720 = vpop.f32.mrf.mxu0
  %v1721 = vadd.f32 %v1646, %v1720
  %v1722 = vpop.f32.mrf.mxu0
  %1723 = vmatprep.mubr.f32.mxu0 0.0
  %1724 = vmatmul.mubr.f32.gmra.mxu0 %v1652
  %v1725 = vpop.f32.mrf.mxu0
  %v1726 = vadd.f32 %v1646, %v1725
  %v1727 = vpop.f32.mrf.mxu0
  %1728 = vdwg.mxu0
  %v1729 = vmax.f32 %v1721, 0.0
  %v1730 = vmax.f32 %v1726, 0.0
  %v1731 = vld [vmem:[%s9] sm:$0xff]
  %v1732 = vld [vmem:[%s9 + $0x8] sm:$0xff]
  %v1733 = vld [vmem:[%s9 + $0x10] sm:$0xff]
  %v1734 = vld [vmem:[%s9 + $0x18] sm:$0xff]
  %v1735 = vld [vmem:[%s9 + $0x20] sm:$0xff]
  %v1736 = vld [vmem:[%s9 + $0x28] sm:$0xff]
  %v1737 = vld [vmem:[%s9 + $0x30] sm:$0xff]
  %v1738 = vld [vmem:[%s9 + $0x38] sm:$0xff]
  %v1739 = vld [vmem:[%s10] sm:$0x1]
  %v1741 = vlaneseq
  %v1742 = vshrl.u32 %v1741, 7
  %v1743 = vsub.s32 0, %v1742
  %v1744 = vrot.slane %v1739, %v1743
  %vm1746 = vcmask 523264
  %v1748 = vsel %vm1746, %v1729, 0
  %v1751 = vsel %vm1746, %v1730, 0
  %1753 = vmatprep.subr.mxu0 0.0
  %1754 = vmatpush1.msra.mxu0 0.0
  %1755 = vmatprep.subr.mxu0 0.0
  %1756 = vmatpush1.msra.mxu0 0.0
  %1757 = vmatprep.subr.mxu0 0.0
  %1758 = vmatpush1.msra.mxu0 0.0
  %1759 = vmatprep.subr.mxu0 0.0
  %1760 = vmatpush1.msra.mxu0 0.0
  %1761 = vmatprep.subr.mxu0 0.0
  %1762 = vmatpush1.msra.mxu0 0.0
  %1763 = vmatprep.subr.mxu0 0.0
  %1764 = vmatpush1.msra.mxu0 0.0
  %1765 = vmatprep.subr.mxu0 0.0
  %1766 = vmatpush1.msra.mxu0 0.0
  %1767 = vmatprep.subr.mxu0 0.0
  %1768 = vmatpush1.msra.mxu0 0.0
  %1769 = vmatprep.subr.mxu0 0.0
  %1770 = vmatpush1.msra.mxu0 %v1738
  %1771 = vmatprep.subr.mxu0 0.0
  %1772 = vmatpush1.msra.mxu0 %v1737
  %1773 = vmatprep.subr.mxu0 0.0
  %1774 = vmatpush1.msra.mxu0 %v1736
  %1775 = vmatprep.subr.mxu0 0.0
  %1776 = vmatpush1.msra.mxu0 %v1735
  %1777 = vmatprep.subr.mxu0 0.0
  %1778 = vmatpush1.msra.mxu0 %v1734
  %1779 = vmatprep.subr.mxu0 0.0
  %1780 = vmatpush1.msra.mxu0 %v1733
  %1781 = vmatprep.subr.mxu0 0.0
  %1782 = vmatpush1.msra.mxu0 %v1732
  %1783 = vmatprep.subr.mxu0 0.0
  %1784 = vmatpush1.msra.mxu0 %v1731
  %1785 = vmatprep.subr.mxu0 0.0
  %1786 = vmatpush2.msra.mxu0 0.0
  %1787 = vmatprep.subr.mxu0 0.0
  %1788 = vmatpush2.msra.mxu0 0.0
  %1789 = vmatprep.subr.mxu0 0.0
  %1790 = vmatpush2.msra.mxu0 0.0
  %1791 = vmatprep.subr.mxu0 0.0
  %1792 = vmatpush2.msra.mxu0 0.0
  %1793 = vmatprep.subr.mxu0 0.0
  %1794 = vmatpush2.msra.mxu0 0.0
  %1795 = vmatprep.subr.mxu0 0.0
  %1796 = vmatpush2.msra.mxu0 0.0
  %1797 = vmatprep.subr.mxu0 0.0
  %1798 = vmatpush2.msra.mxu0 0.0
  %1799 = vmatprep.subr.mxu0 0.0
  %1800 = vmatpush2.msra.mxu0 0.0
  %1801 = vmatprep.subr.mxu0 0.0
  %1802 = vmatpush2.msra.mxu0 0.0
  %1803 = vmatprep.subr.mxu0 0.0
  %1804 = vmatpush2.msra.mxu0 0.0
  %1805 = vmatprep.subr.mxu0 0.0
  %1806 = vmatpush2.msra.mxu0 0.0
  %1807 = vmatprep.subr.mxu0 0.0
  %1808 = vmatpush2.msra.mxu0 0.0
  %1809 = vmatprep.subr.mxu0 0.0
  %1810 = vmatpush2.msra.mxu0 0.0
  %1811 = vmatprep.subr.mxu0 0.0
  %1812 = vmatpush2.msra.mxu0 0.0
  %1813 = vmatprep.subr.mxu0 0.0
  %1814 = vmatpush2.msra.mxu0 0.0
  %1815 = vmatprep.subr.mxu0 0.0
  %1816 = vmatpush2.msra.mxu0 0.0
  %1817 = vmatprep.mubr.f32.mxu0 0.0
  %1818 = vmatmul.mubr.f32.gmra.mxu0 %v1748
  %v1819 = vpop.f32.mrf.mxu0
  %v1820 = vadd.f32 %v1744, %v1819
  %v1821 = vpop.f32.mrf.mxu0
  %1822 = vmatprep.mubr.f32.mxu0 0.0
  %1823 = vmatmul.mubr.f32.gmra.mxu0 %v1751
  %v1824 = vpop.f32.mrf.mxu0
  %v1825 = vadd.f32 %v1744, %v1824
  %v1826 = vpop.f32.mrf.mxu0
  %1827 = vdwg.mxu0
  %v1828 = vadd.f32 %v1635, %v1820
  %v1829 = vadd.f32 %v1636, %v1825
  %v1830 = vld [vmem:[%s11] sm:$0x1]
  %v1831 = vld [vmem:[%s12] sm:$0x1]
  %v1832 = vsel %vm57, %v1828, 0.0
  %1833 = vadd.xlane.f32.xlu0 %v1832
  %v1834 = vpop.xlane.xlu0 %1833
  %v1835 = vsel %vm57, %v1829, 0.0
  %1836 = vadd.xlane.f32.xlu0 %v1835
  %v1837 = vpop.xlane.xlu0 %1836
  %v1838 = vmul.f32 %v1834, %v1600
  %v1839 = vmul.f32 %v1837, %v1600
  %v1840 = vsub.f32 %v1828, %v1838
  %v1841 = vsub.f32 %v1829, %v1839
  %v1842 = vmul.f32 %v1840, %v1840
  %v1843 = vmul.f32 %v1841, %v1841
  %v1844 = vsel %vm57, %v1842, 0.0
  %1845 = vadd.xlane.f32.xlu0 %v1844
  %v1846 = vpop.xlane.xlu0 %1845
  %v1847 = vsel %vm57, %v1843, 0.0
  %1848 = vadd.xlane.f32.xlu0 %v1847
  %v1849 = vpop.xlane.xlu0 %1848
  %v1850 = vmul.f32 %v1846, %v1600
  %v1851 = vmul.f32 %v1849, %v1600
  %v1852 = vadd.f32 %v1850, 1e-05
  %v1853 = vadd.f32 %v1851, 1e-05
  %v1854 = vrsqrt.pop %v1852
  %v1855 = vrsqrt.pop %v1853
  %v1856 = vmul.f32 %v1840, %v1854
  %v1857 = vmul.f32 %v1841, %v1855
  %v1859 = vlaneseq
  %v1860 = vshrl.u32 %v1859, 7
  %v1861 = vsub.s32 0, %v1860
  %v1862 = vrot.slane %v1830, %v1861
  %v1864 = vmul.f32 %v1856, %v1862
  %v1865 = vmul.f32 %v1857, %v1862
  %v1867 = vlaneseq
  %v1868 = vshrl.u32 %v1867, 7
  %v1869 = vsub.s32 0, %v1868
  %v1870 = vrot.slane %v1831, %v1869
  %v1872 = vadd.f32 %v1864, %v1870
  %v1873 = vadd.f32 %v1865, %v1870
  %s1874 = scalar_lea.vmem %s1, 32
  %v1875 = vld [vmem:[%s1874] sm:$0xff]
  %v1876 = vld [vmem:[%s1874 + $0x8] sm:$0xff]
  %v1877 = vld [vmem:[%s1874 + $0x10] sm:$0xff]
  %v1878 = vld [vmem:[%s1874 + $0x18] sm:$0xff]
  %s1879 = scalar_lea.vmem %s2, 1
  %v1880 = vld [vmem:[%s1879] sm:$0x1]
  %v1882 = vlaneseq
  %v1883 = vshrl.u32 %v1882, 7
  %v1884 = vsub.s32 0, %v1883
  %v1885 = vrot.slane %v1880, %v1884
  %v1888 = vsel %vm57, %v1872, 0
  %v1891 = vsel %vm57, %v1873, 0
  %1893 = vmatprep.subr.mxu0 0.0
  %1894 = vmatpush1.msra.mxu0 0.0
  %1895 = vmatprep.subr.mxu0 0.0
  %1896 = vmatpush1.msra.mxu0 0.0
  %1897 = vmatprep.subr.mxu0 0.0
  %1898 = vmatpush1.msra.mxu0 0.0
  %1899 = vmatprep.subr.mxu0 0.0
  %1900 = vmatpush1.msra.mxu0 0.0
  %1901 = vmatprep.subr.mxu0 0.0
  %1902 = vmatpush1.msra.mxu0 0.0
  %1903 = vmatprep.subr.mxu0 0.0
  %1904 = vmatpush1.msra.mxu0 0.0
  %1905 = vmatprep.subr.mxu0 0.0
  %1906 = vmatpush1.msra.mxu0 0.0
  %1907 = vmatprep.subr.mxu0 0.0
  %1908 = vmatpush1.msra.mxu0 0.0
  %1909 = vmatprep.subr.mxu0 0.0
  %1910 = vmatpush1.msra.mxu0 0.0
  %1911 = vmatprep.subr.mxu0 0.0
  %1912 = vmatpush1.msra.mxu0 0.0
  %1913 = vmatprep.subr.mxu0 0.0
  %1914 = vmatpush1.msra.mxu0 0.0
  %1915 = vmatprep.subr.mxu0 0.0
  %1916 = vmatpush1.msra.mxu0 0.0
  %1917 = vmatprep.subr.mxu0 0.0
  %1918 = vmatpush1.msra.mxu0 %v1878
  %1919 = vmatprep.subr.mxu0 0.0
  %1920 = vmatpush1.msra.mxu0 %v1877
  %1921 = vmatprep.subr.mxu0 0.0
  %1922 = vmatpush1.msra.mxu0 %v1876
  %1923 = vmatprep.subr.mxu0 0.0
  %1924 = vmatpush1.msra.mxu0 %v1875
  %1925 = vmatprep.subr.mxu0 0.0
  %1926 = vmatpush2.msra.mxu0 0.0
  %1927 = vmatprep.subr.mxu0 0.0
  %1928 = vmatpush2.msra.mxu0 0.0
  %1929 = vmatprep.subr.mxu0 0.0
  %1930 = vmatpush2.msra.mxu0 0.0
  %1931 = vmatprep.subr.mxu0 0.0
  %1932 = vmatpush2.msra.mxu0 0.0
  %1933 = vmatprep.subr.mxu0 0.0
  %1934 = vmatpush2.msra.mxu0 0.0
  %1935 = vmatprep.subr.mxu0 0.0
  %1936 = vmatpush2.msra.mxu0 0.0
  %1937 = vmatprep.subr.mxu0 0.0
  %1938 = vmatpush2.msra.mxu0 0.0
  %1939 = vmatprep.subr.mxu0 0.0
  %1940 = vmatpush2.msra.mxu0 0.0
  %1941 = vmatprep.subr.mxu0 0.0
  %1942 = vmatpush2.msra.mxu0 0.0
  %1943 = vmatprep.subr.mxu0 0.0
  %1944 = vmatpush2.msra.mxu0 0.0
  %1945 = vmatprep.subr.mxu0 0.0
  %1946 = vmatpush2.msra.mxu0 0.0
  %1947 = vmatprep.subr.mxu0 0.0
  %1948 = vmatpush2.msra.mxu0 0.0
  %1949 = vmatprep.subr.mxu0 0.0
  %1950 = vmatpush2.msra.mxu0 0.0
  %1951 = vmatprep.subr.mxu0 0.0
  %1952 = vmatpush2.msra.mxu0 0.0
  %1953 = vmatprep.subr.mxu0 0.0
  %1954 = vmatpush2.msra.mxu0 0.0
  %1955 = vmatprep.subr.mxu0 0.0
  %1956 = vmatpush2.msra.mxu0 0.0
  %1957 = vmatprep.mubr.f32.mxu0 0.0
  %1958 = vmatmul.mubr.f32.gmra.mxu0 %v1888
  %v1959 = vpop.f32.mrf.mxu0
  %v1960 = vadd.f32 %v1885, %v1959
  %v1961 = vpop.f32.mrf.mxu0
  %1962 = vmatprep.mubr.f32.mxu0 0.0
  %1963 = vmatmul.mubr.f32.gmra.mxu0 %v1891
  %v1964 = vpop.f32.mrf.mxu0
  %v1965 = vadd.f32 %v1885, %v1964
  %v1966 = vpop.f32.mrf.mxu0
  %1967 = vdwg.mxu0
  %1970 = vrot.lane.b32.xlu0 %v1960, 120
  %v1971 = vpop.permute.xlu0 %1970
  %1972 = vrot.lane.b32.xlu0 %v1965, 120
  %v1973 = vpop.permute.xlu0 %1972
  %1974 = vrot.lane.b32.xlu0 %v1960, 112
  %v1975 = vpop.permute.xlu0 %1974
  %1976 = vrot.lane.b32.xlu0 %v1965, 112
  %v1977 = vpop.permute.xlu0 %1976
  %1978 = vrot.lane.b32.xlu0 %v1960, 104
  %v1979 = vpop.permute.xlu0 %1978
  %1980 = vrot.lane.b32.xlu0 %v1965, 104
  %v1981 = vpop.permute.xlu0 %1980
  %1982 = vrot.lane.b32.xlu0 %v1960, 96
  %v1983 = vpop.permute.xlu0 %1982
  %v1984 = vsel %vm155, %v1960, 0
  %v1986 = vsel %vm155, %v1983, 0
  %1988 = vmatprep.subr.mxu0 0.0
  %1989 = vmatpush1.xpose.msra.mxu0 0.0
  %1990 = vmatprep.subr.mxu0 0.0
  %1991 = vmatpush1.xpose.msra.mxu0 0.0
  %1992 = vmatprep.subr.mxu0 0.0
  %1993 = vmatpush1.xpose.msra.mxu0 0.0
  %1994 = vmatprep.subr.mxu0 0.0
  %1995 = vmatpush1.xpose.msra.mxu0 0.0
  %1996 = vmatprep.subr.mxu0 0.0
  %1997 = vmatpush1.xpose.msra.mxu0 0.0
  %1998 = vmatprep.subr.mxu0 0.0
  %1999 = vmatpush1.xpose.msra.mxu0 0.0
  %2000 = vmatprep.subr.mxu0 0.0
  %2001 = vmatpush1.xpose.msra.mxu0 0.0
  %2002 = vmatprep.subr.mxu0 0.0
  %2003 = vmatpush1.xpose.msra.mxu0 0.0
  %2004 = vmatprep.subr.mxu0 0.0
  %2005 = vmatpush1.xpose.msra.mxu0 0.0
  %2006 = vmatprep.subr.mxu0 0.0
  %2007 = vmatpush1.xpose.msra.mxu0 0.0
  %2008 = vmatprep.subr.mxu0 0.0
  %2009 = vmatpush1.xpose.msra.mxu0 0.0
  %2010 = vmatprep.subr.mxu0 0.0
  %2011 = vmatpush1.xpose.msra.mxu0 0.0
  %2012 = vmatprep.subr.mxu0 0.0
  %2013 = vmatpush1.xpose.msra.mxu0 0.0
  %2014 = vmatprep.subr.mxu0 0.0
  %2015 = vmatpush1.xpose.msra.mxu0 0.0
  %2016 = vmatprep.subr.mxu0 0.0
  %2017 = vmatpush1.xpose.msra.mxu0 0.0
  %2018 = vmatprep.subr.mxu0 0.0
  %2019 = vmatpush1.xpose.msra.mxu0 %v1986
  %2020 = vmatprep.subr.mxu0 0.0
  %2021 = vmatpush2.xpose.msra.mxu0 0.0
  %2022 = vmatprep.subr.mxu0 0.0
  %2023 = vmatpush2.xpose.msra.mxu0 0.0
  %2024 = vmatprep.subr.mxu0 0.0
  %2025 = vmatpush2.xpose.msra.mxu0 0.0
  %2026 = vmatprep.subr.mxu0 0.0
  %2027 = vmatpush2.xpose.msra.mxu0 0.0
  %2028 = vmatprep.subr.mxu0 0.0
  %2029 = vmatpush2.xpose.msra.mxu0 0.0
  %2030 = vmatprep.subr.mxu0 0.0
  %2031 = vmatpush2.xpose.msra.mxu0 0.0
  %2032 = vmatprep.subr.mxu0 0.0
  %2033 = vmatpush2.xpose.msra.mxu0 0.0
  %2034 = vmatprep.subr.mxu0 0.0
  %2035 = vmatpush2.xpose.msra.mxu0 0.0
  %2036 = vmatprep.subr.mxu0 0.0
  %2037 = vmatpush2.xpose.msra.mxu0 0.0
  %2038 = vmatprep.subr.mxu0 0.0
  %2039 = vmatpush2.xpose.msra.mxu0 0.0
  %2040 = vmatprep.subr.mxu0 0.0
  %2041 = vmatpush2.xpose.msra.mxu0 0.0
  %2042 = vmatprep.subr.mxu0 0.0
  %2043 = vmatpush2.xpose.msra.mxu0 0.0
  %2044 = vmatprep.subr.mxu0 0.0
  %2045 = vmatpush2.xpose.msra.mxu0 0.0
  %2046 = vmatprep.subr.mxu0 0.0
  %2047 = vmatpush2.xpose.msra.mxu0 0.0
  %2048 = vmatprep.subr.mxu0 0.0
  %2049 = vmatpush2.xpose.msra.mxu0 0.0
  %2050 = vmatprep.subr.mxu0 0.0
  %2051 = vmatpush2.xpose.msra.mxu0 0.0
  %2052 = vmatprep.mubr.f32.mxu0 0.0
  %2053 = vmatmul.mubr.f32.gmra.mxu0 %v1984
  %v2054 = vpop.f32.mrf.mxu0
  %v2055 = vadd.f32 0.0, %v2054
  %v2056 = vpop.f32.mrf.mxu0
  %2057 = vdwg.mxu0
  %2058 = vrot.lane.b32.xlu0 %v1965, 96
  %v2059 = vpop.permute.xlu0 %2058
  %v2060 = vsel %vm155, %v1965, 0
  %v2062 = vsel %vm155, %v2059, 0
  %2064 = vmatprep.subr.mxu0 0.0
  %2065 = vmatpush1.xpose.msra.mxu0 0.0
  %2066 = vmatprep.subr.mxu0 0.0
  %2067 = vmatpush1.xpose.msra.mxu0 0.0
  %2068 = vmatprep.subr.mxu0 0.0
  %2069 = vmatpush1.xpose.msra.mxu0 0.0
  %2070 = vmatprep.subr.mxu0 0.0
  %2071 = vmatpush1.xpose.msra.mxu0 0.0
  %2072 = vmatprep.subr.mxu0 0.0
  %2073 = vmatpush1.xpose.msra.mxu0 0.0
  %2074 = vmatprep.subr.mxu0 0.0
  %2075 = vmatpush1.xpose.msra.mxu0 0.0
  %2076 = vmatprep.subr.mxu0 0.0
  %2077 = vmatpush1.xpose.msra.mxu0 0.0
  %2078 = vmatprep.subr.mxu0 0.0
  %2079 = vmatpush1.xpose.msra.mxu0 0.0
  %2080 = vmatprep.subr.mxu0 0.0
  %2081 = vmatpush1.xpose.msra.mxu0 0.0
  %2082 = vmatprep.subr.mxu0 0.0
  %2083 = vmatpush1.xpose.msra.mxu0 0.0
  %2084 = vmatprep.subr.mxu0 0.0
  %2085 = vmatpush1.xpose.msra.mxu0 0.0
  %2086 = vmatprep.subr.mxu0 0.0
  %2087 = vmatpush1.xpose.msra.mxu0 0.0
  %2088 = vmatprep.subr.mxu0 0.0
  %2089 = vmatpush1.xpose.msra.mxu0 0.0
  %2090 = vmatprep.subr.mxu0 0.0
  %2091 = vmatpush1.xpose.msra.mxu0 0.0
  %2092 = vmatprep.subr.mxu0 0.0
  %2093 = vmatpush1.xpose.msra.mxu0 0.0
  %2094 = vmatprep.subr.mxu0 0.0
  %2095 = vmatpush1.xpose.msra.mxu0 %v2062
  %2096 = vmatprep.subr.mxu0 0.0
  %2097 = vmatpush2.xpose.msra.mxu0 0.0
  %2098 = vmatprep.subr.mxu0 0.0
  %2099 = vmatpush2.xpose.msra.mxu0 0.0
  %2100 = vmatprep.subr.mxu0 0.0
  %2101 = vmatpush2.xpose.msra.mxu0 0.0
  %2102 = vmatprep.subr.mxu0 0.0
  %2103 = vmatpush2.xpose.msra.mxu0 0.0
  %2104 = vmatprep.subr.mxu0 0.0
  %2105 = vmatpush2.xpose.msra.mxu0 0.0
  %2106 = vmatprep.subr.mxu0 0.0
  %2107 = vmatpush2.xpose.msra.mxu0 0.0
  %2108 = vmatprep.subr.mxu0 0.0
  %2109 = vmatpush2.xpose.msra.mxu0 0.0
  %2110 = vmatprep.subr.mxu0 0.0
  %2111 = vmatpush2.xpose.msra.mxu0 0.0
  %2112 = vmatprep.subr.mxu0 0.0
  %2113 = vmatpush2.xpose.msra.mxu0 0.0
  %2114 = vmatprep.subr.mxu0 0.0
  %2115 = vmatpush2.xpose.msra.mxu0 0.0
  %2116 = vmatprep.subr.mxu0 0.0
  %2117 = vmatpush2.xpose.msra.mxu0 0.0
  %2118 = vmatprep.subr.mxu0 0.0
  %2119 = vmatpush2.xpose.msra.mxu0 0.0
  %2120 = vmatprep.subr.mxu0 0.0
  %2121 = vmatpush2.xpose.msra.mxu0 0.0
  %2122 = vmatprep.subr.mxu0 0.0
  %2123 = vmatpush2.xpose.msra.mxu0 0.0
  %2124 = vmatprep.subr.mxu0 0.0
  %2125 = vmatpush2.xpose.msra.mxu0 0.0
  %2126 = vmatprep.subr.mxu0 0.0
  %2127 = vmatpush2.xpose.msra.mxu0 0.0
  %2128 = vmatprep.mubr.f32.mxu0 0.0
  %2129 = vmatmul.mubr.f32.gmra.mxu0 %v2060
  %v2130 = vpop.f32.mrf.mxu0
  %v2131 = vadd.f32 0.0, %v2130
  %v2132 = vpop.f32.mrf.mxu0
  %2133 = vdwg.mxu0
  %2134 = vrot.lane.b32.xlu0 %v1971, 96
  %v2135 = vpop.permute.xlu0 %2134
  %v2136 = vsel %vm155, %v1971, 0
  %v2138 = vsel %vm155, %v2135, 0
  %2140 = vmatprep.subr.mxu0 0.0
  %2141 = vmatpush1.xpose.msra.mxu0 0.0
  %2142 = vmatprep.subr.mxu0 0.0
  %2143 = vmatpush1.xpose.msra.mxu0 0.0
  %2144 = vmatprep.subr.mxu0 0.0
  %2145 = vmatpush1.xpose.msra.mxu0 0.0
  %2146 = vmatprep.subr.mxu0 0.0
  %2147 = vmatpush1.xpose.msra.mxu0 0.0
  %2148 = vmatprep.subr.mxu0 0.0
  %2149 = vmatpush1.xpose.msra.mxu0 0.0
  %2150 = vmatprep.subr.mxu0 0.0
  %2151 = vmatpush1.xpose.msra.mxu0 0.0
  %2152 = vmatprep.subr.mxu0 0.0
  %2153 = vmatpush1.xpose.msra.mxu0 0.0
  %2154 = vmatprep.subr.mxu0 0.0
  %2155 = vmatpush1.xpose.msra.mxu0 0.0
  %2156 = vmatprep.subr.mxu0 0.0
  %2157 = vmatpush1.xpose.msra.mxu0 0.0
  %2158 = vmatprep.subr.mxu0 0.0
  %2159 = vmatpush1.xpose.msra.mxu0 0.0
  %2160 = vmatprep.subr.mxu0 0.0
  %2161 = vmatpush1.xpose.msra.mxu0 0.0
  %2162 = vmatprep.subr.mxu0 0.0
  %2163 = vmatpush1.xpose.msra.mxu0 0.0
  %2164 = vmatprep.subr.mxu0 0.0
  %2165 = vmatpush1.xpose.msra.mxu0 0.0
  %2166 = vmatprep.subr.mxu0 0.0
  %2167 = vmatpush1.xpose.msra.mxu0 0.0
  %2168 = vmatprep.subr.mxu0 0.0
  %2169 = vmatpush1.xpose.msra.mxu0 0.0
  %2170 = vmatprep.subr.mxu0 0.0
  %2171 = vmatpush1.xpose.msra.mxu0 %v2138
  %2172 = vmatprep.subr.mxu0 0.0
  %2173 = vmatpush2.xpose.msra.mxu0 0.0
  %2174 = vmatprep.subr.mxu0 0.0
  %2175 = vmatpush2.xpose.msra.mxu0 0.0
  %2176 = vmatprep.subr.mxu0 0.0
  %2177 = vmatpush2.xpose.msra.mxu0 0.0
  %2178 = vmatprep.subr.mxu0 0.0
  %2179 = vmatpush2.xpose.msra.mxu0 0.0
  %2180 = vmatprep.subr.mxu0 0.0
  %2181 = vmatpush2.xpose.msra.mxu0 0.0
  %2182 = vmatprep.subr.mxu0 0.0
  %2183 = vmatpush2.xpose.msra.mxu0 0.0
  %2184 = vmatprep.subr.mxu0 0.0
  %2185 = vmatpush2.xpose.msra.mxu0 0.0
  %2186 = vmatprep.subr.mxu0 0.0
  %2187 = vmatpush2.xpose.msra.mxu0 0.0
  %2188 = vmatprep.subr.mxu0 0.0
  %2189 = vmatpush2.xpose.msra.mxu0 0.0
  %2190 = vmatprep.subr.mxu0 0.0
  %2191 = vmatpush2.xpose.msra.mxu0 0.0
  %2192 = vmatprep.subr.mxu0 0.0
  %2193 = vmatpush2.xpose.msra.mxu0 0.0
  %2194 = vmatprep.subr.mxu0 0.0
  %2195 = vmatpush2.xpose.msra.mxu0 0.0
  %2196 = vmatprep.subr.mxu0 0.0
  %2197 = vmatpush2.xpose.msra.mxu0 0.0
  %2198 = vmatprep.subr.mxu0 0.0
  %2199 = vmatpush2.xpose.msra.mxu0 0.0
  %2200 = vmatprep.subr.mxu0 0.0
  %2201 = vmatpush2.xpose.msra.mxu0 0.0
  %2202 = vmatprep.subr.mxu0 0.0
  %2203 = vmatpush2.xpose.msra.mxu0 0.0
  %2204 = vmatprep.mubr.f32.mxu0 0.0
  %2205 = vmatmul.mubr.f32.gmra.mxu0 %v2136
  %v2206 = vpop.f32.mrf.mxu0
  %v2207 = vadd.f32 0.0, %v2206
  %v2208 = vpop.f32.mrf.mxu0
  %2209 = vdwg.mxu0
  %2210 = vrot.lane.b32.xlu0 %v1973, 96
  %v2211 = vpop.permute.xlu0 %2210
  %v2212 = vsel %vm155, %v1973, 0
  %v2214 = vsel %vm155, %v2211, 0
  %2216 = vmatprep.subr.mxu0 0.0
  %2217 = vmatpush1.xpose.msra.mxu0 0.0
  %2218 = vmatprep.subr.mxu0 0.0
  %2219 = vmatpush1.xpose.msra.mxu0 0.0
  %2220 = vmatprep.subr.mxu0 0.0
  %2221 = vmatpush1.xpose.msra.mxu0 0.0
  %2222 = vmatprep.subr.mxu0 0.0
  %2223 = vmatpush1.xpose.msra.mxu0 0.0
  %2224 = vmatprep.subr.mxu0 0.0
  %2225 = vmatpush1.xpose.msra.mxu0 0.0
  %2226 = vmatprep.subr.mxu0 0.0
  %2227 = vmatpush1.xpose.msra.mxu0 0.0
  %2228 = vmatprep.subr.mxu0 0.0
  %2229 = vmatpush1.xpose.msra.mxu0 0.0
  %2230 = vmatprep.subr.mxu0 0.0
  %2231 = vmatpush1.xpose.msra.mxu0 0.0
  %2232 = vmatprep.subr.mxu0 0.0
  %2233 = vmatpush1.xpose.msra.mxu0 0.0
  %2234 = vmatprep.subr.mxu0 0.0
  %2235 = vmatpush1.xpose.msra.mxu0 0.0
  %2236 = vmatprep.subr.mxu0 0.0
  %2237 = vmatpush1.xpose.msra.mxu0 0.0
  %2238 = vmatprep.subr.mxu0 0.0
  %2239 = vmatpush1.xpose.msra.mxu0 0.0
  %2240 = vmatprep.subr.mxu0 0.0
  %2241 = vmatpush1.xpose.msra.mxu0 0.0
  %2242 = vmatprep.subr.mxu0 0.0
  %2243 = vmatpush1.xpose.msra.mxu0 0.0
  %2244 = vmatprep.subr.mxu0 0.0
  %2245 = vmatpush1.xpose.msra.mxu0 0.0
  %2246 = vmatprep.subr.mxu0 0.0
  %2247 = vmatpush1.xpose.msra.mxu0 %v2214
  %2248 = vmatprep.subr.mxu0 0.0
  %2249 = vmatpush2.xpose.msra.mxu0 0.0
  %2250 = vmatprep.subr.mxu0 0.0
  %2251 = vmatpush2.xpose.msra.mxu0 0.0
  %2252 = vmatprep.subr.mxu0 0.0
  %2253 = vmatpush2.xpose.msra.mxu0 0.0
  %2254 = vmatprep.subr.mxu0 0.0
  %2255 = vmatpush2.xpose.msra.mxu0 0.0
  %2256 = vmatprep.subr.mxu0 0.0
  %2257 = vmatpush2.xpose.msra.mxu0 0.0
  %2258 = vmatprep.subr.mxu0 0.0
  %2259 = vmatpush2.xpose.msra.mxu0 0.0
  %2260 = vmatprep.subr.mxu0 0.0
  %2261 = vmatpush2.xpose.msra.mxu0 0.0
  %2262 = vmatprep.subr.mxu0 0.0
  %2263 = vmatpush2.xpose.msra.mxu0 0.0
  %2264 = vmatprep.subr.mxu0 0.0
  %2265 = vmatpush2.xpose.msra.mxu0 0.0
  %2266 = vmatprep.subr.mxu0 0.0
  %2267 = vmatpush2.xpose.msra.mxu0 0.0
  %2268 = vmatprep.subr.mxu0 0.0
  %2269 = vmatpush2.xpose.msra.mxu0 0.0
  %2270 = vmatprep.subr.mxu0 0.0
  %2271 = vmatpush2.xpose.msra.mxu0 0.0
  %2272 = vmatprep.subr.mxu0 0.0
  %2273 = vmatpush2.xpose.msra.mxu0 0.0
  %2274 = vmatprep.subr.mxu0 0.0
  %2275 = vmatpush2.xpose.msra.mxu0 0.0
  %2276 = vmatprep.subr.mxu0 0.0
  %2277 = vmatpush2.xpose.msra.mxu0 0.0
  %2278 = vmatprep.subr.mxu0 0.0
  %2279 = vmatpush2.xpose.msra.mxu0 0.0
  %2280 = vmatprep.mubr.f32.mxu0 0.0
  %2281 = vmatmul.mubr.f32.gmra.mxu0 %v2212
  %v2282 = vpop.f32.mrf.mxu0
  %v2283 = vadd.f32 0.0, %v2282
  %v2284 = vpop.f32.mrf.mxu0
  %2285 = vdwg.mxu0
  %2286 = vrot.lane.b32.xlu0 %v1975, 96
  %v2287 = vpop.permute.xlu0 %2286
  %v2288 = vsel %vm155, %v1975, 0
  %v2290 = vsel %vm155, %v2287, 0
  %2292 = vmatprep.subr.mxu0 0.0
  %2293 = vmatpush1.xpose.msra.mxu0 0.0
  %2294 = vmatprep.subr.mxu0 0.0
  %2295 = vmatpush1.xpose.msra.mxu0 0.0
  %2296 = vmatprep.subr.mxu0 0.0
  %2297 = vmatpush1.xpose.msra.mxu0 0.0
  %2298 = vmatprep.subr.mxu0 0.0
  %2299 = vmatpush1.xpose.msra.mxu0 0.0
  %2300 = vmatprep.subr.mxu0 0.0
  %2301 = vmatpush1.xpose.msra.mxu0 0.0
  %2302 = vmatprep.subr.mxu0 0.0
  %2303 = vmatpush1.xpose.msra.mxu0 0.0
  %2304 = vmatprep.subr.mxu0 0.0
  %2305 = vmatpush1.xpose.msra.mxu0 0.0
  %2306 = vmatprep.subr.mxu0 0.0
  %2307 = vmatpush1.xpose.msra.mxu0 0.0
  %2308 = vmatprep.subr.mxu0 0.0
  %2309 = vmatpush1.xpose.msra.mxu0 0.0
  %2310 = vmatprep.subr.mxu0 0.0
  %2311 = vmatpush1.xpose.msra.mxu0 0.0
  %2312 = vmatprep.subr.mxu0 0.0
  %2313 = vmatpush1.xpose.msra.mxu0 0.0
  %2314 = vmatprep.subr.mxu0 0.0
  %2315 = vmatpush1.xpose.msra.mxu0 0.0
  %2316 = vmatprep.subr.mxu0 0.0
  %2317 = vmatpush1.xpose.msra.mxu0 0.0
  %2318 = vmatprep.subr.mxu0 0.0
  %2319 = vmatpush1.xpose.msra.mxu0 0.0
  %2320 = vmatprep.subr.mxu0 0.0
  %2321 = vmatpush1.xpose.msra.mxu0 0.0
  %2322 = vmatprep.subr.mxu0 0.0
  %2323 = vmatpush1.xpose.msra.mxu0 %v2290
  %2324 = vmatprep.subr.mxu0 0.0
  %2325 = vmatpush2.xpose.msra.mxu0 0.0
  %2326 = vmatprep.subr.mxu0 0.0
  %2327 = vmatpush2.xpose.msra.mxu0 0.0
  %2328 = vmatprep.subr.mxu0 0.0
  %2329 = vmatpush2.xpose.msra.mxu0 0.0
  %2330 = vmatprep.subr.mxu0 0.0
  %2331 = vmatpush2.xpose.msra.mxu0 0.0
  %2332 = vmatprep.subr.mxu0 0.0
  %2333 = vmatpush2.xpose.msra.mxu0 0.0
  %2334 = vmatprep.subr.mxu0 0.0
  %2335 = vmatpush2.xpose.msra.mxu0 0.0
  %2336 = vmatprep.subr.mxu0 0.0
  %2337 = vmatpush2.xpose.msra.mxu0 0.0
  %2338 = vmatprep.subr.mxu0 0.0
  %2339 = vmatpush2.xpose.msra.mxu0 0.0
  %2340 = vmatprep.subr.mxu0 0.0
  %2341 = vmatpush2.xpose.msra.mxu0 0.0
  %2342 = vmatprep.subr.mxu0 0.0
  %2343 = vmatpush2.xpose.msra.mxu0 0.0
  %2344 = vmatprep.subr.mxu0 0.0
  %2345 = vmatpush2.xpose.msra.mxu0 0.0
  %2346 = vmatprep.subr.mxu0 0.0
  %2347 = vmatpush2.xpose.msra.mxu0 0.0
  %2348 = vmatprep.subr.mxu0 0.0
  %2349 = vmatpush2.xpose.msra.mxu0 0.0
  %2350 = vmatprep.subr.mxu0 0.0
  %2351 = vmatpush2.xpose.msra.mxu0 0.0
  %2352 = vmatprep.subr.mxu0 0.0
  %2353 = vmatpush2.xpose.msra.mxu0 0.0
  %2354 = vmatprep.subr.mxu0 0.0
  %2355 = vmatpush2.xpose.msra.mxu0 0.0
  %2356 = vmatprep.mubr.f32.mxu0 0.0
  %2357 = vmatmul.mubr.f32.gmra.mxu0 %v2288
  %v2358 = vpop.f32.mrf.mxu0
  %v2359 = vadd.f32 0.0, %v2358
  %v2360 = vpop.f32.mrf.mxu0
  %2361 = vdwg.mxu0
  %2362 = vrot.lane.b32.xlu0 %v1977, 96
  %v2363 = vpop.permute.xlu0 %2362
  %v2364 = vsel %vm155, %v1977, 0
  %v2366 = vsel %vm155, %v2363, 0
  %2368 = vmatprep.subr.mxu0 0.0
  %2369 = vmatpush1.xpose.msra.mxu0 0.0
  %2370 = vmatprep.subr.mxu0 0.0
  %2371 = vmatpush1.xpose.msra.mxu0 0.0
  %2372 = vmatprep.subr.mxu0 0.0
  %2373 = vmatpush1.xpose.msra.mxu0 0.0
  %2374 = vmatprep.subr.mxu0 0.0
  %2375 = vmatpush1.xpose.msra.mxu0 0.0
  %2376 = vmatprep.subr.mxu0 0.0
  %2377 = vmatpush1.xpose.msra.mxu0 0.0
  %2378 = vmatprep.subr.mxu0 0.0
  %2379 = vmatpush1.xpose.msra.mxu0 0.0
  %2380 = vmatprep.subr.mxu0 0.0
  %2381 = vmatpush1.xpose.msra.mxu0 0.0
  %2382 = vmatprep.subr.mxu0 0.0
  %2383 = vmatpush1.xpose.msra.mxu0 0.0
  %2384 = vmatprep.subr.mxu0 0.0
  %2385 = vmatpush1.xpose.msra.mxu0 0.0
  %2386 = vmatprep.subr.mxu0 0.0
  %2387 = vmatpush1.xpose.msra.mxu0 0.0
  %2388 = vmatprep.subr.mxu0 0.0
  %2389 = vmatpush1.xpose.msra.mxu0 0.0
  %2390 = vmatprep.subr.mxu0 0.0
  %2391 = vmatpush1.xpose.msra.mxu0 0.0
  %2392 = vmatprep.subr.mxu0 0.0
  %2393 = vmatpush1.xpose.msra.mxu0 0.0
  %2394 = vmatprep.subr.mxu0 0.0
  %2395 = vmatpush1.xpose.msra.mxu0 0.0
  %2396 = vmatprep.subr.mxu0 0.0
  %2397 = vmatpush1.xpose.msra.mxu0 0.0
  %2398 = vmatprep.subr.mxu0 0.0
  %2399 = vmatpush1.xpose.msra.mxu0 %v2366
  %2400 = vmatprep.subr.mxu0 0.0
  %2401 = vmatpush2.xpose.msra.mxu0 0.0
  %2402 = vmatprep.subr.mxu0 0.0
  %2403 = vmatpush2.xpose.msra.mxu0 0.0
  %2404 = vmatprep.subr.mxu0 0.0
  %2405 = vmatpush2.xpose.msra.mxu0 0.0
  %2406 = vmatprep.subr.mxu0 0.0
  %2407 = vmatpush2.xpose.msra.mxu0 0.0
  %2408 = vmatprep.subr.mxu0 0.0
  %2409 = vmatpush2.xpose.msra.mxu0 0.0
  %2410 = vmatprep.subr.mxu0 0.0
  %2411 = vmatpush2.xpose.msra.mxu0 0.0
  %2412 = vmatprep.subr.mxu0 0.0
  %2413 = vmatpush2.xpose.msra.mxu0 0.0
  %2414 = vmatprep.subr.mxu0 0.0
  %2415 = vmatpush2.xpose.msra.mxu0 0.0
  %2416 = vmatprep.subr.mxu0 0.0
  %2417 = vmatpush2.xpose.msra.mxu0 0.0
  %2418 = vmatprep.subr.mxu0 0.0
  %2419 = vmatpush2.xpose.msra.mxu0 0.0
  %2420 = vmatprep.subr.mxu0 0.0
  %2421 = vmatpush2.xpose.msra.mxu0 0.0
  %2422 = vmatprep.subr.mxu0 0.0
  %2423 = vmatpush2.xpose.msra.mxu0 0.0
  %2424 = vmatprep.subr.mxu0 0.0
  %2425 = vmatpush2.xpose.msra.mxu0 0.0
  %2426 = vmatprep.subr.mxu0 0.0
  %2427 = vmatpush2.xpose.msra.mxu0 0.0
  %2428 = vmatprep.subr.mxu0 0.0
  %2429 = vmatpush2.xpose.msra.mxu0 0.0
  %2430 = vmatprep.subr.mxu0 0.0
  %2431 = vmatpush2.xpose.msra.mxu0 0.0
  %2432 = vmatprep.mubr.f32.mxu0 0.0
  %2433 = vmatmul.mubr.f32.gmra.mxu0 %v2364
  %v2434 = vpop.f32.mrf.mxu0
  %v2435 = vadd.f32 0.0, %v2434
  %v2436 = vpop.f32.mrf.mxu0
  %2437 = vdwg.mxu0
  %2438 = vrot.lane.b32.xlu0 %v1979, 96
  %v2439 = vpop.permute.xlu0 %2438
  %v2440 = vsel %vm155, %v1979, 0
  %v2442 = vsel %vm155, %v2439, 0
  %2444 = vmatprep.subr.mxu0 0.0
  %2445 = vmatpush1.xpose.msra.mxu0 0.0
  %2446 = vmatprep.subr.mxu0 0.0
  %2447 = vmatpush1.xpose.msra.mxu0 0.0
  %2448 = vmatprep.subr.mxu0 0.0
  %2449 = vmatpush1.xpose.msra.mxu0 0.0
  %2450 = vmatprep.subr.mxu0 0.0
  %2451 = vmatpush1.xpose.msra.mxu0 0.0
  %2452 = vmatprep.subr.mxu0 0.0
  %2453 = vmatpush1.xpose.msra.mxu0 0.0
  %2454 = vmatprep.subr.mxu0 0.0
  %2455 = vmatpush1.xpose.msra.mxu0 0.0
  %2456 = vmatprep.subr.mxu0 0.0
  %2457 = vmatpush1.xpose.msra.mxu0 0.0
  %2458 = vmatprep.subr.mxu0 0.0
  %2459 = vmatpush1.xpose.msra.mxu0 0.0
  %2460 = vmatprep.subr.mxu0 0.0
  %2461 = vmatpush1.xpose.msra.mxu0 0.0
  %2462 = vmatprep.subr.mxu0 0.0
  %2463 = vmatpush1.xpose.msra.mxu0 0.0
  %2464 = vmatprep.subr.mxu0 0.0
  %2465 = vmatpush1.xpose.msra.mxu0 0.0
  %2466 = vmatprep.subr.mxu0 0.0
  %2467 = vmatpush1.xpose.msra.mxu0 0.0
  %2468 = vmatprep.subr.mxu0 0.0
  %2469 = vmatpush1.xpose.msra.mxu0 0.0
  %2470 = vmatprep.subr.mxu0 0.0
  %2471 = vmatpush1.xpose.msra.mxu0 0.0
  %2472 = vmatprep.subr.mxu0 0.0
  %2473 = vmatpush1.xpose.msra.mxu0 0.0
  %2474 = vmatprep.subr.mxu0 0.0
  %2475 = vmatpush1.xpose.msra.mxu0 %v2442
  %2476 = vmatprep.subr.mxu0 0.0
  %2477 = vmatpush2.xpose.msra.mxu0 0.0
  %2478 = vmatprep.subr.mxu0 0.0
  %2479 = vmatpush2.xpose.msra.mxu0 0.0
  %2480 = vmatprep.subr.mxu0 0.0
  %2481 = vmatpush2.xpose.msra.mxu0 0.0
  %2482 = vmatprep.subr.mxu0 0.0
  %2483 = vmatpush2.xpose.msra.mxu0 0.0
  %2484 = vmatprep.subr.mxu0 0.0
  %2485 = vmatpush2.xpose.msra.mxu0 0.0
  %2486 = vmatprep.subr.mxu0 0.0
  %2487 = vmatpush2.xpose.msra.mxu0 0.0
  %2488 = vmatprep.subr.mxu0 0.0
  %2489 = vmatpush2.xpose.msra.mxu0 0.0
  %2490 = vmatprep.subr.mxu0 0.0
  %2491 = vmatpush2.xpose.msra.mxu0 0.0
  %2492 = vmatprep.subr.mxu0 0.0
  %2493 = vmatpush2.xpose.msra.mxu0 0.0
  %2494 = vmatprep.subr.mxu0 0.0
  %2495 = vmatpush2.xpose.msra.mxu0 0.0
  %2496 = vmatprep.subr.mxu0 0.0
  %2497 = vmatpush2.xpose.msra.mxu0 0.0
  %2498 = vmatprep.subr.mxu0 0.0
  %2499 = vmatpush2.xpose.msra.mxu0 0.0
  %2500 = vmatprep.subr.mxu0 0.0
  %2501 = vmatpush2.xpose.msra.mxu0 0.0
  %2502 = vmatprep.subr.mxu0 0.0
  %2503 = vmatpush2.xpose.msra.mxu0 0.0
  %2504 = vmatprep.subr.mxu0 0.0
  %2505 = vmatpush2.xpose.msra.mxu0 0.0
  %2506 = vmatprep.subr.mxu0 0.0
  %2507 = vmatpush2.xpose.msra.mxu0 0.0
  %2508 = vmatprep.mubr.f32.mxu0 0.0
  %2509 = vmatmul.mubr.f32.gmra.mxu0 %v2440
  %v2510 = vpop.f32.mrf.mxu0
  %v2511 = vadd.f32 0.0, %v2510
  %v2512 = vpop.f32.mrf.mxu0
  %2513 = vdwg.mxu0
  %2514 = vrot.lane.b32.xlu0 %v1981, 96
  %v2515 = vpop.permute.xlu0 %2514
  %v2516 = vsel %vm155, %v1981, 0
  %v2518 = vsel %vm155, %v2515, 0
  %2520 = vmatprep.subr.mxu0 0.0
  %2521 = vmatpush1.xpose.msra.mxu0 0.0
  %2522 = vmatprep.subr.mxu0 0.0
  %2523 = vmatpush1.xpose.msra.mxu0 0.0
  %2524 = vmatprep.subr.mxu0 0.0
  %2525 = vmatpush1.xpose.msra.mxu0 0.0
  %2526 = vmatprep.subr.mxu0 0.0
  %2527 = vmatpush1.xpose.msra.mxu0 0.0
  %2528 = vmatprep.subr.mxu0 0.0
  %2529 = vmatpush1.xpose.msra.mxu0 0.0
  %2530 = vmatprep.subr.mxu0 0.0
  %2531 = vmatpush1.xpose.msra.mxu0 0.0
  %2532 = vmatprep.subr.mxu0 0.0
  %2533 = vmatpush1.xpose.msra.mxu0 0.0
  %2534 = vmatprep.subr.mxu0 0.0
  %2535 = vmatpush1.xpose.msra.mxu0 0.0
  %2536 = vmatprep.subr.mxu0 0.0
  %2537 = vmatpush1.xpose.msra.mxu0 0.0
  %2538 = vmatprep.subr.mxu0 0.0
  %2539 = vmatpush1.xpose.msra.mxu0 0.0
  %2540 = vmatprep.subr.mxu0 0.0
  %2541 = vmatpush1.xpose.msra.mxu0 0.0
  %2542 = vmatprep.subr.mxu0 0.0
  %2543 = vmatpush1.xpose.msra.mxu0 0.0
  %2544 = vmatprep.subr.mxu0 0.0
  %2545 = vmatpush1.xpose.msra.mxu0 0.0
  %2546 = vmatprep.subr.mxu0 0.0
  %2547 = vmatpush1.xpose.msra.mxu0 0.0
  %2548 = vmatprep.subr.mxu0 0.0
  %2549 = vmatpush1.xpose.msra.mxu0 0.0
  %2550 = vmatprep.subr.mxu0 0.0
  %2551 = vmatpush1.xpose.msra.mxu0 %v2518
  %2552 = vmatprep.subr.mxu0 0.0
  %2553 = vmatpush2.xpose.msra.mxu0 0.0
  %2554 = vmatprep.subr.mxu0 0.0
  %2555 = vmatpush2.xpose.msra.mxu0 0.0
  %2556 = vmatprep.subr.mxu0 0.0
  %2557 = vmatpush2.xpose.msra.mxu0 0.0
  %2558 = vmatprep.subr.mxu0 0.0
  %2559 = vmatpush2.xpose.msra.mxu0 0.0
  %2560 = vmatprep.subr.mxu0 0.0
  %2561 = vmatpush2.xpose.msra.mxu0 0.0
  %2562 = vmatprep.subr.mxu0 0.0
  %2563 = vmatpush2.xpose.msra.mxu0 0.0
  %2564 = vmatprep.subr.mxu0 0.0
  %2565 = vmatpush2.xpose.msra.mxu0 0.0
  %2566 = vmatprep.subr.mxu0 0.0
  %2567 = vmatpush2.xpose.msra.mxu0 0.0
  %2568 = vmatprep.subr.mxu0 0.0
  %2569 = vmatpush2.xpose.msra.mxu0 0.0
  %2570 = vmatprep.subr.mxu0 0.0
  %2571 = vmatpush2.xpose.msra.mxu0 0.0
  %2572 = vmatprep.subr.mxu0 0.0
  %2573 = vmatpush2.xpose.msra.mxu0 0.0
  %2574 = vmatprep.subr.mxu0 0.0
  %2575 = vmatpush2.xpose.msra.mxu0 0.0
  %2576 = vmatprep.subr.mxu0 0.0
  %2577 = vmatpush2.xpose.msra.mxu0 0.0
  %2578 = vmatprep.subr.mxu0 0.0
  %2579 = vmatpush2.xpose.msra.mxu0 0.0
  %2580 = vmatprep.subr.mxu0 0.0
  %2581 = vmatpush2.xpose.msra.mxu0 0.0
  %2582 = vmatprep.subr.mxu0 0.0
  %2583 = vmatpush2.xpose.msra.mxu0 0.0
  %2584 = vmatprep.mubr.f32.mxu0 0.0
  %2585 = vmatmul.mubr.f32.gmra.mxu0 %v2516
  %v2586 = vpop.f32.mrf.mxu0
  %v2587 = vadd.f32 0.0, %v2586
  %v2588 = vpop.f32.mrf.mxu0
  %2589 = vdwg.mxu0
  %v2590 = vmul.f32 %v2055, 0.35355338
  %v2591 = vmul.f32 %v2131, 0.35355338
  %v2592 = vmul.f32 %v2207, 0.35355338
  %v2593 = vmul.f32 %v2283, 0.35355338
  %v2594 = vmul.f32 %v2359, 0.35355338
  %v2595 = vmul.f32 %v2435, 0.35355338
  %v2596 = vmul.f32 %v2511, 0.35355338
  %v2597 = vmul.f32 %v2587, 0.35355338
  %v2598 = vsel %vm155, %v2590, -inf
  %2599 = vmax.xlane.f32.xlu0 %v2598
  %v2600 = vpop.xlane.xlu0 %2599
  %v2601 = vsel %vm155, %v2591, -inf
  %2602 = vmax.xlane.f32.xlu0 %v2601
  %v2603 = vpop.xlane.xlu0 %2602
  %v2604 = vsel %vm155, %v2592, -inf
  %2605 = vmax.xlane.f32.xlu0 %v2604
  %v2606 = vpop.xlane.xlu0 %2605
  %v2607 = vsel %vm155, %v2593, -inf
  %2608 = vmax.xlane.f32.xlu0 %v2607
  %v2609 = vpop.xlane.xlu0 %2608
  %v2610 = vsel %vm155, %v2594, -inf
  %2611 = vmax.xlane.f32.xlu0 %v2610
  %v2612 = vpop.xlane.xlu0 %2611
  %v2613 = vsel %vm155, %v2595, -inf
  %2614 = vmax.xlane.f32.xlu0 %v2613
  %v2615 = vpop.xlane.xlu0 %2614
  %v2616 = vsel %vm155, %v2596, -inf
  %2617 = vmax.xlane.f32.xlu0 %v2616
  %v2618 = vpop.xlane.xlu0 %2617
  %v2619 = vsel %vm155, %v2597, -inf
  %2620 = vmax.xlane.f32.xlu0 %v2619
  %v2621 = vpop.xlane.xlu0 %2620
  %v2622 = vsub.f32 %v2590, %v2600
  %v2623 = vsub.f32 %v2591, %v2603
  %v2624 = vsub.f32 %v2592, %v2606
  %v2625 = vsub.f32 %v2593, %v2609
  %v2626 = vsub.f32 %v2594, %v2612
  %v2627 = vsub.f32 %v2595, %v2615
  %v2628 = vsub.f32 %v2596, %v2618
  %v2629 = vsub.f32 %v2597, %v2621
  %v2630 = vmul.f32 %v2622, 1.442695
  %v2631 = vpow.pop %v2630
  %v2632 = vmul.f32 %v2623, 1.442695
  %v2633 = vpow.pop %v2632
  %v2634 = vmul.f32 %v2624, 1.442695
  %v2635 = vpow.pop %v2634
  %v2636 = vmul.f32 %v2625, 1.442695
  %v2637 = vpow.pop %v2636
  %v2638 = vmul.f32 %v2626, 1.442695
  %v2639 = vpow.pop %v2638
  %v2640 = vmul.f32 %v2627, 1.442695
  %v2641 = vpow.pop %v2640
  %v2642 = vmul.f32 %v2628, 1.442695
  %v2643 = vpow.pop %v2642
  %v2644 = vmul.f32 %v2629, 1.442695
  %v2645 = vpow.pop %v2644
  %v2646 = vsel %vm155, %v2631, 0.0
  %2647 = vadd.xlane.f32.xlu0 %v2646
  %v2648 = vpop.xlane.xlu0 %2647
  %v2649 = vsel %vm155, %v2633, 0.0
  %2650 = vadd.xlane.f32.xlu0 %v2649
  %v2651 = vpop.xlane.xlu0 %2650
  %v2652 = vsel %vm155, %v2635, 0.0
  %2653 = vadd.xlane.f32.xlu0 %v2652
  %v2654 = vpop.xlane.xlu0 %2653
  %v2655 = vsel %vm155, %v2637, 0.0
  %2656 = vadd.xlane.f32.xlu0 %v2655
  %v2657 = vpop.xlane.xlu0 %2656
  %v2658 = vsel %vm155, %v2639, 0.0
  %2659 = vadd.xlane.f32.xlu0 %v2658
  %v2660 = vpop.xlane.xlu0 %2659
  %v2661 = vsel %vm155, %v2641, 0.0
  %2662 = vadd.xlane.f32.xlu0 %v2661
  %v2663 = vpop.xlane.xlu0 %2662
  %v2664 = vsel %vm155, %v2643, 0.0
  %2665 = vadd.xlane.f32.xlu0 %v2664
  %v2666 = vpop.xlane.xlu0 %2665
  %v2667 = vsel %vm155, %v2645, 0.0
  %2668 = vadd.xlane.f32.xlu0 %v2667
  %v2669 = vpop.xlane.xlu0 %2668
  %v2670 = vrcp.pop %v2648
  %v2671 = vrcp.pop %v2651
  %v2672 = vrcp.pop %v2654
  %v2673 = vrcp.pop %v2657
  %v2674 = vrcp.pop %v2660
  %v2675 = vrcp.pop %v2663
  %v2676 = vrcp.pop %v2666
  %v2677 = vrcp.pop %v2669
  %v2678 = vmul.f32 %v2631, %v2670
  %v2679 = vmul.f32 %v2633, %v2671
  %v2680 = vmul.f32 %v2635, %v2672
  %v2681 = vmul.f32 %v2637, %v2673
  %v2682 = vmul.f32 %v2639, %v2674
  %v2683 = vmul.f32 %v2641, %v2675
  %v2684 = vmul.f32 %v2643, %v2676
  %v2685 = vmul.f32 %v2645, %v2677
  %2686 = vrot.lane.b32.xlu0 %v1960, 64
  %v2687 = vpop.permute.xlu0 %2686
  %v2690 = vsel %vm155, %v2678, 0
  %2692 = vmatprep.subr.mxu0 0.0
  %2693 = vmatpush1.msra.mxu0 0.0
  %2694 = vmatprep.subr.mxu0 0.0
  %2695 = vmatpush1.msra.mxu0 0.0
  %2696 = vmatprep.subr.mxu0 0.0
  %2697 = vmatpush1.msra.mxu0 0.0
  %2698 = vmatprep.subr.mxu0 0.0
  %2699 = vmatpush1.msra.mxu0 0.0
  %2700 = vmatprep.subr.mxu0 0.0
  %2701 = vmatpush1.msra.mxu0 0.0
  %2702 = vmatprep.subr.mxu0 0.0
  %2703 = vmatpush1.msra.mxu0 0.0
  %2704 = vmatprep.subr.mxu0 0.0
  %2705 = vmatpush1.msra.mxu0 0.0
  %2706 = vmatprep.subr.mxu0 0.0
  %2707 = vmatpush1.msra.mxu0 0.0
  %2708 = vmatprep.subr.mxu0 0.0
  %2709 = vmatpush1.msra.mxu0 0.0
  %2710 = vmatprep.subr.mxu0 0.0
  %2711 = vmatpush1.msra.mxu0 0.0
  %2712 = vmatprep.subr.mxu0 0.0
  %2713 = vmatpush1.msra.mxu0 0.0
  %2714 = vmatprep.subr.mxu0 0.0
  %2715 = vmatpush1.msra.mxu0 0.0
  %2716 = vmatprep.subr.mxu0 0.0
  %2717 = vmatpush1.msra.mxu0 0.0
  %2718 = vmatprep.subr.mxu0 0.0
  %2719 = vmatpush1.msra.mxu0 0.0
  %2720 = vmatprep.subr.mxu0 0.0
  %2721 = vmatpush1.msra.mxu0 0.0
  %2722 = vmatprep.subr.mxu0 0.0
  %2723 = vmatpush1.msra.mxu0 %v2687
  %2724 = vmatprep.subr.mxu0 0.0
  %2725 = vmatpush2.msra.mxu0 0.0
  %2726 = vmatprep.subr.mxu0 0.0
  %2727 = vmatpush2.msra.mxu0 0.0
  %2728 = vmatprep.subr.mxu0 0.0
  %2729 = vmatpush2.msra.mxu0 0.0
  %2730 = vmatprep.subr.mxu0 0.0
  %2731 = vmatpush2.msra.mxu0 0.0
  %2732 = vmatprep.subr.mxu0 0.0
  %2733 = vmatpush2.msra.mxu0 0.0
  %2734 = vmatprep.subr.mxu0 0.0
  %2735 = vmatpush2.msra.mxu0 0.0
  %2736 = vmatprep.subr.mxu0 0.0
  %2737 = vmatpush2.msra.mxu0 0.0
  %2738 = vmatprep.subr.mxu0 0.0
  %2739 = vmatpush2.msra.mxu0 0.0
  %2740 = vmatprep.subr.mxu0 0.0
  %2741 = vmatpush2.msra.mxu0 0.0
  %2742 = vmatprep.subr.mxu0 0.0
  %2743 = vmatpush2.msra.mxu0 0.0
  %2744 = vmatprep.subr.mxu0 0.0
  %2745 = vmatpush2.msra.mxu0 0.0
  %2746 = vmatprep.subr.mxu0 0.0
  %2747 = vmatpush2.msra.mxu0 0.0
  %2748 = vmatprep.subr.mxu0 0.0
  %2749 = vmatpush2.msra.mxu0 0.0
  %2750 = vmatprep.subr.mxu0 0.0
  %2751 = vmatpush2.msra.mxu0 0.0
  %2752 = vmatprep.subr.mxu0 0.0
  %2753 = vmatpush2.msra.mxu0 0.0
  %2754 = vmatprep.subr.mxu0 0.0
  %2755 = vmatpush2.msra.mxu0 0.0
  %2756 = vmatprep.mubr.f32.mxu0 0.0
  %2757 = vmatmul.mubr.f32.gmra.mxu0 %v2690
  %v2758 = vpop.f32.mrf.mxu0
  %v2759 = vadd.f32 0.0, %v2758
  %v2760 = vpop.f32.mrf.mxu0
  %2761 = vdwg.mxu0
  %2762 = vrot.lane.b32.xlu0 %v1965, 64
  %v2763 = vpop.permute.xlu0 %2762
  %v2766 = vsel %vm155, %v2679, 0
  %2768 = vmatprep.subr.mxu0 0.0
  %2769 = vmatpush1.msra.mxu0 0.0
  %2770 = vmatprep.subr.mxu0 0.0
  %2771 = vmatpush1.msra.mxu0 0.0
  %2772 = vmatprep.subr.mxu0 0.0
  %2773 = vmatpush1.msra.mxu0 0.0
  %2774 = vmatprep.subr.mxu0 0.0
  %2775 = vmatpush1.msra.mxu0 0.0
  %2776 = vmatprep.subr.mxu0 0.0
  %2777 = vmatpush1.msra.mxu0 0.0
  %2778 = vmatprep.subr.mxu0 0.0
  %2779 = vmatpush1.msra.mxu0 0.0
  %2780 = vmatprep.subr.mxu0 0.0
  %2781 = vmatpush1.msra.mxu0 0.0
  %2782 = vmatprep.subr.mxu0 0.0
  %2783 = vmatpush1.msra.mxu0 0.0
  %2784 = vmatprep.subr.mxu0 0.0
  %2785 = vmatpush1.msra.mxu0 0.0
  %2786 = vmatprep.subr.mxu0 0.0
  %2787 = vmatpush1.msra.mxu0 0.0
  %2788 = vmatprep.subr.mxu0 0.0
  %2789 = vmatpush1.msra.mxu0 0.0
  %2790 = vmatprep.subr.mxu0 0.0
  %2791 = vmatpush1.msra.mxu0 0.0
  %2792 = vmatprep.subr.mxu0 0.0
  %2793 = vmatpush1.msra.mxu0 0.0
  %2794 = vmatprep.subr.mxu0 0.0
  %2795 = vmatpush1.msra.mxu0 0.0
  %2796 = vmatprep.subr.mxu0 0.0
  %2797 = vmatpush1.msra.mxu0 0.0
  %2798 = vmatprep.subr.mxu0 0.0
  %2799 = vmatpush1.msra.mxu0 %v2763
  %2800 = vmatprep.subr.mxu0 0.0
  %2801 = vmatpush2.msra.mxu0 0.0
  %2802 = vmatprep.subr.mxu0 0.0
  %2803 = vmatpush2.msra.mxu0 0.0
  %2804 = vmatprep.subr.mxu0 0.0
  %2805 = vmatpush2.msra.mxu0 0.0
  %2806 = vmatprep.subr.mxu0 0.0
  %2807 = vmatpush2.msra.mxu0 0.0
  %2808 = vmatprep.subr.mxu0 0.0
  %2809 = vmatpush2.msra.mxu0 0.0
  %2810 = vmatprep.subr.mxu0 0.0
  %2811 = vmatpush2.msra.mxu0 0.0
  %2812 = vmatprep.subr.mxu0 0.0
  %2813 = vmatpush2.msra.mxu0 0.0
  %2814 = vmatprep.subr.mxu0 0.0
  %2815 = vmatpush2.msra.mxu0 0.0
  %2816 = vmatprep.subr.mxu0 0.0
  %2817 = vmatpush2.msra.mxu0 0.0
  %2818 = vmatprep.subr.mxu0 0.0
  %2819 = vmatpush2.msra.mxu0 0.0
  %2820 = vmatprep.subr.mxu0 0.0
  %2821 = vmatpush2.msra.mxu0 0.0
  %2822 = vmatprep.subr.mxu0 0.0
  %2823 = vmatpush2.msra.mxu0 0.0
  %2824 = vmatprep.subr.mxu0 0.0
  %2825 = vmatpush2.msra.mxu0 0.0
  %2826 = vmatprep.subr.mxu0 0.0
  %2827 = vmatpush2.msra.mxu0 0.0
  %2828 = vmatprep.subr.mxu0 0.0
  %2829 = vmatpush2.msra.mxu0 0.0
  %2830 = vmatprep.subr.mxu0 0.0
  %2831 = vmatpush2.msra.mxu0 0.0
  %2832 = vmatprep.mubr.f32.mxu0 0.0
  %2833 = vmatmul.mubr.f32.gmra.mxu0 %v2766
  %v2834 = vpop.f32.mrf.mxu0
  %v2835 = vadd.f32 0.0, %v2834
  %v2836 = vpop.f32.mrf.mxu0
  %2837 = vdwg.mxu0
  %2838 = vrot.lane.b32.xlu0 %v1971, 64
  %v2839 = vpop.permute.xlu0 %2838
  %v2842 = vsel %vm155, %v2680, 0
  %2844 = vmatprep.subr.mxu0 0.0
  %2845 = vmatpush1.msra.mxu0 0.0
  %2846 = vmatprep.subr.mxu0 0.0
  %2847 = vmatpush1.msra.mxu0 0.0
  %2848 = vmatprep.subr.mxu0 0.0
  %2849 = vmatpush1.msra.mxu0 0.0
  %2850 = vmatprep.subr.mxu0 0.0
  %2851 = vmatpush1.msra.mxu0 0.0
  %2852 = vmatprep.subr.mxu0 0.0
  %2853 = vmatpush1.msra.mxu0 0.0
  %2854 = vmatprep.subr.mxu0 0.0
  %2855 = vmatpush1.msra.mxu0 0.0
  %2856 = vmatprep.subr.mxu0 0.0
  %2857 = vmatpush1.msra.mxu0 0.0
  %2858 = vmatprep.subr.mxu0 0.0
  %2859 = vmatpush1.msra.mxu0 0.0
  %2860 = vmatprep.subr.mxu0 0.0
  %2861 = vmatpush1.msra.mxu0 0.0
  %2862 = vmatprep.subr.mxu0 0.0
  %2863 = vmatpush1.msra.mxu0 0.0
  %2864 = vmatprep.subr.mxu0 0.0
  %2865 = vmatpush1.msra.mxu0 0.0
  %2866 = vmatprep.subr.mxu0 0.0
  %2867 = vmatpush1.msra.mxu0 0.0
  %2868 = vmatprep.subr.mxu0 0.0
  %2869 = vmatpush1.msra.mxu0 0.0
  %2870 = vmatprep.subr.mxu0 0.0
  %2871 = vmatpush1.msra.mxu0 0.0
  %2872 = vmatprep.subr.mxu0 0.0
  %2873 = vmatpush1.msra.mxu0 0.0
  %2874 = vmatprep.subr.mxu0 0.0
  %2875 = vmatpush1.msra.mxu0 %v2839
  %2876 = vmatprep.subr.mxu0 0.0
  %2877 = vmatpush2.msra.mxu0 0.0
  %2878 = vmatprep.subr.mxu0 0.0
  %2879 = vmatpush2.msra.mxu0 0.0
  %2880 = vmatprep.subr.mxu0 0.0
  %2881 = vmatpush2.msra.mxu0 0.0
  %2882 = vmatprep.subr.mxu0 0.0
  %2883 = vmatpush2.msra.mxu0 0.0
  %2884 = vmatprep.subr.mxu0 0.0
  %2885 = vmatpush2.msra.mxu0 0.0
  %2886 = vmatprep.subr.mxu0 0.0
  %2887 = vmatpush2.msra.mxu0 0.0
  %2888 = vmatprep.subr.mxu0 0.0
  %2889 = vmatpush2.msra.mxu0 0.0
  %2890 = vmatprep.subr.mxu0 0.0
  %2891 = vmatpush2.msra.mxu0 0.0
  %2892 = vmatprep.subr.mxu0 0.0
  %2893 = vmatpush2.msra.mxu0 0.0
  %2894 = vmatprep.subr.mxu0 0.0
  %2895 = vmatpush2.msra.mxu0 0.0
  %2896 = vmatprep.subr.mxu0 0.0
  %2897 = vmatpush2.msra.mxu0 0.0
  %2898 = vmatprep.subr.mxu0 0.0
  %2899 = vmatpush2.msra.mxu0 0.0
  %2900 = vmatprep.subr.mxu0 0.0
  %2901 = vmatpush2.msra.mxu0 0.0
  %2902 = vmatprep.subr.mxu0 0.0
  %2903 = vmatpush2.msra.mxu0 0.0
  %2904 = vmatprep.subr.mxu0 0.0
  %2905 = vmatpush2.msra.mxu0 0.0
  %2906 = vmatprep.subr.mxu0 0.0
  %2907 = vmatpush2.msra.mxu0 0.0
  %2908 = vmatprep.mubr.f32.mxu0 0.0
  %2909 = vmatmul.mubr.f32.gmra.mxu0 %v2842
  %v2910 = vpop.f32.mrf.mxu0
  %v2911 = vadd.f32 0.0, %v2910
  %v2912 = vpop.f32.mrf.mxu0
  %2913 = vdwg.mxu0
  %2914 = vrot.lane.b32.xlu0 %v1973, 64
  %v2915 = vpop.permute.xlu0 %2914
  %v2918 = vsel %vm155, %v2681, 0
  %2920 = vmatprep.subr.mxu0 0.0
  %2921 = vmatpush1.msra.mxu0 0.0
  %2922 = vmatprep.subr.mxu0 0.0
  %2923 = vmatpush1.msra.mxu0 0.0
  %2924 = vmatprep.subr.mxu0 0.0
  %2925 = vmatpush1.msra.mxu0 0.0
  %2926 = vmatprep.subr.mxu0 0.0
  %2927 = vmatpush1.msra.mxu0 0.0
  %2928 = vmatprep.subr.mxu0 0.0
  %2929 = vmatpush1.msra.mxu0 0.0
  %2930 = vmatprep.subr.mxu0 0.0
  %2931 = vmatpush1.msra.mxu0 0.0
  %2932 = vmatprep.subr.mxu0 0.0
  %2933 = vmatpush1.msra.mxu0 0.0
  %2934 = vmatprep.subr.mxu0 0.0
  %2935 = vmatpush1.msra.mxu0 0.0
  %2936 = vmatprep.subr.mxu0 0.0
  %2937 = vmatpush1.msra.mxu0 0.0
  %2938 = vmatprep.subr.mxu0 0.0
  %2939 = vmatpush1.msra.mxu0 0.0
  %2940 = vmatprep.subr.mxu0 0.0
  %2941 = vmatpush1.msra.mxu0 0.0
  %2942 = vmatprep.subr.mxu0 0.0
  %2943 = vmatpush1.msra.mxu0 0.0
  %2944 = vmatprep.subr.mxu0 0.0
  %2945 = vmatpush1.msra.mxu0 0.0
  %2946 = vmatprep.subr.mxu0 0.0
  %2947 = vmatpush1.msra.mxu0 0.0
  %2948 = vmatprep.subr.mxu0 0.0
  %2949 = vmatpush1.msra.mxu0 0.0
  %2950 = vmatprep.subr.mxu0 0.0
  %2951 = vmatpush1.msra.mxu0 %v2915
  %2952 = vmatprep.subr.mxu0 0.0
  %2953 = vmatpush2.msra.mxu0 0.0
  %2954 = vmatprep.subr.mxu0 0.0
  %2955 = vmatpush2.msra.mxu0 0.0
  %2956 = vmatprep.subr.mxu0 0.0
  %2957 = vmatpush2.msra.mxu0 0.0
  %2958 = vmatprep.subr.mxu0 0.0
  %2959 = vmatpush2.msra.mxu0 0.0
  %2960 = vmatprep.subr.mxu0 0.0
  %2961 = vmatpush2.msra.mxu0 0.0
  %2962 = vmatprep.subr.mxu0 0.0
  %2963 = vmatpush2.msra.mxu0 0.0
  %2964 = vmatprep.subr.mxu0 0.0
  %2965 = vmatpush2.msra.mxu0 0.0
  %2966 = vmatprep.subr.mxu0 0.0
  %2967 = vmatpush2.msra.mxu0 0.0
  %2968 = vmatprep.subr.mxu0 0.0
  %2969 = vmatpush2.msra.mxu0 0.0
  %2970 = vmatprep.subr.mxu0 0.0
  %2971 = vmatpush2.msra.mxu0 0.0
  %2972 = vmatprep.subr.mxu0 0.0
  %2973 = vmatpush2.msra.mxu0 0.0
  %2974 = vmatprep.subr.mxu0 0.0
  %2975 = vmatpush2.msra.mxu0 0.0
  %2976 = vmatprep.subr.mxu0 0.0
  %2977 = vmatpush2.msra.mxu0 0.0
  %2978 = vmatprep.subr.mxu0 0.0
  %2979 = vmatpush2.msra.mxu0 0.0
  %2980 = vmatprep.subr.mxu0 0.0
  %2981 = vmatpush2.msra.mxu0 0.0
  %2982 = vmatprep.subr.mxu0 0.0
  %2983 = vmatpush2.msra.mxu0 0.0
  %2984 = vmatprep.mubr.f32.mxu0 0.0
  %2985 = vmatmul.mubr.f32.gmra.mxu0 %v2918
  %v2986 = vpop.f32.mrf.mxu0
  %v2987 = vadd.f32 0.0, %v2986
  %v2988 = vpop.f32.mrf.mxu0
  %2989 = vdwg.mxu0
  %2990 = vrot.lane.b32.xlu0 %v1975, 64
  %v2991 = vpop.permute.xlu0 %2990
  %v2994 = vsel %vm155, %v2682, 0
  %2996 = vmatprep.subr.mxu0 0.0
  %2997 = vmatpush1.msra.mxu0 0.0
  %2998 = vmatprep.subr.mxu0 0.0
  %2999 = vmatpush1.msra.mxu0 0.0
  %3000 = vmatprep.subr.mxu0 0.0
  %3001 = vmatpush1.msra.mxu0 0.0
  %3002 = vmatprep.subr.mxu0 0.0
  %3003 = vmatpush1.msra.mxu0 0.0
  %3004 = vmatprep.subr.mxu0 0.0
  %3005 = vmatpush1.msra.mxu0 0.0
  %3006 = vmatprep.subr.mxu0 0.0
  %3007 = vmatpush1.msra.mxu0 0.0
  %3008 = vmatprep.subr.mxu0 0.0
  %3009 = vmatpush1.msra.mxu0 0.0
  %3010 = vmatprep.subr.mxu0 0.0
  %3011 = vmatpush1.msra.mxu0 0.0
  %3012 = vmatprep.subr.mxu0 0.0
  %3013 = vmatpush1.msra.mxu0 0.0
  %3014 = vmatprep.subr.mxu0 0.0
  %3015 = vmatpush1.msra.mxu0 0.0
  %3016 = vmatprep.subr.mxu0 0.0
  %3017 = vmatpush1.msra.mxu0 0.0
  %3018 = vmatprep.subr.mxu0 0.0
  %3019 = vmatpush1.msra.mxu0 0.0
  %3020 = vmatprep.subr.mxu0 0.0
  %3021 = vmatpush1.msra.mxu0 0.0
  %3022 = vmatprep.subr.mxu0 0.0
  %3023 = vmatpush1.msra.mxu0 0.0
  %3024 = vmatprep.subr.mxu0 0.0
  %3025 = vmatpush1.msra.mxu0 0.0
  %3026 = vmatprep.subr.mxu0 0.0
  %3027 = vmatpush1.msra.mxu0 %v2991
  %3028 = vmatprep.subr.mxu0 0.0
  %3029 = vmatpush2.msra.mxu0 0.0
  %3030 = vmatprep.subr.mxu0 0.0
  %3031 = vmatpush2.msra.mxu0 0.0
  %3032 = vmatprep.subr.mxu0 0.0
  %3033 = vmatpush2.msra.mxu0 0.0
  %3034 = vmatprep.subr.mxu0 0.0
  %3035 = vmatpush2.msra.mxu0 0.0
  %3036 = vmatprep.subr.mxu0 0.0
  %3037 = vmatpush2.msra.mxu0 0.0
  %3038 = vmatprep.subr.mxu0 0.0
  %3039 = vmatpush2.msra.mxu0 0.0
  %3040 = vmatprep.subr.mxu0 0.0
  %3041 = vmatpush2.msra.mxu0 0.0
  %3042 = vmatprep.subr.mxu0 0.0
  %3043 = vmatpush2.msra.mxu0 0.0
  %3044 = vmatprep.subr.mxu0 0.0
  %3045 = vmatpush2.msra.mxu0 0.0
  %3046 = vmatprep.subr.mxu0 0.0
  %3047 = vmatpush2.msra.mxu0 0.0
  %3048 = vmatprep.subr.mxu0 0.0
  %3049 = vmatpush2.msra.mxu0 0.0
  %3050 = vmatprep.subr.mxu0 0.0
  %3051 = vmatpush2.msra.mxu0 0.0
  %3052 = vmatprep.subr.mxu0 0.0
  %3053 = vmatpush2.msra.mxu0 0.0
  %3054 = vmatprep.subr.mxu0 0.0
  %3055 = vmatpush2.msra.mxu0 0.0
  %3056 = vmatprep.subr.mxu0 0.0
  %3057 = vmatpush2.msra.mxu0 0.0
  %3058 = vmatprep.subr.mxu0 0.0
  %3059 = vmatpush2.msra.mxu0 0.0
  %3060 = vmatprep.mubr.f32.mxu0 0.0
  %3061 = vmatmul.mubr.f32.gmra.mxu0 %v2994
  %v3062 = vpop.f32.mrf.mxu0
  %v3063 = vadd.f32 0.0, %v3062
  %v3064 = vpop.f32.mrf.mxu0
  %3065 = vdwg.mxu0
  %3066 = vrot.lane.b32.xlu0 %v1977, 64
  %v3067 = vpop.permute.xlu0 %3066
  %v3070 = vsel %vm155, %v2683, 0
  %3072 = vmatprep.subr.mxu0 0.0
  %3073 = vmatpush1.msra.mxu0 0.0
  %3074 = vmatprep.subr.mxu0 0.0
  %3075 = vmatpush1.msra.mxu0 0.0
  %3076 = vmatprep.subr.mxu0 0.0
  %3077 = vmatpush1.msra.mxu0 0.0
  %3078 = vmatprep.subr.mxu0 0.0
  %3079 = vmatpush1.msra.mxu0 0.0
  %3080 = vmatprep.subr.mxu0 0.0
  %3081 = vmatpush1.msra.mxu0 0.0
  %3082 = vmatprep.subr.mxu0 0.0
  %3083 = vmatpush1.msra.mxu0 0.0
  %3084 = vmatprep.subr.mxu0 0.0
  %3085 = vmatpush1.msra.mxu0 0.0
  %3086 = vmatprep.subr.mxu0 0.0
  %3087 = vmatpush1.msra.mxu0 0.0
  %3088 = vmatprep.subr.mxu0 0.0
  %3089 = vmatpush1.msra.mxu0 0.0
  %3090 = vmatprep.subr.mxu0 0.0
  %3091 = vmatpush1.msra.mxu0 0.0
  %3092 = vmatprep.subr.mxu0 0.0
  %3093 = vmatpush1.msra.mxu0 0.0
  %3094 = vmatprep.subr.mxu0 0.0
  %3095 = vmatpush1.msra.mxu0 0.0
  %3096 = vmatprep.subr.mxu0 0.0
  %3097 = vmatpush1.msra.mxu0 0.0
  %3098 = vmatprep.subr.mxu0 0.0
  %3099 = vmatpush1.msra.mxu0 0.0
  %3100 = vmatprep.subr.mxu0 0.0
  %3101 = vmatpush1.msra.mxu0 0.0
  %3102 = vmatprep.subr.mxu0 0.0
  %3103 = vmatpush1.msra.mxu0 %v3067
  %3104 = vmatprep.subr.mxu0 0.0
  %3105 = vmatpush2.msra.mxu0 0.0
  %3106 = vmatprep.subr.mxu0 0.0
  %3107 = vmatpush2.msra.mxu0 0.0
  %3108 = vmatprep.subr.mxu0 0.0
  %3109 = vmatpush2.msra.mxu0 0.0
  %3110 = vmatprep.subr.mxu0 0.0
  %3111 = vmatpush2.msra.mxu0 0.0
  %3112 = vmatprep.subr.mxu0 0.0
  %3113 = vmatpush2.msra.mxu0 0.0
  %3114 = vmatprep.subr.mxu0 0.0
  %3115 = vmatpush2.msra.mxu0 0.0
  %3116 = vmatprep.subr.mxu0 0.0
  %3117 = vmatpush2.msra.mxu0 0.0
  %3118 = vmatprep.subr.mxu0 0.0
  %3119 = vmatpush2.msra.mxu0 0.0
  %3120 = vmatprep.subr.mxu0 0.0
  %3121 = vmatpush2.msra.mxu0 0.0
  %3122 = vmatprep.subr.mxu0 0.0
  %3123 = vmatpush2.msra.mxu0 0.0
  %3124 = vmatprep.subr.mxu0 0.0
  %3125 = vmatpush2.msra.mxu0 0.0
  %3126 = vmatprep.subr.mxu0 0.0
  %3127 = vmatpush2.msra.mxu0 0.0
  %3128 = vmatprep.subr.mxu0 0.0
  %3129 = vmatpush2.msra.mxu0 0.0
  %3130 = vmatprep.subr.mxu0 0.0
  %3131 = vmatpush2.msra.mxu0 0.0
  %3132 = vmatprep.subr.mxu0 0.0
  %3133 = vmatpush2.msra.mxu0 0.0
  %3134 = vmatprep.subr.mxu0 0.0
  %3135 = vmatpush2.msra.mxu0 0.0
  %3136 = vmatprep.mubr.f32.mxu0 0.0
  %3137 = vmatmul.mubr.f32.gmra.mxu0 %v3070
  %v3138 = vpop.f32.mrf.mxu0
  %v3139 = vadd.f32 0.0, %v3138
  %v3140 = vpop.f32.mrf.mxu0
  %3141 = vdwg.mxu0
  %3142 = vrot.lane.b32.xlu0 %v1979, 64
  %v3143 = vpop.permute.xlu0 %3142
  %v3146 = vsel %vm155, %v2684, 0
  %3148 = vmatprep.subr.mxu0 0.0
  %3149 = vmatpush1.msra.mxu0 0.0
  %3150 = vmatprep.subr.mxu0 0.0
  %3151 = vmatpush1.msra.mxu0 0.0
  %3152 = vmatprep.subr.mxu0 0.0
  %3153 = vmatpush1.msra.mxu0 0.0
  %3154 = vmatprep.subr.mxu0 0.0
  %3155 = vmatpush1.msra.mxu0 0.0
  %3156 = vmatprep.subr.mxu0 0.0
  %3157 = vmatpush1.msra.mxu0 0.0
  %3158 = vmatprep.subr.mxu0 0.0
  %3159 = vmatpush1.msra.mxu0 0.0
  %3160 = vmatprep.subr.mxu0 0.0
  %3161 = vmatpush1.msra.mxu0 0.0
  %3162 = vmatprep.subr.mxu0 0.0
  %3163 = vmatpush1.msra.mxu0 0.0
  %3164 = vmatprep.subr.mxu0 0.0
  %3165 = vmatpush1.msra.mxu0 0.0
  %3166 = vmatprep.subr.mxu0 0.0
  %3167 = vmatpush1.msra.mxu0 0.0
  %3168 = vmatprep.subr.mxu0 0.0
  %3169 = vmatpush1.msra.mxu0 0.0
  %3170 = vmatprep.subr.mxu0 0.0
  %3171 = vmatpush1.msra.mxu0 0.0
  %3172 = vmatprep.subr.mxu0 0.0
  %3173 = vmatpush1.msra.mxu0 0.0
  %3174 = vmatprep.subr.mxu0 0.0
  %3175 = vmatpush1.msra.mxu0 0.0
  %3176 = vmatprep.subr.mxu0 0.0
  %3177 = vmatpush1.msra.mxu0 0.0
  %3178 = vmatprep.subr.mxu0 0.0
  %3179 = vmatpush1.msra.mxu0 %v3143
  %3180 = vmatprep.subr.mxu0 0.0
  %3181 = vmatpush2.msra.mxu0 0.0
  %3182 = vmatprep.subr.mxu0 0.0
  %3183 = vmatpush2.msra.mxu0 0.0
  %3184 = vmatprep.subr.mxu0 0.0
  %3185 = vmatpush2.msra.mxu0 0.0
  %3186 = vmatprep.subr.mxu0 0.0
  %3187 = vmatpush2.msra.mxu0 0.0
  %3188 = vmatprep.subr.mxu0 0.0
  %3189 = vmatpush2.msra.mxu0 0.0
  %3190 = vmatprep.subr.mxu0 0.0
  %3191 = vmatpush2.msra.mxu0 0.0
  %3192 = vmatprep.subr.mxu0 0.0
  %3193 = vmatpush2.msra.mxu0 0.0
  %3194 = vmatprep.subr.mxu0 0.0
  %3195 = vmatpush2.msra.mxu0 0.0
  %3196 = vmatprep.subr.mxu0 0.0
  %3197 = vmatpush2.msra.mxu0 0.0
  %3198 = vmatprep.subr.mxu0 0.0
  %3199 = vmatpush2.msra.mxu0 0.0
  %3200 = vmatprep.subr.mxu0 0.0
  %3201 = vmatpush2.msra.mxu0 0.0
  %3202 = vmatprep.subr.mxu0 0.0
  %3203 = vmatpush2.msra.mxu0 0.0
  %3204 = vmatprep.subr.mxu0 0.0
  %3205 = vmatpush2.msra.mxu0 0.0
  %3206 = vmatprep.subr.mxu0 0.0
  %3207 = vmatpush2.msra.mxu0 0.0
  %3208 = vmatprep.subr.mxu0 0.0
  %3209 = vmatpush2.msra.mxu0 0.0
  %3210 = vmatprep.subr.mxu0 0.0
  %3211 = vmatpush2.msra.mxu0 0.0
  %3212 = vmatprep.mubr.f32.mxu0 0.0
  %3213 = vmatmul.mubr.f32.gmra.mxu0 %v3146
  %v3214 = vpop.f32.mrf.mxu0
  %v3215 = vadd.f32 0.0, %v3214
  %v3216 = vpop.f32.mrf.mxu0
  %3217 = vdwg.mxu0
  %3218 = vrot.lane.b32.xlu0 %v1981, 64
  %v3219 = vpop.permute.xlu0 %3218
  %v3222 = vsel %vm155, %v2685, 0
  %3224 = vmatprep.subr.mxu0 0.0
  %3225 = vmatpush1.msra.mxu0 0.0
  %3226 = vmatprep.subr.mxu0 0.0
  %3227 = vmatpush1.msra.mxu0 0.0
  %3228 = vmatprep.subr.mxu0 0.0
  %3229 = vmatpush1.msra.mxu0 0.0
  %3230 = vmatprep.subr.mxu0 0.0
  %3231 = vmatpush1.msra.mxu0 0.0
  %3232 = vmatprep.subr.mxu0 0.0
  %3233 = vmatpush1.msra.mxu0 0.0
  %3234 = vmatprep.subr.mxu0 0.0
  %3235 = vmatpush1.msra.mxu0 0.0
  %3236 = vmatprep.subr.mxu0 0.0
  %3237 = vmatpush1.msra.mxu0 0.0
  %3238 = vmatprep.subr.mxu0 0.0
  %3239 = vmatpush1.msra.mxu0 0.0
  %3240 = vmatprep.subr.mxu0 0.0
  %3241 = vmatpush1.msra.mxu0 0.0
  %3242 = vmatprep.subr.mxu0 0.0
  %3243 = vmatpush1.msra.mxu0 0.0
  %3244 = vmatprep.subr.mxu0 0.0
  %3245 = vmatpush1.msra.mxu0 0.0
  %3246 = vmatprep.subr.mxu0 0.0
  %3247 = vmatpush1.msra.mxu0 0.0
  %3248 = vmatprep.subr.mxu0 0.0
  %3249 = vmatpush1.msra.mxu0 0.0
  %3250 = vmatprep.subr.mxu0 0.0
  %3251 = vmatpush1.msra.mxu0 0.0
  %3252 = vmatprep.subr.mxu0 0.0
  %3253 = vmatpush1.msra.mxu0 0.0
  %3254 = vmatprep.subr.mxu0 0.0
  %3255 = vmatpush1.msra.mxu0 %v3219
  %3256 = vmatprep.subr.mxu0 0.0
  %3257 = vmatpush2.msra.mxu0 0.0
  %3258 = vmatprep.subr.mxu0 0.0
  %3259 = vmatpush2.msra.mxu0 0.0
  %3260 = vmatprep.subr.mxu0 0.0
  %3261 = vmatpush2.msra.mxu0 0.0
  %3262 = vmatprep.subr.mxu0 0.0
  %3263 = vmatpush2.msra.mxu0 0.0
  %3264 = vmatprep.subr.mxu0 0.0
  %3265 = vmatpush2.msra.mxu0 0.0
  %3266 = vmatprep.subr.mxu0 0.0
  %3267 = vmatpush2.msra.mxu0 0.0
  %3268 = vmatprep.subr.mxu0 0.0
  %3269 = vmatpush2.msra.mxu0 0.0
  %3270 = vmatprep.subr.mxu0 0.0
  %3271 = vmatpush2.msra.mxu0 0.0
  %3272 = vmatprep.subr.mxu0 0.0
  %3273 = vmatpush2.msra.mxu0 0.0
  %3274 = vmatprep.subr.mxu0 0.0
  %3275 = vmatpush2.msra.mxu0 0.0
  %3276 = vmatprep.subr.mxu0 0.0
  %3277 = vmatpush2.msra.mxu0 0.0
  %3278 = vmatprep.subr.mxu0 0.0
  %3279 = vmatpush2.msra.mxu0 0.0
  %3280 = vmatprep.subr.mxu0 0.0
  %3281 = vmatpush2.msra.mxu0 0.0
  %3282 = vmatprep.subr.mxu0 0.0
  %3283 = vmatpush2.msra.mxu0 0.0
  %3284 = vmatprep.subr.mxu0 0.0
  %3285 = vmatpush2.msra.mxu0 0.0
  %3286 = vmatprep.subr.mxu0 0.0
  %3287 = vmatpush2.msra.mxu0 0.0
  %3288 = vmatprep.mubr.f32.mxu0 0.0
  %3289 = vmatmul.mubr.f32.gmra.mxu0 %v3222
  %v3290 = vpop.f32.mrf.mxu0
  %v3291 = vadd.f32 0.0, %v3290
  %v3292 = vpop.f32.mrf.mxu0
  %3293 = vdwg.mxu0
  %3296 = vrot.lane.b32.xlu0 %v2911, 8
  %v3297 = vpop.permute.xlu0 %3296
  %3298 = vrot.lane.b32.xlu0 %v2987, 8
  %v3299 = vpop.permute.xlu0 %3298
  %3304 = vrot.lane.b32.xlu0 %v3063, 16
  %v3305 = vpop.permute.xlu0 %3304
  %3306 = vrot.lane.b32.xlu0 %v3139, 16
  %v3307 = vpop.permute.xlu0 %3306
  %3312 = vrot.lane.b32.xlu0 %v3215, 24
  %v3313 = vpop.permute.xlu0 %3312
  %3314 = vrot.lane.b32.xlu0 %v3291, 24
  %v3315 = vpop.permute.xlu0 %3314
  %v3318 = vsel %vm155, %v2759, %v3297
  %v3319 = vsel %vm155, %v2835, %v3299
  %v3320 = vsel %vm1492, %v3318, %v3305
  %v3321 = vsel %vm1492, %v3319, %v3307
  %v3322 = vsel %vm1495, %v3320, %v3313
  %v3323 = vsel %vm1495, %v3321, %v3315
  %s3324 = scalar_lea.vmem %s3, 32
  %v3325 = vld [vmem:[%s3324] sm:$0xff]
  %v3326 = vld [vmem:[%s3324 + $0x8] sm:$0xff]
  %v3327 = vld [vmem:[%s3324 + $0x10] sm:$0xff]
  %v3328 = vld [vmem:[%s3324 + $0x18] sm:$0xff]
  %s3329 = scalar_lea.vmem %s4, 1
  %v3330 = vld [vmem:[%s3329] sm:$0x1]
  %v3332 = vlaneseq
  %v3333 = vshrl.u32 %v3332, 7
  %v3334 = vsub.s32 0, %v3333
  %v3335 = vrot.slane %v3330, %v3334
  %v3338 = vsel %vm57, %v3322, 0
  %v3341 = vsel %vm57, %v3323, 0
  %3343 = vmatprep.subr.mxu0 0.0
  %3344 = vmatpush1.msra.mxu0 0.0
  %3345 = vmatprep.subr.mxu0 0.0
  %3346 = vmatpush1.msra.mxu0 0.0
  %3347 = vmatprep.subr.mxu0 0.0
  %3348 = vmatpush1.msra.mxu0 0.0
  %3349 = vmatprep.subr.mxu0 0.0
  %3350 = vmatpush1.msra.mxu0 0.0
  %3351 = vmatprep.subr.mxu0 0.0
  %3352 = vmatpush1.msra.mxu0 0.0
  %3353 = vmatprep.subr.mxu0 0.0
  %3354 = vmatpush1.msra.mxu0 0.0
  %3355 = vmatprep.subr.mxu0 0.0
  %3356 = vmatpush1.msra.mxu0 0.0
  %3357 = vmatprep.subr.mxu0 0.0
  %3358 = vmatpush1.msra.mxu0 0.0
  %3359 = vmatprep.subr.mxu0 0.0
  %3360 = vmatpush1.msra.mxu0 0.0
  %3361 = vmatprep.subr.mxu0 0.0
  %3362 = vmatpush1.msra.mxu0 0.0
  %3363 = vmatprep.subr.mxu0 0.0
  %3364 = vmatpush1.msra.mxu0 0.0
  %3365 = vmatprep.subr.mxu0 0.0
  %3366 = vmatpush1.msra.mxu0 0.0
  %3367 = vmatprep.subr.mxu0 0.0
  %3368 = vmatpush1.msra.mxu0 %v3328
  %3369 = vmatprep.subr.mxu0 0.0
  %3370 = vmatpush1.msra.mxu0 %v3327
  %3371 = vmatprep.subr.mxu0 0.0
  %3372 = vmatpush1.msra.mxu0 %v3326
  %3373 = vmatprep.subr.mxu0 0.0
  %3374 = vmatpush1.msra.mxu0 %v3325
  %3375 = vmatprep.subr.mxu0 0.0
  %3376 = vmatpush2.msra.mxu0 0.0
  %3377 = vmatprep.subr.mxu0 0.0
  %3378 = vmatpush2.msra.mxu0 0.0
  %3379 = vmatprep.subr.mxu0 0.0
  %3380 = vmatpush2.msra.mxu0 0.0
  %3381 = vmatprep.subr.mxu0 0.0
  %3382 = vmatpush2.msra.mxu0 0.0
  %3383 = vmatprep.subr.mxu0 0.0
  %3384 = vmatpush2.msra.mxu0 0.0
  %3385 = vmatprep.subr.mxu0 0.0
  %3386 = vmatpush2.msra.mxu0 0.0
  %3387 = vmatprep.subr.mxu0 0.0
  %3388 = vmatpush2.msra.mxu0 0.0
  %3389 = vmatprep.subr.mxu0 0.0
  %3390 = vmatpush2.msra.mxu0 0.0
  %3391 = vmatprep.subr.mxu0 0.0
  %3392 = vmatpush2.msra.mxu0 0.0
  %3393 = vmatprep.subr.mxu0 0.0
  %3394 = vmatpush2.msra.mxu0 0.0
  %3395 = vmatprep.subr.mxu0 0.0
  %3396 = vmatpush2.msra.mxu0 0.0
  %3397 = vmatprep.subr.mxu0 0.0
  %3398 = vmatpush2.msra.mxu0 0.0
  %3399 = vmatprep.subr.mxu0 0.0
  %3400 = vmatpush2.msra.mxu0 0.0
  %3401 = vmatprep.subr.mxu0 0.0
  %3402 = vmatpush2.msra.mxu0 0.0
  %3403 = vmatprep.subr.mxu0 0.0
  %3404 = vmatpush2.msra.mxu0 0.0
  %3405 = vmatprep.subr.mxu0 0.0
  %3406 = vmatpush2.msra.mxu0 0.0
  %3407 = vmatprep.mubr.f32.mxu0 0.0
  %3408 = vmatmul.mubr.f32.gmra.mxu0 %v3338
  %v3409 = vpop.f32.mrf.mxu0
  %v3410 = vadd.f32 %v3335, %v3409
  %v3411 = vpop.f32.mrf.mxu0
  %3412 = vmatprep.mubr.f32.mxu0 0.0
  %3413 = vmatmul.mubr.f32.gmra.mxu0 %v3341
  %v3414 = vpop.f32.mrf.mxu0
  %v3415 = vadd.f32 %v3335, %v3414
  %v3416 = vpop.f32.mrf.mxu0
  %3417 = vdwg.mxu0
  %v3418 = vadd.f32 %v1872, %v3410
  %v3419 = vadd.f32 %v1873, %v3415
  %s3420 = scalar_lea.vmem %s5, 1
  %v3421 = vld [vmem:[%s3420] sm:$0x1]
  %s3422 = scalar_lea.vmem %s6, 1
  %v3423 = vld [vmem:[%s3422] sm:$0x1]
  %v3424 = vsel %vm57, %v3418, 0.0
  %3425 = vadd.xlane.f32.xlu0 %v3424
  %v3426 = vpop.xlane.xlu0 %3425
  %v3427 = vsel %vm57, %v3419, 0.0
  %3428 = vadd.xlane.f32.xlu0 %v3427
  %v3429 = vpop.xlane.xlu0 %3428
  %v3430 = vmul.f32 %v3426, %v1600
  %v3431 = vmul.f32 %v3429, %v1600
  %v3432 = vsub.f32 %v3418, %v3430
  %v3433 = vsub.f32 %v3419, %v3431
  %v3434 = vmul.f32 %v3432, %v3432
  %v3435 = vmul.f32 %v3433, %v3433
  %v3436 = vsel %vm57, %v3434, 0.0
  %3437 = vadd.xlane.f32.xlu0 %v3436
  %v3438 = vpop.xlane.xlu0 %3437
  %v3439 = vsel %vm57, %v3435, 0.0
  %3440 = vadd.xlane.f32.xlu0 %v3439
  %v3441 = vpop.xlane.xlu0 %3440
  %v3442 = vmul.f32 %v3438, %v1600
  %v3443 = vmul.f32 %v3441, %v1600
  %v3444 = vadd.f32 %v3442, 1e-05
  %v3445 = vadd.f32 %v3443, 1e-05
  %v3446 = vrsqrt.pop %v3444
  %v3447 = vrsqrt.pop %v3445
  %v3448 = vmul.f32 %v3432, %v3446
  %v3449 = vmul.f32 %v3433, %v3447
  %v3451 = vlaneseq
  %v3452 = vshrl.u32 %v3451, 7
  %v3453 = vsub.s32 0, %v3452
  %v3454 = vrot.slane %v3421, %v3453
  %v3456 = vmul.f32 %v3448, %v3454
  %v3457 = vmul.f32 %v3449, %v3454
  %v3459 = vlaneseq
  %v3460 = vshrl.u32 %v3459, 7
  %v3461 = vsub.s32 0, %v3460
  %v3462 = vrot.slane %v3423, %v3461
  %v3464 = vadd.f32 %v3456, %v3462
  %v3465 = vadd.f32 %v3457, %v3462
  %s3466 = scalar_lea.vmem %s7, 32
  %v3467 = vld [vmem:[%s3466] sm:$0xff]
  %v3468 = vld [vmem:[%s3466 + $0x8] sm:$0xff]
  %v3469 = vld [vmem:[%s3466 + $0x10] sm:$0xff]
  %v3470 = vld [vmem:[%s3466 + $0x18] sm:$0xff]
  %s3471 = scalar_lea.vmem %s8, 1
  %v3472 = vld [vmem:[%s3471] sm:$0x1]
  %v3474 = vlaneseq
  %v3475 = vshrl.u32 %v3474, 7
  %v3476 = vsub.s32 0, %v3475
  %v3477 = vrot.slane %v3472, %v3476
  %v3480 = vsel %vm57, %v3464, 0
  %v3483 = vsel %vm57, %v3465, 0
  %3485 = vmatprep.subr.mxu0 0.0
  %3486 = vmatpush1.msra.mxu0 0.0
  %3487 = vmatprep.subr.mxu0 0.0
  %3488 = vmatpush1.msra.mxu0 0.0
  %3489 = vmatprep.subr.mxu0 0.0
  %3490 = vmatpush1.msra.mxu0 0.0
  %3491 = vmatprep.subr.mxu0 0.0
  %3492 = vmatpush1.msra.mxu0 0.0
  %3493 = vmatprep.subr.mxu0 0.0
  %3494 = vmatpush1.msra.mxu0 0.0
  %3495 = vmatprep.subr.mxu0 0.0
  %3496 = vmatpush1.msra.mxu0 0.0
  %3497 = vmatprep.subr.mxu0 0.0
  %3498 = vmatpush1.msra.mxu0 0.0
  %3499 = vmatprep.subr.mxu0 0.0
  %3500 = vmatpush1.msra.mxu0 0.0
  %3501 = vmatprep.subr.mxu0 0.0
  %3502 = vmatpush1.msra.mxu0 0.0
  %3503 = vmatprep.subr.mxu0 0.0
  %3504 = vmatpush1.msra.mxu0 0.0
  %3505 = vmatprep.subr.mxu0 0.0
  %3506 = vmatpush1.msra.mxu0 0.0
  %3507 = vmatprep.subr.mxu0 0.0
  %3508 = vmatpush1.msra.mxu0 0.0
  %3509 = vmatprep.subr.mxu0 0.0
  %3510 = vmatpush1.msra.mxu0 %v3470
  %3511 = vmatprep.subr.mxu0 0.0
  %3512 = vmatpush1.msra.mxu0 %v3469
  %3513 = vmatprep.subr.mxu0 0.0
  %3514 = vmatpush1.msra.mxu0 %v3468
  %3515 = vmatprep.subr.mxu0 0.0
  %3516 = vmatpush1.msra.mxu0 %v3467
  %3517 = vmatprep.subr.mxu0 0.0
  %3518 = vmatpush2.msra.mxu0 0.0
  %3519 = vmatprep.subr.mxu0 0.0
  %3520 = vmatpush2.msra.mxu0 0.0
  %3521 = vmatprep.subr.mxu0 0.0
  %3522 = vmatpush2.msra.mxu0 0.0
  %3523 = vmatprep.subr.mxu0 0.0
  %3524 = vmatpush2.msra.mxu0 0.0
  %3525 = vmatprep.subr.mxu0 0.0
  %3526 = vmatpush2.msra.mxu0 0.0
  %3527 = vmatprep.subr.mxu0 0.0
  %3528 = vmatpush2.msra.mxu0 0.0
  %3529 = vmatprep.subr.mxu0 0.0
  %3530 = vmatpush2.msra.mxu0 0.0
  %3531 = vmatprep.subr.mxu0 0.0
  %3532 = vmatpush2.msra.mxu0 0.0
  %3533 = vmatprep.subr.mxu0 0.0
  %3534 = vmatpush2.msra.mxu0 0.0
  %3535 = vmatprep.subr.mxu0 0.0
  %3536 = vmatpush2.msra.mxu0 0.0
  %3537 = vmatprep.subr.mxu0 0.0
  %3538 = vmatpush2.msra.mxu0 0.0
  %3539 = vmatprep.subr.mxu0 0.0
  %3540 = vmatpush2.msra.mxu0 0.0
  %3541 = vmatprep.subr.mxu0 0.0
  %3542 = vmatpush2.msra.mxu0 0.0
  %3543 = vmatprep.subr.mxu0 0.0
  %3544 = vmatpush2.msra.mxu0 0.0
  %3545 = vmatprep.subr.mxu0 0.0
  %3546 = vmatpush2.msra.mxu0 0.0
  %3547 = vmatprep.subr.mxu0 0.0
  %3548 = vmatpush2.msra.mxu0 0.0
  %3549 = vmatprep.mubr.f32.mxu0 0.0
  %3550 = vmatmul.mubr.f32.gmra.mxu0 %v3480
  %v3551 = vpop.f32.mrf.mxu0
  %v3552 = vadd.f32 %v3477, %v3551
  %v3553 = vpop.f32.mrf.mxu0
  %3554 = vmatprep.mubr.f32.mxu0 0.0
  %3555 = vmatmul.mubr.f32.gmra.mxu0 %v3483
  %v3556 = vpop.f32.mrf.mxu0
  %v3557 = vadd.f32 %v3477, %v3556
  %v3558 = vpop.f32.mrf.mxu0
  %3559 = vdwg.mxu0
  %v3560 = vmax.f32 %v3552, 0.0
  %v3561 = vmax.f32 %v3557, 0.0
  %s3562 = scalar_lea.vmem %s9, 64
  %v3563 = vld [vmem:[%s3562] sm:$0xff]
  %v3564 = vld [vmem:[%s3562 + $0x8] sm:$0xff]
  %v3565 = vld [vmem:[%s3562 + $0x10] sm:$0xff]
  %v3566 = vld [vmem:[%s3562 + $0x18] sm:$0xff]
  %v3567 = vld [vmem:[%s3562 + $0x20] sm:$0xff]
  %v3568 = vld [vmem:[%s3562 + $0x28] sm:$0xff]
  %v3569 = vld [vmem:[%s3562 + $0x30] sm:$0xff]
  %v3570 = vld [vmem:[%s3562 + $0x38] sm:$0xff]
  %s3571 = scalar_lea.vmem %s10, 1
  %v3572 = vld [vmem:[%s3571] sm:$0x1]
  %v3574 = vlaneseq
  %v3575 = vshrl.u32 %v3574, 7
  %v3576 = vsub.s32 0, %v3575
  %v3577 = vrot.slane %v3572, %v3576
  %v3580 = vsel %vm1746, %v3560, 0
  %v3583 = vsel %vm1746, %v3561, 0
  %3585 = vmatprep.subr.mxu0 0.0
  %3586 = vmatpush1.msra.mxu0 0.0
  %3587 = vmatprep.subr.mxu0 0.0
  %3588 = vmatpush1.msra.mxu0 0.0
  %3589 = vmatprep.subr.mxu0 0.0
  %3590 = vmatpush1.msra.mxu0 0.0
  %3591 = vmatprep.subr.mxu0 0.0
  %3592 = vmatpush1.msra.mxu0 0.0
  %3593 = vmatprep.subr.mxu0 0.0
  %3594 = vmatpush1.msra.mxu0 0.0
  %3595 = vmatprep.subr.mxu0 0.0
  %3596 = vmatpush1.msra.mxu0 0.0
  %3597 = vmatprep.subr.mxu0 0.0
  %3598 = vmatpush1.msra.mxu0 0.0
  %3599 = vmatprep.subr.mxu0 0.0
  %3600 = vmatpush1.msra.mxu0 0.0
  %3601 = vmatprep.subr.mxu0 0.0
  %3602 = vmatpush1.msra.mxu0 %v3570
  %3603 = vmatprep.subr.mxu0 0.0
  %3604 = vmatpush1.msra.mxu0 %v3569
  %3605 = vmatprep.subr.mxu0 0.0
  %3606 = vmatpush1.msra.mxu0 %v3568
  %3607 = vmatprep.subr.mxu0 0.0
  %3608 = vmatpush1.msra.mxu0 %v3567
  %3609 = vmatprep.subr.mxu0 0.0
  %3610 = vmatpush1.msra.mxu0 %v3566
  %3611 = vmatprep.subr.mxu0 0.0
  %3612 = vmatpush1.msra.mxu0 %v3565
  %3613 = vmatprep.subr.mxu0 0.0
  %3614 = vmatpush1.msra.mxu0 %v3564
  %3615 = vmatprep.subr.mxu0 0.0
  %3616 = vmatpush1.msra.mxu0 %v3563
  %3617 = vmatprep.subr.mxu0 0.0
  %3618 = vmatpush2.msra.mxu0 0.0
  %3619 = vmatprep.subr.mxu0 0.0
  %3620 = vmatpush2.msra.mxu0 0.0
  %3621 = vmatprep.subr.mxu0 0.0
  %3622 = vmatpush2.msra.mxu0 0.0
  %3623 = vmatprep.subr.mxu0 0.0
  %3624 = vmatpush2.msra.mxu0 0.0
  %3625 = vmatprep.subr.mxu0 0.0
  %3626 = vmatpush2.msra.mxu0 0.0
  %3627 = vmatprep.subr.mxu0 0.0
  %3628 = vmatpush2.msra.mxu0 0.0
  %3629 = vmatprep.subr.mxu0 0.0
  %3630 = vmatpush2.msra.mxu0 0.0
  %3631 = vmatprep.subr.mxu0 0.0
  %3632 = vmatpush2.msra.mxu0 0.0
  %3633 = vmatprep.subr.mxu0 0.0
  %3634 = vmatpush2.msra.mxu0 0.0
  %3635 = vmatprep.subr.mxu0 0.0
  %3636 = vmatpush2.msra.mxu0 0.0
  %3637 = vmatprep.subr.mxu0 0.0
  %3638 = vmatpush2.msra.mxu0 0.0
  %3639 = vmatprep.subr.mxu0 0.0
  %3640 = vmatpush2.msra.mxu0 0.0
  %3641 = vmatprep.subr.mxu0 0.0
  %3642 = vmatpush2.msra.mxu0 0.0
  %3643 = vmatprep.subr.mxu0 0.0
  %3644 = vmatpush2.msra.mxu0 0.0
  %3645 = vmatprep.subr.mxu0 0.0
  %3646 = vmatpush2.msra.mxu0 0.0
  %3647 = vmatprep.subr.mxu0 0.0
  %3648 = vmatpush2.msra.mxu0 0.0
  %3649 = vmatprep.mubr.f32.mxu0 0.0
  %3650 = vmatmul.mubr.f32.gmra.mxu0 %v3580
  %v3651 = vpop.f32.mrf.mxu0
  %v3652 = vadd.f32 %v3577, %v3651
  %v3653 = vpop.f32.mrf.mxu0
  %3654 = vmatprep.mubr.f32.mxu0 0.0
  %3655 = vmatmul.mubr.f32.gmra.mxu0 %v3583
  %v3656 = vpop.f32.mrf.mxu0
  %v3657 = vadd.f32 %v3577, %v3656
  %v3658 = vpop.f32.mrf.mxu0
  %3659 = vdwg.mxu0
  %v3660 = vadd.f32 %v3464, %v3652
  %v3661 = vadd.f32 %v3465, %v3657
  %s3662 = scalar_lea.vmem %s11, 1
  %v3663 = vld [vmem:[%s3662] sm:$0x1]
  %s3664 = scalar_lea.vmem %s12, 1
  %v3665 = vld [vmem:[%s3664] sm:$0x1]
  %v3666 = vsel %vm57, %v3660, 0.0
  %3667 = vadd.xlane.f32.xlu0 %v3666
  %v3668 = vpop.xlane.xlu0 %3667
  %v3669 = vsel %vm57, %v3661, 0.0
  %3670 = vadd.xlane.f32.xlu0 %v3669
  %v3671 = vpop.xlane.xlu0 %3670
  %v3672 = vmul.f32 %v3668, %v1600
  %v3673 = vmul.f32 %v3671, %v1600
  %v3674 = vsub.f32 %v3660, %v3672
  %v3675 = vsub.f32 %v3661, %v3673
  %v3676 = vmul.f32 %v3674, %v3674
  %v3677 = vmul.f32 %v3675, %v3675
  %v3678 = vsel %vm57, %v3676, 0.0
  %3679 = vadd.xlane.f32.xlu0 %v3678
  %v3680 = vpop.xlane.xlu0 %3679
  %v3681 = vsel %vm57, %v3677, 0.0
  %3682 = vadd.xlane.f32.xlu0 %v3681
  %v3683 = vpop.xlane.xlu0 %3682
  %v3684 = vmul.f32 %v3680, %v1600
  %v3685 = vmul.f32 %v3683, %v1600
  %v3686 = vadd.f32 %v3684, 1e-05
  %v3687 = vadd.f32 %v3685, 1e-05
  %v3688 = vrsqrt.pop %v3686
  %v3689 = vrsqrt.pop %v3687
  %v3690 = vmul.f32 %v3674, %v3688
  %v3691 = vmul.f32 %v3675, %v3689
  %v3693 = vlaneseq
  %v3694 = vshrl.u32 %v3693, 7
  %v3695 = vsub.s32 0, %v3694
  %v3696 = vrot.slane %v3663, %v3695
  %v3698 = vmul.f32 %v3690, %v3696
  %v3699 = vmul.f32 %v3691, %v3696
  %v3701 = vlaneseq
  %v3702 = vshrl.u32 %v3701, 7
  %v3703 = vsub.s32 0, %v3702
  %v3704 = vrot.slane %v3665, %v3703
  %v3706 = vadd.f32 %v3698, %v3704
  %v3707 = vadd.f32 %v3699, %v3704
  %3708 = vst.msk [vmem:[%s13] sm:$0xff] %vm57, %v3706
  %3709 = vst.msk [vmem:[%s13 + $0x8] sm:$0xff] %vm57, %v3707
  // Predicated region
  $region54: #{transformer_encoder.1} parent=0 // pred_check
    _
  $region55: #{transformer_encoder.1} parent=0 // pred_check_branch
    %3711 = sbr.rel (0) target = $region57
  $region56: #{transformer_encoder.1} parent=0 // pred_region
    _
  $region57: #{transformer_encoder.1} parent=0 // pred_fallthru
    _
  // Predicated region
  $region58: #{transformer_encoder.1} parent=0 // pred_check
    _
  $region59: #{transformer_encoder.1} parent=0 // pred_check_branch
    %3713 = sbr.rel (0) target = $region61
  $region60: #{transformer_encoder.1} parent=0 // pred_region
    _
  $region61: #{transformer_encoder.1} parent=0 // pred_fallthru
    _

</llo_original>
